<compile_context>
chip_gen: v6e
topology: v6e:2x2x1
jax: 0.10.0
libtpu: 0.0.40
codegen_flags: <defaults>
</compile_context>

<pallas_src>
import numpy as np
import jax
import jax.numpy as jnp
from jax import lax
from jax.experimental import pallas as pl
from jax.experimental.pallas import tpu as pltpu

BN_EPS = 0.001
CP = 128  # padded channel count (lane-dense)


# ----------------------------------------------------------------------------
# Fused Pallas kernel
# ----------------------------------------------------------------------------
def _make_fused_kernel(H, W, cp):
    HW = H * W
    can_roll = (HW % 8 == 0)  # sublane rotate needs 8-aligned row count

    def kernel(x_ref, ew_ref, eb_ref, iir_ref, dw_ref, pww_ref, pwb_ref, o_ref):
        # Hoisted boundary masks for the width-wise depthwise conv taps
        # (identical for every process unit, computed once per grid step).
        ww_idx = lax.broadcasted_iota(jnp.int32, (HW, 1), 0) % W
        tap_masks = {
            d: jnp.logical_and(ww_idx + d >= 0, ww_idx + d < W)
            for d in (-2, -1, 1, 2)
        }

        def shift_rows(h, d):
            # s[r] = h[r + d]; rows that wrap (image-row / image boundaries)
            # are zeroed afterwards by tap_masks[d].
            if can_roll:
                return pltpu.roll(h, (-d) % HW, 0)   # XLU rotate — off the VPU path
            if d > 0:
                return jnp.concatenate(
                    [h[d:, :], jnp.zeros((d, cp), h.dtype)], axis=0)
            return jnp.concatenate(
                [jnp.zeros((-d, cp), h.dtype), h[:HW + d, :]], axis=0)

        def pointwise(h, wmat, bias):
            # 1x1 conv with BN folded into wmat/bias, then reluM.
            y = jnp.dot(h, wmat, preferred_element_type=jnp.float32) + bias
            return jnp.maximum(y, 0.0)

        def depthwise_iir(h, p):
            # p: (5, cp) rows = [w_curr, w_prev_inp, w_prev_out, bn_scale, bn_shift]
            wc, wi, wo = p[0:1, :], p[1:2, :], p[2:3, :]
            scale, shift = p[3:4, :], p[4:5, :]
            # hoist broadcasts out of the H loop (JAX doesn't CSE broadcast_in_dim)
            wc_b = jnp.broadcast_to(wc, (W, cp))
            wo_b = jnp.broadcast_to(wo, (W, cp))
            fbc_b = jnp.broadcast_to(wi + wo * wc, (W, cp))
            x0 = h[0:W, :]
            ict = jnp.broadcast_to(wi + wo, (W, cp)) * x0        # initial_cond_term
            fb = jnp.zeros((W, cp), jnp.float32)                 # feedback_term
            rows = [wc_b * x0 + ict]
            for hh in range(1, H):                               # H static & small
                ict = wo_b * ict
                fb = wo_b * fb + h[(hh - 1) * W:hh * W, :]
                rows.append(wc_b * h[hh * W:(hh + 1) * W, :] + fbc_b * fb + ict)
            y = jnp.concatenate(rows, axis=0)                    # one dense (HW, cp)
            return jnp.clip(y * scale + shift, -8.0, 8.0)        # BN + reluMsymm

        def depthwise_conv1d(h, p):
            # p: (6, cp) rows = 5 BN-folded taps + folded bias/shift
            acc = p[2:3, :] * h + p[5:6, :]                      # center tap + bias
            for k in (0, 1, 3, 4):                               # static 4 side taps
                d = k - 2
                contrib = p[k:k + 1, :] * shift_rows(h, d)
                acc = acc + jnp.where(tap_masks[d], contrib, 0.0)
            return jnp.clip(acc, -8.0, 8.0)                      # BN folded + reluMsymm

        def process_unit(h, u):
            h = depthwise_iir(h, iir_ref[u])
            h = depthwise_conv1d(h, dw_ref[u])
            return pointwise(h, pww_ref[u], pwb_ref[u])

        x = pointwise(x_ref[...], ew_ref[...], eb_ref[...])      # expand
        x = x + process_unit(process_unit(x, 0), 1)
        x = x + process_unit(process_unit(x, 2), 3)
        o_ref[...] = x

    return kernel


# ----------------------------------------------------------------------------
# Host-side param folding (BN + bias folded, channels zero-padded to CP)
# ----------------------------------------------------------------------------
def _bn_scale_shift(p):
    scale = p["gamma"].reshape(-1) * lax.rsqrt(p["rv"].reshape(-1) + BN_EPS)
    shift = p["beta"].reshape(-1) - p["rm"].reshape(-1) * scale
    return scale, shift


def _fold_pointwise(p, cin_pad, cout_pad):
    cin, cout = p["w"].shape
    scale, shift = _bn_scale_shift(p)
    w = p["w"] * scale[None, :]
    b = p["b"].reshape(-1) * scale + shift
    w = jnp.pad(w, ((0, cin_pad - cin), (0, cout_pad - cout)))
    b = jnp.pad(b, (0, cout_pad - cout)).reshape(1, cout_pad)
    return w, b


def _fold_iir(p, cp):
    c = p["w_curr"].shape[1]
    scale, shift = _bn_scale_shift(p)
    stack = jnp.stack([p["w_curr"].reshape(-1), p["w_prev_inp"].reshape(-1),
                       p["w_prev_out"].reshape(-1), scale, shift], axis=0)
    return jnp.pad(stack, ((0, 0), (0, cp - c)))                 # (5, cp)


def _fold_dwconv(p, cp):
    c = p["w"].shape[1]
    K = p["w"].shape[-1]
    scale, shift = _bn_scale_shift(p)
    taps = p["w"].reshape(c, K).T * scale[None, :]               # (K, c), BN folded
    bias = p["b"].reshape(-1) * scale + shift                    # (c,)
    stack = jnp.concatenate([taps, bias[None, :]], axis=0)       # (K+1, c)
    return jnp.pad(stack, ((0, 0), (0, cp - c)))                 # (6, cp)


# ----------------------------------------------------------------------------
# Forward (single pallas_call)
# ----------------------------------------------------------------------------
def bb_forward(x, params):
    B, Cin, H, W = x.shape
    HW = H * W
    Cout = params["expand"]["w"].shape[1]

    # channels-last, channel-padded input: (B*H*W, CP). Padded channels stay
    # exactly zero through every stage (all padded weights/biases are zero).
    x2 = jnp.transpose(x, (0, 2, 3, 1)).reshape(B * HW, Cin)
    x2 = jnp.pad(x2, ((0, 0), (0, CP - Cin)))

    exp_w, exp_b = _fold_pointwise(params["expand"], CP, CP)
    iir_p = jnp.stack([_fold_iir(pu["iir"], CP) for pu in params["pu"]], axis=0)    # (4,5,CP)
    dw_p = jnp.stack([_fold_dwconv(pu["dw"], CP) for pu in params["pu"]], axis=0)   # (4,6,CP)
    pw = [_fold_pointwise(pu["pw"], CP, CP) for pu in params["pu"]]
    pw_w = jnp.stack([w for w, _ in pw], axis=0)                                    # (4,CP,CP)
    pw_b = jnp.stack([b for _, b in pw], axis=0)                                    # (4,1,CP)

    kernel = _make_fused_kernel(H, W, CP)

    out2 = pl.pallas_call(
        kernel,
        out_shape=jax.ShapeDtypeStruct((B * HW, CP), jnp.float32),
        grid_spec=pltpu.PrefetchScalarGridSpec(
            num_scalar_prefetch=0,
            grid=(B,),
            in_specs=[
                pl.BlockSpec((HW, CP), lambda b: (b, 0)),        # activations (one image)
                pl.BlockSpec((CP, CP), lambda b: (0, 0)),        # expand weight (resident)
                pl.BlockSpec((1, CP), lambda b: (0, 0)),         # expand bias
                pl.BlockSpec((4, 5, CP), lambda b: (0, 0, 0)),   # IIR params
                pl.BlockSpec((4, 6, CP), lambda b: (0, 0, 0)),   # DW-conv params
                pl.BlockSpec((4, CP, CP), lambda b: (0, 0, 0)),  # pointwise weights
                pl.BlockSpec((4, 1, CP), lambda b: (0, 0, 0)),   # pointwise biases
            ],
            out_specs=pl.BlockSpec((HW, CP), lambda b: (b, 0)),
        ),
        compiler_params=pltpu.CompilerParams(
            dimension_semantics=("parallel",)),
    )(x2, exp_w, exp_b, iir_p, dw_p, pw_w, pw_b)

    out = out2.reshape(B, H, W, CP)[..., :Cout]
    return jnp.transpose(out, (0, 3, 1, 2))


# ----------------------------------------------------------------------------
# Deterministic synthetic parameter init
# ----------------------------------------------------------------------------
def _bn_params(key, c_shape):
    kg, kb, km, kv = jax.random.split(key, 4)
    return dict(
        gamma=jax.random.uniform(kg, c_shape, jnp.float32, 0.5, 1.5),
        beta=jax.random.uniform(kb, c_shape, jnp.float32, -0.1, 0.1),
        rm=jax.random.uniform(km, c_shape, jnp.float32, -0.1, 0.1),
        rv=jax.random.uniform(kv, c_shape, jnp.float32, 0.5, 1.5),
    )


def init_pointwise(key, cin, cout):
    kw, kb, kbn = jax.random.split(key, 3)
    bound = float(1.0 / np.sqrt(cin))
    p = dict(
        w=jax.random.uniform(kw, (cin, cout), jnp.float32, -bound, bound),
        b=jax.random.uniform(kb, (1, cout), jnp.float32, -bound, bound),
    )
    p.update(_bn_params(kbn, (1, cout)))
    return p


def init_iir(key, c):
    kc, ki, ko, kbn = jax.random.split(key, 4)
    p = dict(
        w_curr=jax.random.uniform(kc, (1, c, 1, 1), jnp.float32, 0.0, 1.0),
        w_prev_inp=jax.random.uniform(ki, (1, c, 1, 1), jnp.float32, 0.0, 1.0),
        w_prev_out=jax.random.uniform(ko, (1, c, 1, 1), jnp.float32, 0.0, 1.0),
    )
    p.update(_bn_params(kbn, (1, c, 1, 1)))
    return p


def init_dwconv(key, c, k):
    kw, kb, kbn = jax.random.split(key, 3)
    bound = float(1.0 / np.sqrt(k))
    p = dict(
        w=jax.random.uniform(kw, (1, c, 1, k), jnp.float32, -bound, bound),
        b=jax.random.uniform(kb, (1, c, 1, 1), jnp.float32, -bound, bound),
    )
    p.update(_bn_params(kbn, (1, c, 1, 1)))
    return p


# ----------------------------------------------------------------------------
# Pure-JAX reference (mirrors the PyTorch forward, eval-mode BN)
# ----------------------------------------------------------------------------
def _ref_bn4(y, p):
    scale = p["gamma"].reshape(1, -1, 1, 1) * lax.rsqrt(p["rv"].reshape(1, -1, 1, 1) + BN_EPS)
    return (y - p["rm"].reshape(1, -1, 1, 1)) * scale + p["beta"].reshape(1, -1, 1, 1)


def ref_pointwise(x, p):
    y = jnp.einsum("bchw,co->bohw", x, p["w"]) + p["b"].reshape(1, -1, 1, 1)
    return jnp.maximum(_ref_bn4(y, p), 0.0)


def ref_iir(x, p):
    wc, wi, wo = p["w_curr"], p["w_prev_inp"], p["w_prev_out"]
    H = x.shape[2]
    y = wc * x
    ict = (wi + wo) * x[:, :, 0:1]
    y = y.at[:, :, 0:1].add(ict)
    fbc = wi + wo * wc
    fb = jnp.zeros_like(ict)
    for row in range(1, H):
        ict = wo * ict
        fb = wo * fb + x[:, :, row - 1:row]
        y = y.at[:, :, row:row + 1].add(fbc * fb + ict)
    return jnp.clip(_ref_bn4(y, p), -8.0, 8.0)


def ref_dwconv(x, p):
    K = p["w"].shape[-1]
    pad = K // 2
    W = x.shape[-1]
    xp = jnp.pad(x, ((0, 0), (0, 0), (0, 0), (pad, pad)))
    acc = jnp.zeros_like(x) + p["b"]
    for k in range(K):
        acc = acc + p["w"][:, :, :, k:k + 1] * xp[:, :, :, k:k + W]
    return jnp.clip(_ref_bn4(acc, p), -8.0, 8.0)


def ref_forward(x, params):
    def pu_fn(h, pu):
        return ref_pointwise(ref_dwconv(ref_iir(h, pu["iir"]), pu["dw"]), pu["pw"])

    x = ref_pointwise(x, params["expand"])
    x = x + pu_fn(pu_fn(x, params["pu"][0]), params["pu"][1])
    x = x + pu_fn(pu_fn(x, params["pu"][2]), params["pu"][3])
    return x


# ----------------------------------------------------------------------------
if __name__ == "__main__":
    key = jax.random.PRNGKey(0)
    kx, kp = jax.random.split(key)

    B, Cin, H, W = 2, 36, 8, 16          # module fixes Cin=36
    Cout = 72                            # module fixes internal channels=72
    x = jax.random.normal(kx, (B, Cin, H, W), jnp.float32)

    keys = jax.random.split(kp, 1 + 4 * 3)
    params = {
        "expand": init_pointwise(keys[0], Cin, Cout),
        "pu": [
            {
                "iir": init_iir(keys[1 + 3 * i], Cout),
                "dw": init_dwconv(keys[2 + 3 * i], Cout, 5),
                "pw": init_pointwise(keys[3 + 3 * i], Cout, Cout),
            }
            for i in range(4)
        ],
    }

    out = jax.jit(bb_forward)(x, params)
    out = jax.block_until_ready(out)
    assert out.shape == (B, Cout, H, W)

    ref = ref_forward(x, params)
    np.testing.assert_allclose(np.asarray(out), np.asarray(ref), rtol=2e-3, atol=2e-3)

    print("KERNEL_OK")
</pallas_src>

<mosaic_0001>
module attributes {stable_mosaic.version = 11 : i64} {
  func.func @kernel(%arg0: i32, %arg1: memref<128x128xf32, #tpu.memory_space<vmem>>, %arg2: memref<128x128xf32, #tpu.memory_space<vmem>>, %arg3: memref<1x128xf32, #tpu.memory_space<vmem>>, %arg4: memref<4x5x128xf32, #tpu.memory_space<vmem>>, %arg5: memref<4x6x128xf32, #tpu.memory_space<vmem>>, %arg6: memref<4x128x128xf32, #tpu.memory_space<vmem>>, %arg7: memref<4x1x128xf32, #tpu.memory_space<vmem>>, %arg8: memref<128x128xf32, #tpu.memory_space<vmem>>) attributes {dimension_semantics = [#tpu.dimension_semantics<parallel>], iteration_bounds = array<i64: 2>, scalar_prefetch = 0 : i64, scratch_operands = 0 : i64, tpu.core_type = #tpu.core_type<tc>, window_params = [{transform_indices = @transform_0, window_bounds = array<i64: 128, 128>}, {pipeline_mode = #tpu.pipeline_mode<synchronous>, transform_indices = @transform_1, window_bounds = array<i64: 128, 128>}, {pipeline_mode = #tpu.pipeline_mode<synchronous>, transform_indices = @transform_2, window_bounds = array<i64: 1, 128>}, {pipeline_mode = #tpu.pipeline_mode<synchronous>, transform_indices = @transform_3, window_bounds = array<i64: 4, 5, 128>}, {pipeline_mode = #tpu.pipeline_mode<synchronous>, transform_indices = @transform_4, window_bounds = array<i64: 4, 6, 128>}, {pipeline_mode = #tpu.pipeline_mode<synchronous>, transform_indices = @transform_5, window_bounds = array<i64: 4, 128, 128>}, {pipeline_mode = #tpu.pipeline_mode<synchronous>, transform_indices = @transform_6, window_bounds = array<i64: 4, 1, 128>}, {transform_indices = @transform_7, window_bounds = array<i64: 128, 128>}]} {
    %0 = tpu.iota {dimensions = array<i32: 0>} : vector<128x1xi32>
    %c16_i32 = arith.constant 16 : i32
    %c0_i32 = arith.constant 0 : i32
    %1 = arith.cmpi eq, %c16_i32, %c0_i32 : i32
    %c1_i32 = arith.constant 1 : i32
    %2 = arith.select %1, %c1_i32, %c16_i32 : i32
    %3 = vector.broadcast %2 : i32 to vector<128x1xi32>
    %4 = arith.remsi %0, %3 : vector<128x1xi32>
    %c0_i32_0 = arith.constant 0 : i32
    %5 = vector.broadcast %c0_i32_0 : i32 to vector<128x1xi32>
    %6 = arith.cmpi ne, %4, %5 : vector<128x1xi32>
    %c0_i32_1 = arith.constant 0 : i32
    %7 = vector.broadcast %c0_i32_1 : i32 to vector<128x1xi32>
    %8 = arith.cmpi slt, %4, %7 : vector<128x1xi32>
    %c0_i32_2 = arith.constant 0 : i32
    %9 = arith.cmpi slt, %2, %c0_i32_2 : i32
    %10 = vector.broadcast %9 : i1 to vector<128x1xi1>
    %11 = vector.broadcast %10 : vector<128x1xi1> to vector<128x1xi1>
    %12 = arith.xori %8, %11 : vector<128x1xi1>
    %13 = arith.andi %12, %6 : vector<128x1xi1>
    %14 = vector.broadcast %2 : i32 to vector<128x1xi32>
    %15 = arith.addi %4, %14 : vector<128x1xi32>
    %16 = arith.select %13, %15, %4 : vector<128x1xi1>, vector<128x1xi32>
    %c-2_i32 = arith.constant -2 : i32
    %17 = vector.broadcast %c-2_i32 : i32 to vector<128x1xi32>
    %18 = arith.addi %16, %17 : vector<128x1xi32>
    %c0_i32_3 = arith.constant 0 : i32
    %19 = vector.broadcast %c0_i32_3 : i32 to vector<128x1xi32>
    %20 = arith.cmpi sge, %18, %19 : vector<128x1xi32>
    %c-2_i32_4 = arith.constant -2 : i32
    %21 = vector.broadcast %c-2_i32_4 : i32 to vector<128x1xi32>
    %22 = arith.addi %16, %21 : vector<128x1xi32>
    %c16_i32_5 = arith.constant 16 : i32
    %23 = vector.broadcast %c16_i32_5 : i32 to vector<128x1xi32>
    %24 = arith.cmpi slt, %22, %23 : vector<128x1xi32>
    %25 = arith.andi %20, %24 : vector<128x1xi1>
    %c-1_i32 = arith.constant -1 : i32
    %26 = vector.broadcast %c-1_i32 : i32 to vector<128x1xi32>
    %27 = arith.addi %16, %26 : vector<128x1xi32>
    %c0_i32_6 = arith.constant 0 : i32
    %28 = vector.broadcast %c0_i32_6 : i32 to vector<128x1xi32>
    %29 = arith.cmpi sge, %27, %28 : vector<128x1xi32>
    %c-1_i32_7 = arith.constant -1 : i32
    %30 = vector.broadcast %c-1_i32_7 : i32 to vector<128x1xi32>
    %31 = arith.addi %16, %30 : vector<128x1xi32>
    %c16_i32_8 = arith.constant 16 : i32
    %32 = vector.broadcast %c16_i32_8 : i32 to vector<128x1xi32>
    %33 = arith.cmpi slt, %31, %32 : vector<128x1xi32>
    %34 = arith.andi %29, %33 : vector<128x1xi1>
    %c1_i32_9 = arith.constant 1 : i32
    %35 = vector.broadcast %c1_i32_9 : i32 to vector<128x1xi32>
    %36 = arith.addi %16, %35 : vector<128x1xi32>
    %c0_i32_10 = arith.constant 0 : i32
    %37 = vector.broadcast %c0_i32_10 : i32 to vector<128x1xi32>
    %38 = arith.cmpi sge, %36, %37 : vector<128x1xi32>
    %c1_i32_11 = arith.constant 1 : i32
    %39 = vector.broadcast %c1_i32_11 : i32 to vector<128x1xi32>
    %40 = arith.addi %16, %39 : vector<128x1xi32>
    %c16_i32_12 = arith.constant 16 : i32
    %41 = vector.broadcast %c16_i32_12 : i32 to vector<128x1xi32>
    %42 = arith.cmpi slt, %40, %41 : vector<128x1xi32>
    %43 = arith.andi %38, %42 : vector<128x1xi1>
    %c2_i32 = arith.constant 2 : i32
    %44 = vector.broadcast %c2_i32 : i32 to vector<128x1xi32>
    %45 = arith.addi %16, %44 : vector<128x1xi32>
    %c0_i32_13 = arith.constant 0 : i32
    %46 = vector.broadcast %c0_i32_13 : i32 to vector<128x1xi32>
    %47 = arith.cmpi sge, %45, %46 : vector<128x1xi32>
    %c2_i32_14 = arith.constant 2 : i32
    %48 = vector.broadcast %c2_i32_14 : i32 to vector<128x1xi32>
    %49 = arith.addi %16, %48 : vector<128x1xi32>
    %c16_i32_15 = arith.constant 16 : i32
    %50 = vector.broadcast %c16_i32_15 : i32 to vector<128x1xi32>
    %51 = arith.cmpi slt, %49, %50 : vector<128x1xi32>
    %52 = arith.andi %47, %51 : vector<128x1xi1>
    %c0 = arith.constant 0 : index
    %c0_16 = arith.constant 0 : index
    %53 = vector.load %arg1[%c0, %c0_16] : memref<128x128xf32, #tpu.memory_space<vmem>>, vector<128x128xf32>
    %c0_17 = arith.constant 0 : index
    %c0_18 = arith.constant 0 : index
    %54 = vector.load %arg2[%c0_17, %c0_18] : memref<128x128xf32, #tpu.memory_space<vmem>>, vector<128x128xf32>
    %c0_19 = arith.constant 0 : index
    %c0_20 = arith.constant 0 : index
    %55 = vector.load %arg3[%c0_19, %c0_20] : memref<1x128xf32, #tpu.memory_space<vmem>>, vector<1x128xf32>
    %cst = arith.constant dense<0.000000e+00> : vector<128x128xf32>
    %56 = tpu.matmul %53, %54, %cst {dimension_numbers = #tpu.dot_dimension_numbers<[1], [0], [0], [1], [0, 0, 1, 1], [], []>} : vector<128x128xf32>, vector<128x128xf32>, vector<128x128xf32> -> vector<128x128xf32>
    %57 = vector.broadcast %55 : vector<1x128xf32> to vector<128x128xf32>
    %58 = arith.addf %56, %57 : vector<128x128xf32>
    %cst_21 = arith.constant 0.000000e+00 : f32
    %59 = vector.broadcast %cst_21 : f32 to vector<128x128xf32>
    %60 = arith.maximumf %58, %59 : vector<128x128xf32>
    %c0_22 = arith.constant 0 : index
    %c0_23 = arith.constant 0 : index
    %c0_24 = arith.constant 0 : index
    %61 = vector.load %arg4[%c0_22, %c0_23, %c0_24] : memref<4x5x128xf32, #tpu.memory_space<vmem>>, vector<1x5x128xf32>
    %62 = vector.shape_cast %61 : vector<1x5x128xf32> to vector<5x128xf32>
    %63 = vector.extract_strided_slice %62 {offsets = [0, 0], sizes = [1, 128], strides = [1, 1]} : vector<5x128xf32> to vector<1x128xf32>
    %64 = vector.extract_strided_slice %62 {offsets = [1, 0], sizes = [1, 128], strides = [1, 1]} : vector<5x128xf32> to vector<1x128xf32>
    %65 = vector.extract_strided_slice %62 {offsets = [2, 0], sizes = [1, 128], strides = [1, 1]} : vector<5x128xf32> to vector<1x128xf32>
    %66 = vector.extract_strided_slice %62 {offsets = [3, 0], sizes = [1, 128], strides = [1, 1]} : vector<5x128xf32> to vector<1x128xf32>
    %67 = vector.extract_strided_slice %62 {offsets = [4, 0], sizes = [1, 128], strides = [1, 1]} : vector<5x128xf32> to vector<1x128xf32>
    %68 = vector.shape_cast %63 : vector<1x128xf32> to vector<1x128xf32>
    %69 = vector.broadcast %68 : vector<1x128xf32> to vector<16x128xf32>
    %70 = vector.shape_cast %65 : vector<1x128xf32> to vector<1x128xf32>
    %71 = vector.broadcast %70 : vector<1x128xf32> to vector<16x128xf32>
    %72 = arith.mulf %65, %63 : vector<1x128xf32>
    %73 = arith.addf %64, %72 : vector<1x128xf32>
    %74 = vector.shape_cast %73 : vector<1x128xf32> to vector<1x128xf32>
    %75 = vector.broadcast %74 : vector<1x128xf32> to vector<16x128xf32>
    %76 = vector.extract_strided_slice %60 {offsets = [0, 0], sizes = [16, 128], strides = [1, 1]} : vector<128x128xf32> to vector<16x128xf32>
    %77 = arith.addf %64, %65 : vector<1x128xf32>
    %78 = vector.shape_cast %77 : vector<1x128xf32> to vector<1x128xf32>
    %79 = vector.broadcast %78 : vector<1x128xf32> to vector<16x128xf32>
    %80 = arith.mulf %79, %76 : vector<16x128xf32>
    %cst_25 = arith.constant 0.000000e+00 : f32
    %81 = vector.broadcast %cst_25 : f32 to vector<16x128xf32>
    %82 = arith.mulf %69, %76 : vector<16x128xf32>
    %83 = arith.addf %82, %80 : vector<16x128xf32>
    %84 = arith.mulf %71, %80 : vector<16x128xf32>
    %85 = arith.mulf %71, %81 : vector<16x128xf32>
    %86 = vector.extract_strided_slice %60 {offsets = [0, 0], sizes = [16, 128], strides = [1, 1]} : vector<128x128xf32> to vector<16x128xf32>
    %87 = arith.addf %85, %86 : vector<16x128xf32>
    %88 = vector.extract_strided_slice %60 {offsets = [16, 0], sizes = [16, 128], strides = [1, 1]} : vector<128x128xf32> to vector<16x128xf32>
    %89 = arith.mulf %69, %88 : vector<16x128xf32>
    %90 = arith.mulf %75, %87 : vector<16x128xf32>
    %91 = arith.addf %89, %90 : vector<16x128xf32>
    %92 = arith.addf %91, %84 : vector<16x128xf32>
    %93 = arith.mulf %71, %84 : vector<16x128xf32>
    %94 = arith.mulf %71, %87 : vector<16x128xf32>
    %95 = vector.extract_strided_slice %60 {offsets = [16, 0], sizes = [16, 128], strides = [1, 1]} : vector<128x128xf32> to vector<16x128xf32>
    %96 = arith.addf %94, %95 : vector<16x128xf32>
    %97 = vector.extract_strided_slice %60 {offsets = [32, 0], sizes = [16, 128], strides = [1, 1]} : vector<128x128xf32> to vector<16x128xf32>
    %98 = arith.mulf %69, %97 : vector<16x128xf32>
    %99 = arith.mulf %75, %96 : vector<16x128xf32>
    %100 = arith.addf %98, %99 : vector<16x128xf32>
    %101 = arith.addf %100, %93 : vector<16x128xf32>
    %102 = arith.mulf %71, %93 : vector<16x128xf32>
    %103 = arith.mulf %71, %96 : vector<16x128xf32>
    %104 = vector.extract_strided_slice %60 {offsets = [32, 0], sizes = [16, 128], strides = [1, 1]} : vector<128x128xf32> to vector<16x128xf32>
    %105 = arith.addf %103, %104 : vector<16x128xf32>
    %106 = vector.extract_strided_slice %60 {offsets = [48, 0], sizes = [16, 128], strides = [1, 1]} : vector<128x128xf32> to vector<16x128xf32>
    %107 = arith.mulf %69, %106 : vector<16x128xf32>
    %108 = arith.mulf %75, %105 : vector<16x128xf32>
    %109 = arith.addf %107, %108 : vector<16x128xf32>
    %110 = arith.addf %109, %102 : vector<16x128xf32>
    %111 = arith.mulf %71, %102 : vector<16x128xf32>
    %112 = arith.mulf %71, %105 : vector<16x128xf32>
    %113 = vector.extract_strided_slice %60 {offsets = [48, 0], sizes = [16, 128], strides = [1, 1]} : vector<128x128xf32> to vector<16x128xf32>
    %114 = arith.addf %112, %113 : vector<16x128xf32>
    %115 = vector.extract_strided_slice %60 {offsets = [64, 0], sizes = [16, 128], strides = [1, 1]} : vector<128x128xf32> to vector<16x128xf32>
    %116 = arith.mulf %69, %115 : vector<16x128xf32>
    %117 = arith.mulf %75, %114 : vector<16x128xf32>
    %118 = arith.addf %116, %117 : vector<16x128xf32>
    %119 = arith.addf %118, %111 : vector<16x128xf32>
    %120 = arith.mulf %71, %111 : vector<16x128xf32>
    %121 = arith.mulf %71, %114 : vector<16x128xf32>
    %122 = vector.extract_strided_slice %60 {offsets = [64, 0], sizes = [16, 128], strides = [1, 1]} : vector<128x128xf32> to vector<16x128xf32>
    %123 = arith.addf %121, %122 : vector<16x128xf32>
    %124 = vector.extract_strided_slice %60 {offsets = [80, 0], sizes = [16, 128], strides = [1, 1]} : vector<128x128xf32> to vector<16x128xf32>
    %125 = arith.mulf %69, %124 : vector<16x128xf32>
    %126 = arith.mulf %75, %123 : vector<16x128xf32>
    %127 = arith.addf %125, %126 : vector<16x128xf32>
    %128 = arith.addf %127, %120 : vector<16x128xf32>
    %129 = arith.mulf %71, %120 : vector<16x128xf32>
    %130 = arith.mulf %71, %123 : vector<16x128xf32>
    %131 = vector.extract_strided_slice %60 {offsets = [80, 0], sizes = [16, 128], strides = [1, 1]} : vector<128x128xf32> to vector<16x128xf32>
    %132 = arith.addf %130, %131 : vector<16x128xf32>
    %133 = vector.extract_strided_slice %60 {offsets = [96, 0], sizes = [16, 128], strides = [1, 1]} : vector<128x128xf32> to vector<16x128xf32>
    %134 = arith.mulf %69, %133 : vector<16x128xf32>
    %135 = arith.mulf %75, %132 : vector<16x128xf32>
    %136 = arith.addf %134, %135 : vector<16x128xf32>
    %137 = arith.addf %136, %129 : vector<16x128xf32>
    %138 = arith.mulf %71, %129 : vector<16x128xf32>
    %139 = arith.mulf %71, %132 : vector<16x128xf32>
    %140 = vector.extract_strided_slice %60 {offsets = [96, 0], sizes = [16, 128], strides = [1, 1]} : vector<128x128xf32> to vector<16x128xf32>
    %141 = arith.addf %139, %140 : vector<16x128xf32>
    %142 = vector.extract_strided_slice %60 {offsets = [112, 0], sizes = [16, 128], strides = [1, 1]} : vector<128x128xf32> to vector<16x128xf32>
    %143 = arith.mulf %69, %142 : vector<16x128xf32>
    %144 = arith.mulf %75, %141 : vector<16x128xf32>
    %145 = arith.addf %143, %144 : vector<16x128xf32>
    %146 = arith.addf %145, %138 : vector<16x128xf32>
    %147 = tpu.concatenate %83, %92, %101, %110, %119, %128, %137, %146 in 0 : vector<16x128xf32>, vector<16x128xf32>, vector<16x128xf32>, vector<16x128xf32>, vector<16x128xf32>, vector<16x128xf32>, vector<16x128xf32>, vector<16x128xf32> -> vector<128x128xf32>
    %148 = vector.broadcast %66 : vector<1x128xf32> to vector<128x128xf32>
    %149 = arith.mulf %147, %148 : vector<128x128xf32>
    %150 = vector.broadcast %67 : vector<1x128xf32> to vector<128x128xf32>
    %151 = arith.addf %149, %150 : vector<128x128xf32>
    %cst_26 = arith.constant -8.000000e+00 : f32
    %cst_27 = arith.constant 8.000000e+00 : f32
    %152 = vector.broadcast %cst_26 : f32 to vector<128x128xf32>
    %153 = arith.maximumf %152, %151 : vector<128x128xf32>
    %154 = vector.broadcast %cst_27 : f32 to vector<128x128xf32>
    %155 = arith.minimumf %154, %153 : vector<128x128xf32>
    %c0_28 = arith.constant 0 : index
    %c0_29 = arith.constant 0 : index
    %c0_30 = arith.constant 0 : index
    %156 = vector.load %arg5[%c0_28, %c0_29, %c0_30] : memref<4x6x128xf32, #tpu.memory_space<vmem>>, vector<1x6x128xf32>
    %157 = vector.shape_cast %156 : vector<1x6x128xf32> to vector<6x128xf32>
    %158 = vector.extract_strided_slice %157 {offsets = [2, 0], sizes = [1, 128], strides = [1, 1]} : vector<6x128xf32> to vector<1x128xf32>
    %159 = vector.broadcast %158 : vector<1x128xf32> to vector<128x128xf32>
    %160 = arith.mulf %159, %155 : vector<128x128xf32>
    %161 = vector.extract_strided_slice %157 {offsets = [5, 0], sizes = [1, 128], strides = [1, 1]} : vector<6x128xf32> to vector<1x128xf32>
    %162 = vector.broadcast %161 : vector<1x128xf32> to vector<128x128xf32>
    %163 = arith.addf %160, %162 : vector<128x128xf32>
    %164 = vector.extract_strided_slice %157 {offsets = [0, 0], sizes = [1, 128], strides = [1, 1]} : vector<6x128xf32> to vector<1x128xf32>
    %c2_i32_31 = arith.constant 2 : i32
    %165 = tpu.dynamic_rotate %155 by %c2_i32_31 dim 0 : vector<128x128xf32>, i32 -> vector<128x128xf32>
    %166 = vector.broadcast %164 : vector<1x128xf32> to vector<128x128xf32>
    %167 = arith.mulf %166, %165 : vector<128x128xf32>
    %cst_32 = arith.constant 0.000000e+00 : f32
    %168 = vector.shape_cast %25 : vector<128x1xi1> to vector<128x1xi1>
    %169 = vector.broadcast %168 : vector<128x1xi1> to vector<128x128xi1>
    %170 = vector.broadcast %cst_32 : f32 to vector<128x128xf32>
    %171 = arith.select %169, %167, %170 : vector<128x128xi1>, vector<128x128xf32>
    %172 = arith.addf %163, %171 : vector<128x128xf32>
    %173 = vector.extract_strided_slice %157 {offsets = [1, 0], sizes = [1, 128], strides = [1, 1]} : vector<6x128xf32> to vector<1x128xf32>
    %c1_i32_33 = arith.constant 1 : i32
    %174 = tpu.dynamic_rotate %155 by %c1_i32_33 dim 0 : vector<128x128xf32>, i32 -> vector<128x128xf32>
    %175 = vector.broadcast %173 : vector<1x128xf32> to vector<128x128xf32>
    %176 = arith.mulf %175, %174 : vector<128x128xf32>
    %cst_34 = arith.constant 0.000000e+00 : f32
    %177 = vector.shape_cast %34 : vector<128x1xi1> to vector<128x1xi1>
    %178 = vector.broadcast %177 : vector<128x1xi1> to vector<128x128xi1>
    %179 = vector.broadcast %cst_34 : f32 to vector<128x128xf32>
    %180 = arith.select %178, %176, %179 : vector<128x128xi1>, vector<128x128xf32>
    %181 = arith.addf %172, %180 : vector<128x128xf32>
    %182 = vector.extract_strided_slice %157 {offsets = [3, 0], sizes = [1, 128], strides = [1, 1]} : vector<6x128xf32> to vector<1x128xf32>
    %c127_i32 = arith.constant 127 : i32
    %183 = tpu.dynamic_rotate %155 by %c127_i32 dim 0 : vector<128x128xf32>, i32 -> vector<128x128xf32>
    %184 = vector.broadcast %182 : vector<1x128xf32> to vector<128x128xf32>
    %185 = arith.mulf %184, %183 : vector<128x128xf32>
    %cst_35 = arith.constant 0.000000e+00 : f32
    %186 = vector.shape_cast %43 : vector<128x1xi1> to vector<128x1xi1>
    %187 = vector.broadcast %186 : vector<128x1xi1> to vector<128x128xi1>
    %188 = vector.broadcast %cst_35 : f32 to vector<128x128xf32>
    %189 = arith.select %187, %185, %188 : vector<128x128xi1>, vector<128x128xf32>
    %190 = arith.addf %181, %189 : vector<128x128xf32>
    %191 = vector.extract_strided_slice %157 {offsets = [4, 0], sizes = [1, 128], strides = [1, 1]} : vector<6x128xf32> to vector<1x128xf32>
    %c126_i32 = arith.constant 126 : i32
    %192 = tpu.dynamic_rotate %155 by %c126_i32 dim 0 : vector<128x128xf32>, i32 -> vector<128x128xf32>
    %193 = vector.broadcast %191 : vector<1x128xf32> to vector<128x128xf32>
    %194 = arith.mulf %193, %192 : vector<128x128xf32>
    %cst_36 = arith.constant 0.000000e+00 : f32
    %195 = vector.shape_cast %52 : vector<128x1xi1> to vector<128x1xi1>
    %196 = vector.broadcast %195 : vector<128x1xi1> to vector<128x128xi1>
    %197 = vector.broadcast %cst_36 : f32 to vector<128x128xf32>
    %198 = arith.select %196, %194, %197 : vector<128x128xi1>, vector<128x128xf32>
    %199 = arith.addf %190, %198 : vector<128x128xf32>
    %cst_37 = arith.constant -8.000000e+00 : f32
    %cst_38 = arith.constant 8.000000e+00 : f32
    %200 = vector.broadcast %cst_37 : f32 to vector<128x128xf32>
    %201 = arith.maximumf %200, %199 : vector<128x128xf32>
    %202 = vector.broadcast %cst_38 : f32 to vector<128x128xf32>
    %203 = arith.minimumf %202, %201 : vector<128x128xf32>
    %c0_39 = arith.constant 0 : index
    %c0_40 = arith.constant 0 : index
    %c0_41 = arith.constant 0 : index
    %204 = vector.load %arg6[%c0_39, %c0_40, %c0_41] : memref<4x128x128xf32, #tpu.memory_space<vmem>>, vector<1x128x128xf32>
    %205 = vector.shape_cast %204 : vector<1x128x128xf32> to vector<128x128xf32>
    %c0_42 = arith.constant 0 : index
    %c0_43 = arith.constant 0 : index
    %c0_44 = arith.constant 0 : index
    %206 = vector.load %arg7[%c0_42, %c0_43, %c0_44] : memref<4x1x128xf32, #tpu.memory_space<vmem>>, vector<1x1x128xf32>
    %207 = vector.shape_cast %206 : vector<1x1x128xf32> to vector<1x128xf32>
    %cst_45 = arith.constant dense<0.000000e+00> : vector<128x128xf32>
    %208 = tpu.matmul %203, %205, %cst_45 {dimension_numbers = #tpu.dot_dimension_numbers<[1], [0], [0], [1], [0, 0, 1, 1], [], []>} : vector<128x128xf32>, vector<128x128xf32>, vector<128x128xf32> -> vector<128x128xf32>
    %209 = vector.broadcast %207 : vector<1x128xf32> to vector<128x128xf32>
    %210 = arith.addf %208, %209 : vector<128x128xf32>
    %cst_46 = arith.constant 0.000000e+00 : f32
    %211 = vector.broadcast %cst_46 : f32 to vector<128x128xf32>
    %212 = arith.maximumf %210, %211 : vector<128x128xf32>
    %c1 = arith.constant 1 : index
    %c0_47 = arith.constant 0 : index
    %c0_48 = arith.constant 0 : index
    %213 = vector.load %arg4[%c1, %c0_47, %c0_48] : memref<4x5x128xf32, #tpu.memory_space<vmem>>, vector<1x5x128xf32>
    %214 = vector.shape_cast %213 : vector<1x5x128xf32> to vector<5x128xf32>
    %215 = vector.extract_strided_slice %214 {offsets = [0, 0], sizes = [1, 128], strides = [1, 1]} : vector<5x128xf32> to vector<1x128xf32>
    %216 = vector.extract_strided_slice %214 {offsets = [1, 0], sizes = [1, 128], strides = [1, 1]} : vector<5x128xf32> to vector<1x128xf32>
    %217 = vector.extract_strided_slice %214 {offsets = [2, 0], sizes = [1, 128], strides = [1, 1]} : vector<5x128xf32> to vector<1x128xf32>
    %218 = vector.extract_strided_slice %214 {offsets = [3, 0], sizes = [1, 128], strides = [1, 1]} : vector<5x128xf32> to vector<1x128xf32>
    %219 = vector.extract_strided_slice %214 {offsets = [4, 0], sizes = [1, 128], strides = [1, 1]} : vector<5x128xf32> to vector<1x128xf32>
    %220 = vector.shape_cast %215 : vector<1x128xf32> to vector<1x128xf32>
    %221 = vector.broadcast %220 : vector<1x128xf32> to vector<16x128xf32>
    %222 = vector.shape_cast %217 : vector<1x128xf32> to vector<1x128xf32>
    %223 = vector.broadcast %222 : vector<1x128xf32> to vector<16x128xf32>
    %224 = arith.mulf %217, %215 : vector<1x128xf32>
    %225 = arith.addf %216, %224 : vector<1x128xf32>
    %226 = vector.shape_cast %225 : vector<1x128xf32> to vector<1x128xf32>
    %227 = vector.broadcast %226 : vector<1x128xf32> to vector<16x128xf32>
    %228 = vector.extract_strided_slice %212 {offsets = [0, 0], sizes = [16, 128], strides = [1, 1]} : vector<128x128xf32> to vector<16x128xf32>
    %229 = arith.addf %216, %217 : vector<1x128xf32>
    %230 = vector.shape_cast %229 : vector<1x128xf32> to vector<1x128xf32>
    %231 = vector.broadcast %230 : vector<1x128xf32> to vector<16x128xf32>
    %232 = arith.mulf %231, %228 : vector<16x128xf32>
    %cst_49 = arith.constant 0.000000e+00 : f32
    %233 = vector.broadcast %cst_49 : f32 to vector<16x128xf32>
    %234 = arith.mulf %221, %228 : vector<16x128xf32>
    %235 = arith.addf %234, %232 : vector<16x128xf32>
    %236 = arith.mulf %223, %232 : vector<16x128xf32>
    %237 = arith.mulf %223, %233 : vector<16x128xf32>
    %238 = vector.extract_strided_slice %212 {offsets = [0, 0], sizes = [16, 128], strides = [1, 1]} : vector<128x128xf32> to vector<16x128xf32>
    %239 = arith.addf %237, %238 : vector<16x128xf32>
    %240 = vector.extract_strided_slice %212 {offsets = [16, 0], sizes = [16, 128], strides = [1, 1]} : vector<128x128xf32> to vector<16x128xf32>
    %241 = arith.mulf %221, %240 : vector<16x128xf32>
    %242 = arith.mulf %227, %239 : vector<16x128xf32>
    %243 = arith.addf %241, %242 : vector<16x128xf32>
    %244 = arith.addf %243, %236 : vector<16x128xf32>
    %245 = arith.mulf %223, %236 : vector<16x128xf32>
    %246 = arith.mulf %223, %239 : vector<16x128xf32>
    %247 = vector.extract_strided_slice %212 {offsets = [16, 0], sizes = [16, 128], strides = [1, 1]} : vector<128x128xf32> to vector<16x128xf32>
    %248 = arith.addf %246, %247 : vector<16x128xf32>
    %249 = vector.extract_strided_slice %212 {offsets = [32, 0], sizes = [16, 128], strides = [1, 1]} : vector<128x128xf32> to vector<16x128xf32>
    %250 = arith.mulf %221, %249 : vector<16x128xf32>
    %251 = arith.mulf %227, %248 : vector<16x128xf32>
    %252 = arith.addf %250, %251 : vector<16x128xf32>
    %253 = arith.addf %252, %245 : vector<16x128xf32>
    %254 = arith.mulf %223, %245 : vector<16x128xf32>
    %255 = arith.mulf %223, %248 : vector<16x128xf32>
    %256 = vector.extract_strided_slice %212 {offsets = [32, 0], sizes = [16, 128], strides = [1, 1]} : vector<128x128xf32> to vector<16x128xf32>
    %257 = arith.addf %255, %256 : vector<16x128xf32>
    %258 = vector.extract_strided_slice %212 {offsets = [48, 0], sizes = [16, 128], strides = [1, 1]} : vector<128x128xf32> to vector<16x128xf32>
    %259 = arith.mulf %221, %258 : vector<16x128xf32>
    %260 = arith.mulf %227, %257 : vector<16x128xf32>
    %261 = arith.addf %259, %260 : vector<16x128xf32>
    %262 = arith.addf %261, %254 : vector<16x128xf32>
    %263 = arith.mulf %223, %254 : vector<16x128xf32>
    %264 = arith.mulf %223, %257 : vector<16x128xf32>
    %265 = vector.extract_strided_slice %212 {offsets = [48, 0], sizes = [16, 128], strides = [1, 1]} : vector<128x128xf32> to vector<16x128xf32>
    %266 = arith.addf %264, %265 : vector<16x128xf32>
    %267 = vector.extract_strided_slice %212 {offsets = [64, 0], sizes = [16, 128], strides = [1, 1]} : vector<128x128xf32> to vector<16x128xf32>
    %268 = arith.mulf %221, %267 : vector<16x128xf32>
    %269 = arith.mulf %227, %266 : vector<16x128xf32>
    %270 = arith.addf %268, %269 : vector<16x128xf32>
    %271 = arith.addf %270, %263 : vector<16x128xf32>
    %272 = arith.mulf %223, %263 : vector<16x128xf32>
    %273 = arith.mulf %223, %266 : vector<16x128xf32>
    %274 = vector.extract_strided_slice %212 {offsets = [64, 0], sizes = [16, 128], strides = [1, 1]} : vector<128x128xf32> to vector<16x128xf32>
    %275 = arith.addf %273, %274 : vector<16x128xf32>
    %276 = vector.extract_strided_slice %212 {offsets = [80, 0], sizes = [16, 128], strides = [1, 1]} : vector<128x128xf32> to vector<16x128xf32>
    %277 = arith.mulf %221, %276 : vector<16x128xf32>
    %278 = arith.mulf %227, %275 : vector<16x128xf32>
    %279 = arith.addf %277, %278 : vector<16x128xf32>
    %280 = arith.addf %279, %272 : vector<16x128xf32>
    %281 = arith.mulf %223, %272 : vector<16x128xf32>
    %282 = arith.mulf %223, %275 : vector<16x128xf32>
    %283 = vector.extract_strided_slice %212 {offsets = [80, 0], sizes = [16, 128], strides = [1, 1]} : vector<128x128xf32> to vector<16x128xf32>
    %284 = arith.addf %282, %283 : vector<16x128xf32>
    %285 = vector.extract_strided_slice %212 {offsets = [96, 0], sizes = [16, 128], strides = [1, 1]} : vector<128x128xf32> to vector<16x128xf32>
    %286 = arith.mulf %221, %285 : vector<16x128xf32>
    %287 = arith.mulf %227, %284 : vector<16x128xf32>
    %288 = arith.addf %286, %287 : vector<16x128xf32>
    %289 = arith.addf %288, %281 : vector<16x128xf32>
    %290 = arith.mulf %223, %281 : vector<16x128xf32>
    %291 = arith.mulf %223, %284 : vector<16x128xf32>
    %292 = vector.extract_strided_slice %212 {offsets = [96, 0], sizes = [16, 128], strides = [1, 1]} : vector<128x128xf32> to vector<16x128xf32>
    %293 = arith.addf %291, %292 : vector<16x128xf32>
    %294 = vector.extract_strided_slice %212 {offsets = [112, 0], sizes = [16, 128], strides = [1, 1]} : vector<128x128xf32> to vector<16x128xf32>
    %295 = arith.mulf %221, %294 : vector<16x128xf32>
    %296 = arith.mulf %227, %293 : vector<16x128xf32>
    %297 = arith.addf %295, %296 : vector<16x128xf32>
    %298 = arith.addf %297, %290 : vector<16x128xf32>
    %299 = tpu.concatenate %235, %244, %253, %262, %271, %280, %289, %298 in 0 : vector<16x128xf32>, vector<16x128xf32>, vector<16x128xf32>, vector<16x128xf32>, vector<16x128xf32>, vector<16x128xf32>, vector<16x128xf32>, vector<16x128xf32> -> vector<128x128xf32>
    %300 = vector.broadcast %218 : vector<1x128xf32> to vector<128x128xf32>
    %301 = arith.mulf %299, %300 : vector<128x128xf32>
    %302 = vector.broadcast %219 : vector<1x128xf32> to vector<128x128xf32>
    %303 = arith.addf %301, %302 : vector<128x128xf32>
    %cst_50 = arith.constant -8.000000e+00 : f32
    %cst_51 = arith.constant 8.000000e+00 : f32
    %304 = vector.broadcast %cst_50 : f32 to vector<128x128xf32>
    %305 = arith.maximumf %304, %303 : vector<128x128xf32>
    %306 = vector.broadcast %cst_51 : f32 to vector<128x128xf32>
    %307 = arith.minimumf %306, %305 : vector<128x128xf32>
    %c1_52 = arith.constant 1 : index
    %c0_53 = arith.constant 0 : index
    %c0_54 = arith.constant 0 : index
    %308 = vector.load %arg5[%c1_52, %c0_53, %c0_54] : memref<4x6x128xf32, #tpu.memory_space<vmem>>, vector<1x6x128xf32>
    %309 = vector.shape_cast %308 : vector<1x6x128xf32> to vector<6x128xf32>
    %310 = vector.extract_strided_slice %309 {offsets = [2, 0], sizes = [1, 128], strides = [1, 1]} : vector<6x128xf32> to vector<1x128xf32>
    %311 = vector.broadcast %310 : vector<1x128xf32> to vector<128x128xf32>
    %312 = arith.mulf %311, %307 : vector<128x128xf32>
    %313 = vector.extract_strided_slice %309 {offsets = [5, 0], sizes = [1, 128], strides = [1, 1]} : vector<6x128xf32> to vector<1x128xf32>
    %314 = vector.broadcast %313 : vector<1x128xf32> to vector<128x128xf32>
    %315 = arith.addf %312, %314 : vector<128x128xf32>
    %316 = vector.extract_strided_slice %309 {offsets = [0, 0], sizes = [1, 128], strides = [1, 1]} : vector<6x128xf32> to vector<1x128xf32>
    %c2_i32_55 = arith.constant 2 : i32
    %317 = tpu.dynamic_rotate %307 by %c2_i32_55 dim 0 : vector<128x128xf32>, i32 -> vector<128x128xf32>
    %318 = vector.broadcast %316 : vector<1x128xf32> to vector<128x128xf32>
    %319 = arith.mulf %318, %317 : vector<128x128xf32>
    %cst_56 = arith.constant 0.000000e+00 : f32
    %320 = vector.shape_cast %25 : vector<128x1xi1> to vector<128x1xi1>
    %321 = vector.broadcast %320 : vector<128x1xi1> to vector<128x128xi1>
    %322 = vector.broadcast %cst_56 : f32 to vector<128x128xf32>
    %323 = arith.select %321, %319, %322 : vector<128x128xi1>, vector<128x128xf32>
    %324 = arith.addf %315, %323 : vector<128x128xf32>
    %325 = vector.extract_strided_slice %309 {offsets = [1, 0], sizes = [1, 128], strides = [1, 1]} : vector<6x128xf32> to vector<1x128xf32>
    %c1_i32_57 = arith.constant 1 : i32
    %326 = tpu.dynamic_rotate %307 by %c1_i32_57 dim 0 : vector<128x128xf32>, i32 -> vector<128x128xf32>
    %327 = vector.broadcast %325 : vector<1x128xf32> to vector<128x128xf32>
    %328 = arith.mulf %327, %326 : vector<128x128xf32>
    %cst_58 = arith.constant 0.000000e+00 : f32
    %329 = vector.shape_cast %34 : vector<128x1xi1> to vector<128x1xi1>
    %330 = vector.broadcast %329 : vector<128x1xi1> to vector<128x128xi1>
    %331 = vector.broadcast %cst_58 : f32 to vector<128x128xf32>
    %332 = arith.select %330, %328, %331 : vector<128x128xi1>, vector<128x128xf32>
    %333 = arith.addf %324, %332 : vector<128x128xf32>
    %334 = vector.extract_strided_slice %309 {offsets = [3, 0], sizes = [1, 128], strides = [1, 1]} : vector<6x128xf32> to vector<1x128xf32>
    %c127_i32_59 = arith.constant 127 : i32
    %335 = tpu.dynamic_rotate %307 by %c127_i32_59 dim 0 : vector<128x128xf32>, i32 -> vector<128x128xf32>
    %336 = vector.broadcast %334 : vector<1x128xf32> to vector<128x128xf32>
    %337 = arith.mulf %336, %335 : vector<128x128xf32>
    %cst_60 = arith.constant 0.000000e+00 : f32
    %338 = vector.shape_cast %43 : vector<128x1xi1> to vector<128x1xi1>
    %339 = vector.broadcast %338 : vector<128x1xi1> to vector<128x128xi1>
    %340 = vector.broadcast %cst_60 : f32 to vector<128x128xf32>
    %341 = arith.select %339, %337, %340 : vector<128x128xi1>, vector<128x128xf32>
    %342 = arith.addf %333, %341 : vector<128x128xf32>
    %343 = vector.extract_strided_slice %309 {offsets = [4, 0], sizes = [1, 128], strides = [1, 1]} : vector<6x128xf32> to vector<1x128xf32>
    %c126_i32_61 = arith.constant 126 : i32
    %344 = tpu.dynamic_rotate %307 by %c126_i32_61 dim 0 : vector<128x128xf32>, i32 -> vector<128x128xf32>
    %345 = vector.broadcast %343 : vector<1x128xf32> to vector<128x128xf32>
    %346 = arith.mulf %345, %344 : vector<128x128xf32>
    %cst_62 = arith.constant 0.000000e+00 : f32
    %347 = vector.shape_cast %52 : vector<128x1xi1> to vector<128x1xi1>
    %348 = vector.broadcast %347 : vector<128x1xi1> to vector<128x128xi1>
    %349 = vector.broadcast %cst_62 : f32 to vector<128x128xf32>
    %350 = arith.select %348, %346, %349 : vector<128x128xi1>, vector<128x128xf32>
    %351 = arith.addf %342, %350 : vector<128x128xf32>
    %cst_63 = arith.constant -8.000000e+00 : f32
    %cst_64 = arith.constant 8.000000e+00 : f32
    %352 = vector.broadcast %cst_63 : f32 to vector<128x128xf32>
    %353 = arith.maximumf %352, %351 : vector<128x128xf32>
    %354 = vector.broadcast %cst_64 : f32 to vector<128x128xf32>
    %355 = arith.minimumf %354, %353 : vector<128x128xf32>
    %c1_65 = arith.constant 1 : index
    %c0_66 = arith.constant 0 : index
    %c0_67 = arith.constant 0 : index
    %356 = vector.load %arg6[%c1_65, %c0_66, %c0_67] : memref<4x128x128xf32, #tpu.memory_space<vmem>>, vector<1x128x128xf32>
    %357 = vector.shape_cast %356 : vector<1x128x128xf32> to vector<128x128xf32>
    %c1_68 = arith.constant 1 : index
    %c0_69 = arith.constant 0 : index
    %c0_70 = arith.constant 0 : index
    %358 = vector.load %arg7[%c1_68, %c0_69, %c0_70] : memref<4x1x128xf32, #tpu.memory_space<vmem>>, vector<1x1x128xf32>
    %359 = vector.shape_cast %358 : vector<1x1x128xf32> to vector<1x128xf32>
    %cst_71 = arith.constant dense<0.000000e+00> : vector<128x128xf32>
    %360 = tpu.matmul %355, %357, %cst_71 {dimension_numbers = #tpu.dot_dimension_numbers<[1], [0], [0], [1], [0, 0, 1, 1], [], []>} : vector<128x128xf32>, vector<128x128xf32>, vector<128x128xf32> -> vector<128x128xf32>
    %361 = vector.broadcast %359 : vector<1x128xf32> to vector<128x128xf32>
    %362 = arith.addf %360, %361 : vector<128x128xf32>
    %cst_72 = arith.constant 0.000000e+00 : f32
    %363 = vector.broadcast %cst_72 : f32 to vector<128x128xf32>
    %364 = arith.maximumf %362, %363 : vector<128x128xf32>
    %365 = arith.addf %60, %364 : vector<128x128xf32>
    %c2 = arith.constant 2 : index
    %c0_73 = arith.constant 0 : index
    %c0_74 = arith.constant 0 : index
    %366 = vector.load %arg4[%c2, %c0_73, %c0_74] : memref<4x5x128xf32, #tpu.memory_space<vmem>>, vector<1x5x128xf32>
    %367 = vector.shape_cast %366 : vector<1x5x128xf32> to vector<5x128xf32>
    %368 = vector.extract_strided_slice %367 {offsets = [0, 0], sizes = [1, 128], strides = [1, 1]} : vector<5x128xf32> to vector<1x128xf32>
    %369 = vector.extract_strided_slice %367 {offsets = [1, 0], sizes = [1, 128], strides = [1, 1]} : vector<5x128xf32> to vector<1x128xf32>
    %370 = vector.extract_strided_slice %367 {offsets = [2, 0], sizes = [1, 128], strides = [1, 1]} : vector<5x128xf32> to vector<1x128xf32>
    %371 = vector.extract_strided_slice %367 {offsets = [3, 0], sizes = [1, 128], strides = [1, 1]} : vector<5x128xf32> to vector<1x128xf32>
    %372 = vector.extract_strided_slice %367 {offsets = [4, 0], sizes = [1, 128], strides = [1, 1]} : vector<5x128xf32> to vector<1x128xf32>
    %373 = vector.shape_cast %368 : vector<1x128xf32> to vector<1x128xf32>
    %374 = vector.broadcast %373 : vector<1x128xf32> to vector<16x128xf32>
    %375 = vector.shape_cast %370 : vector<1x128xf32> to vector<1x128xf32>
    %376 = vector.broadcast %375 : vector<1x128xf32> to vector<16x128xf32>
    %377 = arith.mulf %370, %368 : vector<1x128xf32>
    %378 = arith.addf %369, %377 : vector<1x128xf32>
    %379 = vector.shape_cast %378 : vector<1x128xf32> to vector<1x128xf32>
    %380 = vector.broadcast %379 : vector<1x128xf32> to vector<16x128xf32>
    %381 = vector.extract_strided_slice %365 {offsets = [0, 0], sizes = [16, 128], strides = [1, 1]} : vector<128x128xf32> to vector<16x128xf32>
    %382 = arith.addf %369, %370 : vector<1x128xf32>
    %383 = vector.shape_cast %382 : vector<1x128xf32> to vector<1x128xf32>
    %384 = vector.broadcast %383 : vector<1x128xf32> to vector<16x128xf32>
    %385 = arith.mulf %384, %381 : vector<16x128xf32>
    %cst_75 = arith.constant 0.000000e+00 : f32
    %386 = vector.broadcast %cst_75 : f32 to vector<16x128xf32>
    %387 = arith.mulf %374, %381 : vector<16x128xf32>
    %388 = arith.addf %387, %385 : vector<16x128xf32>
    %389 = arith.mulf %376, %385 : vector<16x128xf32>
    %390 = arith.mulf %376, %386 : vector<16x128xf32>
    %391 = vector.extract_strided_slice %365 {offsets = [0, 0], sizes = [16, 128], strides = [1, 1]} : vector<128x128xf32> to vector<16x128xf32>
    %392 = arith.addf %390, %391 : vector<16x128xf32>
    %393 = vector.extract_strided_slice %365 {offsets = [16, 0], sizes = [16, 128], strides = [1, 1]} : vector<128x128xf32> to vector<16x128xf32>
    %394 = arith.mulf %374, %393 : vector<16x128xf32>
    %395 = arith.mulf %380, %392 : vector<16x128xf32>
    %396 = arith.addf %394, %395 : vector<16x128xf32>
    %397 = arith.addf %396, %389 : vector<16x128xf32>
    %398 = arith.mulf %376, %389 : vector<16x128xf32>
    %399 = arith.mulf %376, %392 : vector<16x128xf32>
    %400 = vector.extract_strided_slice %365 {offsets = [16, 0], sizes = [16, 128], strides = [1, 1]} : vector<128x128xf32> to vector<16x128xf32>
    %401 = arith.addf %399, %400 : vector<16x128xf32>
    %402 = vector.extract_strided_slice %365 {offsets = [32, 0], sizes = [16, 128], strides = [1, 1]} : vector<128x128xf32> to vector<16x128xf32>
    %403 = arith.mulf %374, %402 : vector<16x128xf32>
    %404 = arith.mulf %380, %401 : vector<16x128xf32>
    %405 = arith.addf %403, %404 : vector<16x128xf32>
    %406 = arith.addf %405, %398 : vector<16x128xf32>
    %407 = arith.mulf %376, %398 : vector<16x128xf32>
    %408 = arith.mulf %376, %401 : vector<16x128xf32>
    %409 = vector.extract_strided_slice %365 {offsets = [32, 0], sizes = [16, 128], strides = [1, 1]} : vector<128x128xf32> to vector<16x128xf32>
    %410 = arith.addf %408, %409 : vector<16x128xf32>
    %411 = vector.extract_strided_slice %365 {offsets = [48, 0], sizes = [16, 128], strides = [1, 1]} : vector<128x128xf32> to vector<16x128xf32>
    %412 = arith.mulf %374, %411 : vector<16x128xf32>
    %413 = arith.mulf %380, %410 : vector<16x128xf32>
    %414 = arith.addf %412, %413 : vector<16x128xf32>
    %415 = arith.addf %414, %407 : vector<16x128xf32>
    %416 = arith.mulf %376, %407 : vector<16x128xf32>
    %417 = arith.mulf %376, %410 : vector<16x128xf32>
    %418 = vector.extract_strided_slice %365 {offsets = [48, 0], sizes = [16, 128], strides = [1, 1]} : vector<128x128xf32> to vector<16x128xf32>
    %419 = arith.addf %417, %418 : vector<16x128xf32>
    %420 = vector.extract_strided_slice %365 {offsets = [64, 0], sizes = [16, 128], strides = [1, 1]} : vector<128x128xf32> to vector<16x128xf32>
    %421 = arith.mulf %374, %420 : vector<16x128xf32>
    %422 = arith.mulf %380, %419 : vector<16x128xf32>
    %423 = arith.addf %421, %422 : vector<16x128xf32>
    %424 = arith.addf %423, %416 : vector<16x128xf32>
    %425 = arith.mulf %376, %416 : vector<16x128xf32>
    %426 = arith.mulf %376, %419 : vector<16x128xf32>
    %427 = vector.extract_strided_slice %365 {offsets = [64, 0], sizes = [16, 128], strides = [1, 1]} : vector<128x128xf32> to vector<16x128xf32>
    %428 = arith.addf %426, %427 : vector<16x128xf32>
    %429 = vector.extract_strided_slice %365 {offsets = [80, 0], sizes = [16, 128], strides = [1, 1]} : vector<128x128xf32> to vector<16x128xf32>
    %430 = arith.mulf %374, %429 : vector<16x128xf32>
    %431 = arith.mulf %380, %428 : vector<16x128xf32>
    %432 = arith.addf %430, %431 : vector<16x128xf32>
    %433 = arith.addf %432, %425 : vector<16x128xf32>
    %434 = arith.mulf %376, %425 : vector<16x128xf32>
    %435 = arith.mulf %376, %428 : vector<16x128xf32>
    %436 = vector.extract_strided_slice %365 {offsets = [80, 0], sizes = [16, 128], strides = [1, 1]} : vector<128x128xf32> to vector<16x128xf32>
    %437 = arith.addf %435, %436 : vector<16x128xf32>
    %438 = vector.extract_strided_slice %365 {offsets = [96, 0], sizes = [16, 128], strides = [1, 1]} : vector<128x128xf32> to vector<16x128xf32>
    %439 = arith.mulf %374, %438 : vector<16x128xf32>
    %440 = arith.mulf %380, %437 : vector<16x128xf32>
    %441 = arith.addf %439, %440 : vector<16x128xf32>
    %442 = arith.addf %441, %434 : vector<16x128xf32>
    %443 = arith.mulf %376, %434 : vector<16x128xf32>
    %444 = arith.mulf %376, %437 : vector<16x128xf32>
    %445 = vector.extract_strided_slice %365 {offsets = [96, 0], sizes = [16, 128], strides = [1, 1]} : vector<128x128xf32> to vector<16x128xf32>
    %446 = arith.addf %444, %445 : vector<16x128xf32>
    %447 = vector.extract_strided_slice %365 {offsets = [112, 0], sizes = [16, 128], strides = [1, 1]} : vector<128x128xf32> to vector<16x128xf32>
    %448 = arith.mulf %374, %447 : vector<16x128xf32>
    %449 = arith.mulf %380, %446 : vector<16x128xf32>
    %450 = arith.addf %448, %449 : vector<16x128xf32>
    %451 = arith.addf %450, %443 : vector<16x128xf32>
    %452 = tpu.concatenate %388, %397, %406, %415, %424, %433, %442, %451 in 0 : vector<16x128xf32>, vector<16x128xf32>, vector<16x128xf32>, vector<16x128xf32>, vector<16x128xf32>, vector<16x128xf32>, vector<16x128xf32>, vector<16x128xf32> -> vector<128x128xf32>
    %453 = vector.broadcast %371 : vector<1x128xf32> to vector<128x128xf32>
    %454 = arith.mulf %452, %453 : vector<128x128xf32>
    %455 = vector.broadcast %372 : vector<1x128xf32> to vector<128x128xf32>
    %456 = arith.addf %454, %455 : vector<128x128xf32>
    %cst_76 = arith.constant -8.000000e+00 : f32
    %cst_77 = arith.constant 8.000000e+00 : f32
    %457 = vector.broadcast %cst_76 : f32 to vector<128x128xf32>
    %458 = arith.maximumf %457, %456 : vector<128x128xf32>
    %459 = vector.broadcast %cst_77 : f32 to vector<128x128xf32>
    %460 = arith.minimumf %459, %458 : vector<128x128xf32>
    %c2_78 = arith.constant 2 : index
    %c0_79 = arith.constant 0 : index
    %c0_80 = arith.constant 0 : index
    %461 = vector.load %arg5[%c2_78, %c0_79, %c0_80] : memref<4x6x128xf32, #tpu.memory_space<vmem>>, vector<1x6x128xf32>
    %462 = vector.shape_cast %461 : vector<1x6x128xf32> to vector<6x128xf32>
    %463 = vector.extract_strided_slice %462 {offsets = [2, 0], sizes = [1, 128], strides = [1, 1]} : vector<6x128xf32> to vector<1x128xf32>
    %464 = vector.broadcast %463 : vector<1x128xf32> to vector<128x128xf32>
    %465 = arith.mulf %464, %460 : vector<128x128xf32>
    %466 = vector.extract_strided_slice %462 {offsets = [5, 0], sizes = [1, 128], strides = [1, 1]} : vector<6x128xf32> to vector<1x128xf32>
    %467 = vector.broadcast %466 : vector<1x128xf32> to vector<128x128xf32>
    %468 = arith.addf %465, %467 : vector<128x128xf32>
    %469 = vector.extract_strided_slice %462 {offsets = [0, 0], sizes = [1, 128], strides = [1, 1]} : vector<6x128xf32> to vector<1x128xf32>
    %c2_i32_81 = arith.constant 2 : i32
    %470 = tpu.dynamic_rotate %460 by %c2_i32_81 dim 0 : vector<128x128xf32>, i32 -> vector<128x128xf32>
    %471 = vector.broadcast %469 : vector<1x128xf32> to vector<128x128xf32>
    %472 = arith.mulf %471, %470 : vector<128x128xf32>
    %cst_82 = arith.constant 0.000000e+00 : f32
    %473 = vector.shape_cast %25 : vector<128x1xi1> to vector<128x1xi1>
    %474 = vector.broadcast %473 : vector<128x1xi1> to vector<128x128xi1>
    %475 = vector.broadcast %cst_82 : f32 to vector<128x128xf32>
    %476 = arith.select %474, %472, %475 : vector<128x128xi1>, vector<128x128xf32>
    %477 = arith.addf %468, %476 : vector<128x128xf32>
    %478 = vector.extract_strided_slice %462 {offsets = [1, 0], sizes = [1, 128], strides = [1, 1]} : vector<6x128xf32> to vector<1x128xf32>
    %c1_i32_83 = arith.constant 1 : i32
    %479 = tpu.dynamic_rotate %460 by %c1_i32_83 dim 0 : vector<128x128xf32>, i32 -> vector<128x128xf32>
    %480 = vector.broadcast %478 : vector<1x128xf32> to vector<128x128xf32>
    %481 = arith.mulf %480, %479 : vector<128x128xf32>
    %cst_84 = arith.constant 0.000000e+00 : f32
    %482 = vector.shape_cast %34 : vector<128x1xi1> to vector<128x1xi1>
    %483 = vector.broadcast %482 : vector<128x1xi1> to vector<128x128xi1>
    %484 = vector.broadcast %cst_84 : f32 to vector<128x128xf32>
    %485 = arith.select %483, %481, %484 : vector<128x128xi1>, vector<128x128xf32>
    %486 = arith.addf %477, %485 : vector<128x128xf32>
    %487 = vector.extract_strided_slice %462 {offsets = [3, 0], sizes = [1, 128], strides = [1, 1]} : vector<6x128xf32> to vector<1x128xf32>
    %c127_i32_85 = arith.constant 127 : i32
    %488 = tpu.dynamic_rotate %460 by %c127_i32_85 dim 0 : vector<128x128xf32>, i32 -> vector<128x128xf32>
    %489 = vector.broadcast %487 : vector<1x128xf32> to vector<128x128xf32>
    %490 = arith.mulf %489, %488 : vector<128x128xf32>
    %cst_86 = arith.constant 0.000000e+00 : f32
    %491 = vector.shape_cast %43 : vector<128x1xi1> to vector<128x1xi1>
    %492 = vector.broadcast %491 : vector<128x1xi1> to vector<128x128xi1>
    %493 = vector.broadcast %cst_86 : f32 to vector<128x128xf32>
    %494 = arith.select %492, %490, %493 : vector<128x128xi1>, vector<128x128xf32>
    %495 = arith.addf %486, %494 : vector<128x128xf32>
    %496 = vector.extract_strided_slice %462 {offsets = [4, 0], sizes = [1, 128], strides = [1, 1]} : vector<6x128xf32> to vector<1x128xf32>
    %c126_i32_87 = arith.constant 126 : i32
    %497 = tpu.dynamic_rotate %460 by %c126_i32_87 dim 0 : vector<128x128xf32>, i32 -> vector<128x128xf32>
    %498 = vector.broadcast %496 : vector<1x128xf32> to vector<128x128xf32>
    %499 = arith.mulf %498, %497 : vector<128x128xf32>
    %cst_88 = arith.constant 0.000000e+00 : f32
    %500 = vector.shape_cast %52 : vector<128x1xi1> to vector<128x1xi1>
    %501 = vector.broadcast %500 : vector<128x1xi1> to vector<128x128xi1>
    %502 = vector.broadcast %cst_88 : f32 to vector<128x128xf32>
    %503 = arith.select %501, %499, %502 : vector<128x128xi1>, vector<128x128xf32>
    %504 = arith.addf %495, %503 : vector<128x128xf32>
    %cst_89 = arith.constant -8.000000e+00 : f32
    %cst_90 = arith.constant 8.000000e+00 : f32
    %505 = vector.broadcast %cst_89 : f32 to vector<128x128xf32>
    %506 = arith.maximumf %505, %504 : vector<128x128xf32>
    %507 = vector.broadcast %cst_90 : f32 to vector<128x128xf32>
    %508 = arith.minimumf %507, %506 : vector<128x128xf32>
    %c2_91 = arith.constant 2 : index
    %c0_92 = arith.constant 0 : index
    %c0_93 = arith.constant 0 : index
    %509 = vector.load %arg6[%c2_91, %c0_92, %c0_93] : memref<4x128x128xf32, #tpu.memory_space<vmem>>, vector<1x128x128xf32>
    %510 = vector.shape_cast %509 : vector<1x128x128xf32> to vector<128x128xf32>
    %c2_94 = arith.constant 2 : index
    %c0_95 = arith.constant 0 : index
    %c0_96 = arith.constant 0 : index
    %511 = vector.load %arg7[%c2_94, %c0_95, %c0_96] : memref<4x1x128xf32, #tpu.memory_space<vmem>>, vector<1x1x128xf32>
    %512 = vector.shape_cast %511 : vector<1x1x128xf32> to vector<1x128xf32>
    %cst_97 = arith.constant dense<0.000000e+00> : vector<128x128xf32>
    %513 = tpu.matmul %508, %510, %cst_97 {dimension_numbers = #tpu.dot_dimension_numbers<[1], [0], [0], [1], [0, 0, 1, 1], [], []>} : vector<128x128xf32>, vector<128x128xf32>, vector<128x128xf32> -> vector<128x128xf32>
    %514 = vector.broadcast %512 : vector<1x128xf32> to vector<128x128xf32>
    %515 = arith.addf %513, %514 : vector<128x128xf32>
    %cst_98 = arith.constant 0.000000e+00 : f32
    %516 = vector.broadcast %cst_98 : f32 to vector<128x128xf32>
    %517 = arith.maximumf %515, %516 : vector<128x128xf32>
    %c3 = arith.constant 3 : index
    %c0_99 = arith.constant 0 : index
    %c0_100 = arith.constant 0 : index
    %518 = vector.load %arg4[%c3, %c0_99, %c0_100] : memref<4x5x128xf32, #tpu.memory_space<vmem>>, vector<1x5x128xf32>
    %519 = vector.shape_cast %518 : vector<1x5x128xf32> to vector<5x128xf32>
    %520 = vector.extract_strided_slice %519 {offsets = [0, 0], sizes = [1, 128], strides = [1, 1]} : vector<5x128xf32> to vector<1x128xf32>
    %521 = vector.extract_strided_slice %519 {offsets = [1, 0], sizes = [1, 128], strides = [1, 1]} : vector<5x128xf32> to vector<1x128xf32>
    %522 = vector.extract_strided_slice %519 {offsets = [2, 0], sizes = [1, 128], strides = [1, 1]} : vector<5x128xf32> to vector<1x128xf32>
    %523 = vector.extract_strided_slice %519 {offsets = [3, 0], sizes = [1, 128], strides = [1, 1]} : vector<5x128xf32> to vector<1x128xf32>
    %524 = vector.extract_strided_slice %519 {offsets = [4, 0], sizes = [1, 128], strides = [1, 1]} : vector<5x128xf32> to vector<1x128xf32>
    %525 = vector.shape_cast %520 : vector<1x128xf32> to vector<1x128xf32>
    %526 = vector.broadcast %525 : vector<1x128xf32> to vector<16x128xf32>
    %527 = vector.shape_cast %522 : vector<1x128xf32> to vector<1x128xf32>
    %528 = vector.broadcast %527 : vector<1x128xf32> to vector<16x128xf32>
    %529 = arith.mulf %522, %520 : vector<1x128xf32>
    %530 = arith.addf %521, %529 : vector<1x128xf32>
    %531 = vector.shape_cast %530 : vector<1x128xf32> to vector<1x128xf32>
    %532 = vector.broadcast %531 : vector<1x128xf32> to vector<16x128xf32>
    %533 = vector.extract_strided_slice %517 {offsets = [0, 0], sizes = [16, 128], strides = [1, 1]} : vector<128x128xf32> to vector<16x128xf32>
    %534 = arith.addf %521, %522 : vector<1x128xf32>
    %535 = vector.shape_cast %534 : vector<1x128xf32> to vector<1x128xf32>
    %536 = vector.broadcast %535 : vector<1x128xf32> to vector<16x128xf32>
    %537 = arith.mulf %536, %533 : vector<16x128xf32>
    %cst_101 = arith.constant 0.000000e+00 : f32
    %538 = vector.broadcast %cst_101 : f32 to vector<16x128xf32>
    %539 = arith.mulf %526, %533 : vector<16x128xf32>
    %540 = arith.addf %539, %537 : vector<16x128xf32>
    %541 = arith.mulf %528, %537 : vector<16x128xf32>
    %542 = arith.mulf %528, %538 : vector<16x128xf32>
    %543 = vector.extract_strided_slice %517 {offsets = [0, 0], sizes = [16, 128], strides = [1, 1]} : vector<128x128xf32> to vector<16x128xf32>
    %544 = arith.addf %542, %543 : vector<16x128xf32>
    %545 = vector.extract_strided_slice %517 {offsets = [16, 0], sizes = [16, 128], strides = [1, 1]} : vector<128x128xf32> to vector<16x128xf32>
    %546 = arith.mulf %526, %545 : vector<16x128xf32>
    %547 = arith.mulf %532, %544 : vector<16x128xf32>
    %548 = arith.addf %546, %547 : vector<16x128xf32>
    %549 = arith.addf %548, %541 : vector<16x128xf32>
    %550 = arith.mulf %528, %541 : vector<16x128xf32>
    %551 = arith.mulf %528, %544 : vector<16x128xf32>
    %552 = vector.extract_strided_slice %517 {offsets = [16, 0], sizes = [16, 128], strides = [1, 1]} : vector<128x128xf32> to vector<16x128xf32>
    %553 = arith.addf %551, %552 : vector<16x128xf32>
    %554 = vector.extract_strided_slice %517 {offsets = [32, 0], sizes = [16, 128], strides = [1, 1]} : vector<128x128xf32> to vector<16x128xf32>
    %555 = arith.mulf %526, %554 : vector<16x128xf32>
    %556 = arith.mulf %532, %553 : vector<16x128xf32>
    %557 = arith.addf %555, %556 : vector<16x128xf32>
    %558 = arith.addf %557, %550 : vector<16x128xf32>
    %559 = arith.mulf %528, %550 : vector<16x128xf32>
    %560 = arith.mulf %528, %553 : vector<16x128xf32>
    %561 = vector.extract_strided_slice %517 {offsets = [32, 0], sizes = [16, 128], strides = [1, 1]} : vector<128x128xf32> to vector<16x128xf32>
    %562 = arith.addf %560, %561 : vector<16x128xf32>
    %563 = vector.extract_strided_slice %517 {offsets = [48, 0], sizes = [16, 128], strides = [1, 1]} : vector<128x128xf32> to vector<16x128xf32>
    %564 = arith.mulf %526, %563 : vector<16x128xf32>
    %565 = arith.mulf %532, %562 : vector<16x128xf32>
    %566 = arith.addf %564, %565 : vector<16x128xf32>
    %567 = arith.addf %566, %559 : vector<16x128xf32>
    %568 = arith.mulf %528, %559 : vector<16x128xf32>
    %569 = arith.mulf %528, %562 : vector<16x128xf32>
    %570 = vector.extract_strided_slice %517 {offsets = [48, 0], sizes = [16, 128], strides = [1, 1]} : vector<128x128xf32> to vector<16x128xf32>
    %571 = arith.addf %569, %570 : vector<16x128xf32>
    %572 = vector.extract_strided_slice %517 {offsets = [64, 0], sizes = [16, 128], strides = [1, 1]} : vector<128x128xf32> to vector<16x128xf32>
    %573 = arith.mulf %526, %572 : vector<16x128xf32>
    %574 = arith.mulf %532, %571 : vector<16x128xf32>
    %575 = arith.addf %573, %574 : vector<16x128xf32>
    %576 = arith.addf %575, %568 : vector<16x128xf32>
    %577 = arith.mulf %528, %568 : vector<16x128xf32>
    %578 = arith.mulf %528, %571 : vector<16x128xf32>
    %579 = vector.extract_strided_slice %517 {offsets = [64, 0], sizes = [16, 128], strides = [1, 1]} : vector<128x128xf32> to vector<16x128xf32>
    %580 = arith.addf %578, %579 : vector<16x128xf32>
    %581 = vector.extract_strided_slice %517 {offsets = [80, 0], sizes = [16, 128], strides = [1, 1]} : vector<128x128xf32> to vector<16x128xf32>
    %582 = arith.mulf %526, %581 : vector<16x128xf32>
    %583 = arith.mulf %532, %580 : vector<16x128xf32>
    %584 = arith.addf %582, %583 : vector<16x128xf32>
    %585 = arith.addf %584, %577 : vector<16x128xf32>
    %586 = arith.mulf %528, %577 : vector<16x128xf32>
    %587 = arith.mulf %528, %580 : vector<16x128xf32>
    %588 = vector.extract_strided_slice %517 {offsets = [80, 0], sizes = [16, 128], strides = [1, 1]} : vector<128x128xf32> to vector<16x128xf32>
    %589 = arith.addf %587, %588 : vector<16x128xf32>
    %590 = vector.extract_strided_slice %517 {offsets = [96, 0], sizes = [16, 128], strides = [1, 1]} : vector<128x128xf32> to vector<16x128xf32>
    %591 = arith.mulf %526, %590 : vector<16x128xf32>
    %592 = arith.mulf %532, %589 : vector<16x128xf32>
    %593 = arith.addf %591, %592 : vector<16x128xf32>
    %594 = arith.addf %593, %586 : vector<16x128xf32>
    %595 = arith.mulf %528, %586 : vector<16x128xf32>
    %596 = arith.mulf %528, %589 : vector<16x128xf32>
    %597 = vector.extract_strided_slice %517 {offsets = [96, 0], sizes = [16, 128], strides = [1, 1]} : vector<128x128xf32> to vector<16x128xf32>
    %598 = arith.addf %596, %597 : vector<16x128xf32>
    %599 = vector.extract_strided_slice %517 {offsets = [112, 0], sizes = [16, 128], strides = [1, 1]} : vector<128x128xf32> to vector<16x128xf32>
    %600 = arith.mulf %526, %599 : vector<16x128xf32>
    %601 = arith.mulf %532, %598 : vector<16x128xf32>
    %602 = arith.addf %600, %601 : vector<16x128xf32>
    %603 = arith.addf %602, %595 : vector<16x128xf32>
    %604 = tpu.concatenate %540, %549, %558, %567, %576, %585, %594, %603 in 0 : vector<16x128xf32>, vector<16x128xf32>, vector<16x128xf32>, vector<16x128xf32>, vector<16x128xf32>, vector<16x128xf32>, vector<16x128xf32>, vector<16x128xf32> -> vector<128x128xf32>
    %605 = vector.broadcast %523 : vector<1x128xf32> to vector<128x128xf32>
    %606 = arith.mulf %604, %605 : vector<128x128xf32>
    %607 = vector.broadcast %524 : vector<1x128xf32> to vector<128x128xf32>
    %608 = arith.addf %606, %607 : vector<128x128xf32>
    %cst_102 = arith.constant -8.000000e+00 : f32
    %cst_103 = arith.constant 8.000000e+00 : f32
    %609 = vector.broadcast %cst_102 : f32 to vector<128x128xf32>
    %610 = arith.maximumf %609, %608 : vector<128x128xf32>
    %611 = vector.broadcast %cst_103 : f32 to vector<128x128xf32>
    %612 = arith.minimumf %611, %610 : vector<128x128xf32>
    %c3_104 = arith.constant 3 : index
    %c0_105 = arith.constant 0 : index
    %c0_106 = arith.constant 0 : index
    %613 = vector.load %arg5[%c3_104, %c0_105, %c0_106] : memref<4x6x128xf32, #tpu.memory_space<vmem>>, vector<1x6x128xf32>
    %614 = vector.shape_cast %613 : vector<1x6x128xf32> to vector<6x128xf32>
    %615 = vector.extract_strided_slice %614 {offsets = [2, 0], sizes = [1, 128], strides = [1, 1]} : vector<6x128xf32> to vector<1x128xf32>
    %616 = vector.broadcast %615 : vector<1x128xf32> to vector<128x128xf32>
    %617 = arith.mulf %616, %612 : vector<128x128xf32>
    %618 = vector.extract_strided_slice %614 {offsets = [5, 0], sizes = [1, 128], strides = [1, 1]} : vector<6x128xf32> to vector<1x128xf32>
    %619 = vector.broadcast %618 : vector<1x128xf32> to vector<128x128xf32>
    %620 = arith.addf %617, %619 : vector<128x128xf32>
    %621 = vector.extract_strided_slice %614 {offsets = [0, 0], sizes = [1, 128], strides = [1, 1]} : vector<6x128xf32> to vector<1x128xf32>
    %c2_i32_107 = arith.constant 2 : i32
    %622 = tpu.dynamic_rotate %612 by %c2_i32_107 dim 0 : vector<128x128xf32>, i32 -> vector<128x128xf32>
    %623 = vector.broadcast %621 : vector<1x128xf32> to vector<128x128xf32>
    %624 = arith.mulf %623, %622 : vector<128x128xf32>
    %cst_108 = arith.constant 0.000000e+00 : f32
    %625 = vector.shape_cast %25 : vector<128x1xi1> to vector<128x1xi1>
    %626 = vector.broadcast %625 : vector<128x1xi1> to vector<128x128xi1>
    %627 = vector.broadcast %cst_108 : f32 to vector<128x128xf32>
    %628 = arith.select %626, %624, %627 : vector<128x128xi1>, vector<128x128xf32>
    %629 = arith.addf %620, %628 : vector<128x128xf32>
    %630 = vector.extract_strided_slice %614 {offsets = [1, 0], sizes = [1, 128], strides = [1, 1]} : vector<6x128xf32> to vector<1x128xf32>
    %c1_i32_109 = arith.constant 1 : i32
    %631 = tpu.dynamic_rotate %612 by %c1_i32_109 dim 0 : vector<128x128xf32>, i32 -> vector<128x128xf32>
    %632 = vector.broadcast %630 : vector<1x128xf32> to vector<128x128xf32>
    %633 = arith.mulf %632, %631 : vector<128x128xf32>
    %cst_110 = arith.constant 0.000000e+00 : f32
    %634 = vector.shape_cast %34 : vector<128x1xi1> to vector<128x1xi1>
    %635 = vector.broadcast %634 : vector<128x1xi1> to vector<128x128xi1>
    %636 = vector.broadcast %cst_110 : f32 to vector<128x128xf32>
    %637 = arith.select %635, %633, %636 : vector<128x128xi1>, vector<128x128xf32>
    %638 = arith.addf %629, %637 : vector<128x128xf32>
    %639 = vector.extract_strided_slice %614 {offsets = [3, 0], sizes = [1, 128], strides = [1, 1]} : vector<6x128xf32> to vector<1x128xf32>
    %c127_i32_111 = arith.constant 127 : i32
    %640 = tpu.dynamic_rotate %612 by %c127_i32_111 dim 0 : vector<128x128xf32>, i32 -> vector<128x128xf32>
    %641 = vector.broadcast %639 : vector<1x128xf32> to vector<128x128xf32>
    %642 = arith.mulf %641, %640 : vector<128x128xf32>
    %cst_112 = arith.constant 0.000000e+00 : f32
    %643 = vector.shape_cast %43 : vector<128x1xi1> to vector<128x1xi1>
    %644 = vector.broadcast %643 : vector<128x1xi1> to vector<128x128xi1>
    %645 = vector.broadcast %cst_112 : f32 to vector<128x128xf32>
    %646 = arith.select %644, %642, %645 : vector<128x128xi1>, vector<128x128xf32>
    %647 = arith.addf %638, %646 : vector<128x128xf32>
    %648 = vector.extract_strided_slice %614 {offsets = [4, 0], sizes = [1, 128], strides = [1, 1]} : vector<6x128xf32> to vector<1x128xf32>
    %c126_i32_113 = arith.constant 126 : i32
    %649 = tpu.dynamic_rotate %612 by %c126_i32_113 dim 0 : vector<128x128xf32>, i32 -> vector<128x128xf32>
    %650 = vector.broadcast %648 : vector<1x128xf32> to vector<128x128xf32>
    %651 = arith.mulf %650, %649 : vector<128x128xf32>
    %cst_114 = arith.constant 0.000000e+00 : f32
    %652 = vector.shape_cast %52 : vector<128x1xi1> to vector<128x1xi1>
    %653 = vector.broadcast %652 : vector<128x1xi1> to vector<128x128xi1>
    %654 = vector.broadcast %cst_114 : f32 to vector<128x128xf32>
    %655 = arith.select %653, %651, %654 : vector<128x128xi1>, vector<128x128xf32>
    %656 = arith.addf %647, %655 : vector<128x128xf32>
    %cst_115 = arith.constant -8.000000e+00 : f32
    %cst_116 = arith.constant 8.000000e+00 : f32
    %657 = vector.broadcast %cst_115 : f32 to vector<128x128xf32>
    %658 = arith.maximumf %657, %656 : vector<128x128xf32>
    %659 = vector.broadcast %cst_116 : f32 to vector<128x128xf32>
    %660 = arith.minimumf %659, %658 : vector<128x128xf32>
    %c3_117 = arith.constant 3 : index
    %c0_118 = arith.constant 0 : index
    %c0_119 = arith.constant 0 : index
    %661 = vector.load %arg6[%c3_117, %c0_118, %c0_119] : memref<4x128x128xf32, #tpu.memory_space<vmem>>, vector<1x128x128xf32>
    %662 = vector.shape_cast %661 : vector<1x128x128xf32> to vector<128x128xf32>
    %c3_120 = arith.constant 3 : index
    %c0_121 = arith.constant 0 : index
    %c0_122 = arith.constant 0 : index
    %663 = vector.load %arg7[%c3_120, %c0_121, %c0_122] : memref<4x1x128xf32, #tpu.memory_space<vmem>>, vector<1x1x128xf32>
    %664 = vector.shape_cast %663 : vector<1x1x128xf32> to vector<1x128xf32>
    %cst_123 = arith.constant dense<0.000000e+00> : vector<128x128xf32>
    %665 = tpu.matmul %660, %662, %cst_123 {dimension_numbers = #tpu.dot_dimension_numbers<[1], [0], [0], [1], [0, 0, 1, 1], [], []>} : vector<128x128xf32>, vector<128x128xf32>, vector<128x128xf32> -> vector<128x128xf32>
    %666 = vector.broadcast %664 : vector<1x128xf32> to vector<128x128xf32>
    %667 = arith.addf %665, %666 : vector<128x128xf32>
    %cst_124 = arith.constant 0.000000e+00 : f32
    %668 = vector.broadcast %cst_124 : f32 to vector<128x128xf32>
    %669 = arith.maximumf %667, %668 : vector<128x128xf32>
    %670 = arith.addf %365, %669 : vector<128x128xf32>
    %c0_125 = arith.constant 0 : index
    %c0_126 = arith.constant 0 : index
    %671 = vector.load %arg8[%c0_125, %c0_126] : memref<128x128xf32, #tpu.memory_space<vmem>>, vector<128x128xf32>
    tpu.vector_store %arg8[%c0_125, %c0_126], %670 {strides = array<i32>} : memref<128x128xf32, #tpu.memory_space<vmem>>, vector<128x128xf32>,
    return
  }
  func.func @transform_0(%arg0: i32) -> (i32, i32) {
    %c0_i32 = arith.constant 0 : i32
    %c0_i32_0 = arith.constant 0 : i32
    return %arg0, %c0_i32 : i32, i32
  }
  func.func @transform_1(%arg0: i32) -> (i32, i32) {
    %c0_i32 = arith.constant 0 : i32
    %c0_i32_0 = arith.constant 0 : i32
    %c0_i32_1 = arith.constant 0 : i32
    return %c0_i32, %c0_i32_0 : i32, i32
  }
  func.func @transform_2(%arg0: i32) -> (i32, i32) {
    %c0_i32 = arith.constant 0 : i32
    %c0_i32_0 = arith.constant 0 : i32
    %c0_i32_1 = arith.constant 0 : i32
    return %c0_i32, %c0_i32_0 : i32, i32
  }
  func.func @transform_3(%arg0: i32) -> (i32, i32, i32) {
    %c0_i32 = arith.constant 0 : i32
    %c0_i32_0 = arith.constant 0 : i32
    %c0_i32_1 = arith.constant 0 : i32
    %c0_i32_2 = arith.constant 0 : i32
    return %c0_i32, %c0_i32_0, %c0_i32_1 : i32, i32, i32
  }
  func.func @transform_4(%arg0: i32) -> (i32, i32, i32) {
    %c0_i32 = arith.constant 0 : i32
    %c0_i32_0 = arith.constant 0 : i32
    %c0_i32_1 = arith.constant 0 : i32
    %c0_i32_2 = arith.constant 0 : i32
    return %c0_i32, %c0_i32_0, %c0_i32_1 : i32, i32, i32
  }
  func.func @transform_5(%arg0: i32) -> (i32, i32, i32) {
    %c0_i32 = arith.constant 0 : i32
    %c0_i32_0 = arith.constant 0 : i32
    %c0_i32_1 = arith.constant 0 : i32
    %c0_i32_2 = arith.constant 0 : i32
    return %c0_i32, %c0_i32_0, %c0_i32_1 : i32, i32, i32
  }
  func.func @transform_6(%arg0: i32) -> (i32, i32, i32) {
    %c0_i32 = arith.constant 0 : i32
    %c0_i32_0 = arith.constant 0 : i32
    %c0_i32_1 = arith.constant 0 : i32
    %c0_i32_2 = arith.constant 0 : i32
    return %c0_i32, %c0_i32_0, %c0_i32_1 : i32, i32, i32
  }
  func.func @transform_7(%arg0: i32) -> (i32, i32) {
    %c0_i32 = arith.constant 0 : i32
    %c0_i32_0 = arith.constant 0 : i32
    return %arg0, %c0_i32 : i32, i32
  }
}

</mosaic_0001>

<llo_original>
// kernel: bb_forward.1
$region0: #{bb_forward.1}
  #allocation0 [shape = 'u32[]', space=smem, size = 0x4, offset = 0x4, fixed_abs, tag = 'smem constant byte address 0x4 - core index']
  #allocation1 [shape = 'u32[144,128]{1,0:T(1,128)}', space=vmem, size = 0x12000, scoped, tag = 'internal scratch']
  %s0 = inlined_call_operand.vmem [shape: f32[256,128], index: 0, kind: input, shape index: {}]
  %s1 = inlined_call_operand.vmem [shape: f32[128,128], index: 1, kind: input, shape index: {}]
  %s2 = inlined_call_operand.vmem [shape: f32[1,128], index: 2, kind: input, shape index: {}]
  %s3 = inlined_call_operand.vmem [shape: f32[4,5,128], index: 3, kind: input, shape index: {}]
  %s4 = inlined_call_operand.vmem [shape: f32[4,6,128], index: 4, kind: input, shape index: {}]
  %s5 = inlined_call_operand.vmem [shape: f32[4,128,128], index: 5, kind: input, shape index: {}]
  %s6 = inlined_call_operand.vmem [shape: f32[4,1,128], index: 6, kind: input, shape index: {}]
  %s7 = inlined_call_operand.vmem [shape: f32[256,128], index: 7, kind: output, shape index: {}]
  %s8 = sld [smem:[#allocation0]]
  $region61: #{bb_forward.1} parent=0
    _
  %s10 = ssub.s32 1, %s8
  %s11 = scalar_select 0, %s10, %s8
  loop: start=0, step=1, limit=4
  $region2: #{bb_forward.1} parent=0 // loop_pre_header
    _
  $region3: #{bb_forward.1} parent=0 // loop_header
    %s13 = sphi 0, %s17
    %p14 = scmp.ge.s32.totalorder %s13, 4
    %s23 = sphi 0, %s25
    %s26 = sphi 0, %s23
    %s27 = sphi 0, %s26
    %s43 = sphi 0, %s27
    %s47 = sphi 0, %s47
    %s49 = sphi 0, %s47
    %s50 = sphi 0, %s49
    %s64 = sphi 0, %s50
    %s68 = sphi 0, %s68
    %s70 = sphi 0, %s68
    %s71 = sphi 0, %s70
    %s85 = sphi 0, %s71
    %s89 = sphi 0, %s89
    %s91 = sphi 0, %s89
    %s92 = sphi 0, %s91
    %s106 = sphi 0, %s92
    %s110 = sphi 0, %s110
    %s112 = sphi 0, %s110
    %s113 = sphi 0, %s112
    %s127 = sphi 0, %s113
    %s131 = sphi 0, %s131
    %s133 = sphi 0, %s131
    %s134 = sphi 0, %s133
    %s148 = sphi 0, %s134
    %s152 = sphi 0, %s152
    %s154 = sphi 0, %s152
    %s155 = sphi 0, %s154
    %s169 = sphi 0, %s155
    %s175 = sphi 0, %s177
    %s178 = sphi 0, %s175
    %s179 = sphi 0, %s178
    %s195 = sphi 0, %s179
  $region4: #{bb_forward.1} parent=0 // loop_header_branch
    %16 = sbr.rel (%p14) target = $region8
  $region5: #{bb_forward.1} parent=0 // loop_body
    %s18 = ssub.s32 %s13, 1
    %s19 = ssub.s32 %s13, 2
    %s20 = sadd.s32 %s13, 1
    %s21 = ssub.s32 %s13, %s20
    %p22 = scmp.eq.s32.totalorder %s21, 0
    %s24 = sadd.s32 %s23, 1
    %s25 = scalar_select %p22, %s23, %s24
    %p28 = pneg %p22
    %p29 = scmp.eq.s32.totalorder %s13, 1
    %p30 = por %p28, %p29
    %p31 = scmp.ne.s32.totalorder %s23, %s26
    %p32 = scmp.eq.s32.totalorder %s13, 0
    %p33 = por %p31, %p32
    %p34 = scmp.ne.s32.totalorder %s23, %s26
    %p35 = scmp.eq.s32.totalorder %s18, 1
    %p36 = por %p34, %p35
    %p37 = scmp.ne.s32.totalorder %s26, %s27
    %p38 = scmp.eq.s32.totalorder %s18, 0
    %p39 = por %p37, %p38
    %p40 = scmp.ne.s32.totalorder %s26, %s27
    %p41 = scmp.eq.s32.totalorder %s19, 1
    %p42 = por %p40, %p41
    %p44 = scmp.ne.s32.totalorder %s27, %s43
    %p45 = scmp.eq.s32.totalorder %s19, 0
    %p46 = por %p44, %p45
    %s48 = sadd.s32 %s47, 1
    %p51 = scmp.eq.s32.totalorder %s13, 1
    %p52 = scmp.ne.s32.totalorder %s47, %s49
    %p53 = scmp.eq.s32.totalorder %s13, 0
    %p54 = por %p52, %p53
    %p55 = scmp.ne.s32.totalorder %s47, %s49
    %p56 = scmp.eq.s32.totalorder %s18, 1
    %p57 = por %p55, %p56
    %p58 = scmp.ne.s32.totalorder %s49, %s50
    %p59 = scmp.eq.s32.totalorder %s18, 0
    %p60 = por %p58, %p59
    %p61 = scmp.ne.s32.totalorder %s49, %s50
    %p62 = scmp.eq.s32.totalorder %s19, 1
    %p63 = por %p61, %p62
    %p65 = scmp.ne.s32.totalorder %s50, %s64
    %p66 = scmp.eq.s32.totalorder %s19, 0
    %p67 = por %p65, %p66
    %s69 = sadd.s32 %s68, 1
    %p72 = scmp.eq.s32.totalorder %s13, 1
    %p73 = scmp.ne.s32.totalorder %s68, %s70
    %p74 = scmp.eq.s32.totalorder %s13, 0
    %p75 = por %p73, %p74
    %p76 = scmp.ne.s32.totalorder %s68, %s70
    %p77 = scmp.eq.s32.totalorder %s18, 1
    %p78 = por %p76, %p77
    %p79 = scmp.ne.s32.totalorder %s70, %s71
    %p80 = scmp.eq.s32.totalorder %s18, 0
    %p81 = por %p79, %p80
    %p82 = scmp.ne.s32.totalorder %s70, %s71
    %p83 = scmp.eq.s32.totalorder %s19, 1
    %p84 = por %p82, %p83
    %p86 = scmp.ne.s32.totalorder %s71, %s85
    %p87 = scmp.eq.s32.totalorder %s19, 0
    %p88 = por %p86, %p87
    %s90 = sadd.s32 %s89, 1
    %p93 = scmp.eq.s32.totalorder %s13, 1
    %p94 = scmp.ne.s32.totalorder %s89, %s91
    %p95 = scmp.eq.s32.totalorder %s13, 0
    %p96 = por %p94, %p95
    %p97 = scmp.ne.s32.totalorder %s89, %s91
    %p98 = scmp.eq.s32.totalorder %s18, 1
    %p99 = por %p97, %p98
    %p100 = scmp.ne.s32.totalorder %s91, %s92
    %p101 = scmp.eq.s32.totalorder %s18, 0
    %p102 = por %p100, %p101
    %p103 = scmp.ne.s32.totalorder %s91, %s92
    %p104 = scmp.eq.s32.totalorder %s19, 1
    %p105 = por %p103, %p104
    %p107 = scmp.ne.s32.totalorder %s92, %s106
    %p108 = scmp.eq.s32.totalorder %s19, 0
    %p109 = por %p107, %p108
    %s111 = sadd.s32 %s110, 1
    %p114 = scmp.eq.s32.totalorder %s13, 1
    %p115 = scmp.ne.s32.totalorder %s110, %s112
    %p116 = scmp.eq.s32.totalorder %s13, 0
    %p117 = por %p115, %p116
    %p118 = scmp.ne.s32.totalorder %s110, %s112
    %p119 = scmp.eq.s32.totalorder %s18, 1
    %p120 = por %p118, %p119
    %p121 = scmp.ne.s32.totalorder %s112, %s113
    %p122 = scmp.eq.s32.totalorder %s18, 0
    %p123 = por %p121, %p122
    %p124 = scmp.ne.s32.totalorder %s112, %s113
    %p125 = scmp.eq.s32.totalorder %s19, 1
    %p126 = por %p124, %p125
    %p128 = scmp.ne.s32.totalorder %s113, %s127
    %p129 = scmp.eq.s32.totalorder %s19, 0
    %p130 = por %p128, %p129
    %s132 = sadd.s32 %s131, 1
    %p135 = scmp.eq.s32.totalorder %s13, 1
    %p136 = scmp.ne.s32.totalorder %s131, %s133
    %p137 = scmp.eq.s32.totalorder %s13, 0
    %p138 = por %p136, %p137
    %p139 = scmp.ne.s32.totalorder %s131, %s133
    %p140 = scmp.eq.s32.totalorder %s18, 1
    %p141 = por %p139, %p140
    %p142 = scmp.ne.s32.totalorder %s133, %s134
    %p143 = scmp.eq.s32.totalorder %s18, 0
    %p144 = por %p142, %p143
    %p145 = scmp.ne.s32.totalorder %s133, %s134
    %p146 = scmp.eq.s32.totalorder %s19, 1
    %p147 = por %p145, %p146
    %p149 = scmp.ne.s32.totalorder %s134, %s148
    %p150 = scmp.eq.s32.totalorder %s19, 0
    %p151 = por %p149, %p150
    %s153 = sadd.s32 %s152, 1
    %p156 = scmp.eq.s32.totalorder %s13, 1
    %p157 = scmp.ne.s32.totalorder %s152, %s154
    %p158 = scmp.eq.s32.totalorder %s13, 0
    %p159 = por %p157, %p158
    %p160 = scmp.ne.s32.totalorder %s152, %s154
    %p161 = scmp.eq.s32.totalorder %s18, 1
    %p162 = por %p160, %p161
    %p163 = scmp.ne.s32.totalorder %s154, %s155
    %p164 = scmp.eq.s32.totalorder %s18, 0
    %p165 = por %p163, %p164
    %p166 = scmp.ne.s32.totalorder %s154, %s155
    %p167 = scmp.eq.s32.totalorder %s19, 1
    %p168 = por %p166, %p167
    %p170 = scmp.ne.s32.totalorder %s155, %s169
    %p171 = scmp.eq.s32.totalorder %s19, 0
    %p172 = por %p170, %p171
    %s173 = ssub.s32 %s13, %s20
    %p174 = scmp.eq.s32.totalorder %s173, 0
    %s176 = sadd.s32 %s175, 1
    %s177 = scalar_select %p174, %s175, %s176
    %p180 = pneg %p174
    %p181 = scmp.eq.s32.totalorder %s13, 1
    %p182 = por %p180, %p181
    %p183 = scmp.ne.s32.totalorder %s175, %s178
    %p184 = scmp.eq.s32.totalorder %s13, 0
    %p185 = por %p183, %p184
    %p186 = scmp.ne.s32.totalorder %s175, %s178
    %p187 = scmp.eq.s32.totalorder %s18, 1
    %p188 = por %p186, %p187
    %p189 = scmp.ne.s32.totalorder %s178, %s179
    %p190 = scmp.eq.s32.totalorder %s18, 0
    %p191 = por %p189, %p190
    %p192 = scmp.ne.s32.totalorder %s178, %s179
    %p193 = scmp.eq.s32.totalorder %s19, 1
    %p194 = por %p192, %p193
    %p196 = scmp.ne.s32.totalorder %s179, %s195
    %p197 = scmp.eq.s32.totalorder %s19, 0
    %p198 = por %p196, %p197
    %p199 = scmp.le.s32.totalorder 1, %s13
    %p200 = scmp.lt.s32.totalorder %s13, 3
    %p201 = pnand %p199, %p200
    %p202 = pneg %p201
    // Predicated region
    $region9: #{bb_forward.1} parent=5 // pred_check
      _
    $region10: #{bb_forward.1} parent=5 // pred_check_branch
      %204 = sbr.rel (%p201) target = $region12
    $region11: #{bb_forward.1} parent=5 // pred_region
      %s205 = ssub.s32 %s13, 1
      // Predicated region
      $region13: #{bb_forward.1} parent=11 // pred_check
        %p206 = pneg %p60
      $region14: #{bb_forward.1} parent=11 // pred_check_branch
        %208 = sbr.rel (%p206) target = $region16
      $region15: #{bb_forward.1} parent=11 // pred_region
        _
      $region16: #{bb_forward.1} parent=11 // pred_fallthru
        _
      // Predicated region
      $region17: #{bb_forward.1} parent=11 // pred_check
        %p209 = pneg %p81
      $region18: #{bb_forward.1} parent=11 // pred_check_branch
        %211 = sbr.rel (%p209) target = $region20
      $region19: #{bb_forward.1} parent=11 // pred_region
        _
      $region20: #{bb_forward.1} parent=11 // pred_fallthru
        _
      // Predicated region
      $region21: #{bb_forward.1} parent=11 // pred_check
        %p212 = pneg %p102
      $region22: #{bb_forward.1} parent=11 // pred_check_branch
        %214 = sbr.rel (%p212) target = $region24
      $region23: #{bb_forward.1} parent=11 // pred_region
        _
      $region24: #{bb_forward.1} parent=11 // pred_fallthru
        _
      // Predicated region
      $region25: #{bb_forward.1} parent=11 // pred_check
        %p215 = pneg %p123
      $region26: #{bb_forward.1} parent=11 // pred_check_branch
        %217 = sbr.rel (%p215) target = $region28
      $region27: #{bb_forward.1} parent=11 // pred_region
        _
      $region28: #{bb_forward.1} parent=11 // pred_fallthru
        _
      // Predicated region
      $region29: #{bb_forward.1} parent=11 // pred_check
        %p218 = pneg %p144
      $region30: #{bb_forward.1} parent=11 // pred_check_branch
        %220 = sbr.rel (%p218) target = $region32
      $region31: #{bb_forward.1} parent=11 // pred_region
        _
      $region32: #{bb_forward.1} parent=11 // pred_fallthru
        _
      // Predicated region
      $region33: #{bb_forward.1} parent=11 // pred_check
        %p221 = pneg %p165
      $region34: #{bb_forward.1} parent=11 // pred_check_branch
        %223 = sbr.rel (%p221) target = $region36
      $region35: #{bb_forward.1} parent=11 // pred_region
        _
      $region36: #{bb_forward.1} parent=11 // pred_fallthru
        _
    $region12: #{bb_forward.1} parent=5 // pred_fallthru
      _
    %p224 = scmp.lt.s32.totalorder %s13, 2
    // Predicated region
    $region37: #{bb_forward.1} parent=5 // pred_check
      %p225 = pneg %p224
    $region38: #{bb_forward.1} parent=5 // pred_check_branch
      %227 = sbr.rel (%p225) target = $region40
    $region39: #{bb_forward.1} parent=5 // pred_region
      // Predicated region
      $region41: #{bb_forward.1} parent=39 // pred_check
        %p228 = pneg %p33
      $region42: #{bb_forward.1} parent=39 // pred_check_branch
        %230 = sbr.rel (%p228) target = $region44
      $region43: #{bb_forward.1} parent=39 // pred_region
        %s231 = smul.u32 16, %s13
        %p232 = scmp.lt.s32.totalorder %s231, 31
        %s233 = scalar_select %p232, %s231, 31
        %s234 = smul.addr %s233, 8
        %s235 = scalar_lea.vmem %s0, %s234
        %s236 = smul.u32 16, %s13
      $region44: #{bb_forward.1} parent=39 // pred_fallthru
        _
    $region40: #{bb_forward.1} parent=5 // pred_fallthru
      _
    %p237 = scmp.le.s32.totalorder 1, %s13
    %p238 = scmp.lt.s32.totalorder %s13, 3
    %p239 = pnand %p237, %p238
    %p240 = pneg %p239
    // Predicated region
    $region45: #{bb_forward.1} parent=5 // pred_check
      _
    $region46: #{bb_forward.1} parent=5 // pred_check_branch
      %242 = sbr.rel (%p239) target = $region48
    $region47: #{bb_forward.1} parent=5 // pred_region
      %s243 = ssub.s32 %s13, 1
      %s244 = smul.u32 16, %s18
      %p245 = scmp.lt.s32.totalorder %s244, 31
      %s246 = scalar_select %p245, %s244, 31
      %s247 = smul.addr %s246, 8
      %s248 = scalar_lea.vmem %s0, %s247
      %p249 = pneg %p39
      %p250 = pneg %p36
      %p251 = pneg %p60
      %p252 = pneg %p57
      %p253 = pneg %p81
      %p254 = pneg %p78
      %p255 = pneg %p102
      %p256 = pneg %p99
      %p257 = pneg %p123
      %p258 = pneg %p120
      %p259 = pneg %p144
      %p260 = pneg %p141
      %p261 = pneg %p165
      %p262 = pneg %p162
      %p263 = pneg %p191
      %p264 = pneg %p188
      %s265 = smul.u32 16, %s18
      %p266 = scmp.lt.s32.totalorder %s265, 31
      %s267 = scalar_select %p266, %s265, 31
      %s268 = smul.addr %s267, 8
      %s269 = scalar_lea.vmem %s7, %s268
      %s270 = smul.u32 16, %s18
      %p271 = scmp.lt.s32.totalorder %s270, 31
      %s272 = scalar_select %p271, %s270, 31
      %s273 = smul.addr %s272, 8
      %s274 = scalar_lea.vmem %s0, %s273
      %s275 = smul.u32 16, %s18
      %s276 = smul.u32 16, %s18
      %p277 = scmp.lt.s32.totalorder %s276, 31
      %s278 = scalar_select %p277, %s276, 31
      %s279 = smul.addr %s278, 8
      %s280 = scalar_lea.vmem %s7, %s279
      %s281 = smul.u32 16, %s18
      %v282 = vlaneseq
      %v283 = vshrl.u32 %v282, 7
      %v284 = vadd.s32 %v283, 8
      %v285 = vadd.s32 %v283, 16
      %v286 = vadd.s32 %v283, 24
      %v287 = vadd.s32 %v283, 32
      %v288 = vadd.s32 %v283, 40
      %v289 = vadd.s32 %v283, 48
      %v290 = vadd.s32 %v283, 56
      %v291 = vadd.s32 %v283, 64
      %v292 = vadd.s32 %v283, 72
      %v293 = vadd.s32 %v283, 80
      %v294 = vadd.s32 %v283, 88
      %v295 = vadd.s32 %v283, 96
      %v296 = vadd.s32 %v283, 104
      %v297 = vadd.s32 %v283, 112
      %v298 = vadd.s32 %v283, 120
      %vm299 = vcmp.lt.s32.totalorder %v283, 0
      %v300 = vsub.s32 0, %v283
      %v301 = vsel %vm299, %v300, %v283
      %v302 = vshrl.u32 %v301, 4
      %v303 = vand.u32 %v301, 15
      %v304 = vsub.s32 0, %v303
      %v305 = vsel %vm299, %v304, %v303
      %vm306 = vcmp.lt.s32.totalorder %v284, 0
      %v307 = vsub.s32 0, %v284
      %v308 = vsel %vm306, %v307, %v284
      %v309 = vshrl.u32 %v308, 4
      %v310 = vand.u32 %v308, 15
      %v311 = vsub.s32 0, %v310
      %v312 = vsel %vm306, %v311, %v310
      %vm313 = vcmp.lt.s32.totalorder %v285, 0
      %v314 = vsub.s32 0, %v285
      %v315 = vsel %vm313, %v314, %v285
      %v316 = vshrl.u32 %v315, 4
      %v317 = vand.u32 %v315, 15
      %v318 = vsub.s32 0, %v317
      %v319 = vsel %vm313, %v318, %v317
      %vm320 = vcmp.lt.s32.totalorder %v286, 0
      %v321 = vsub.s32 0, %v286
      %v322 = vsel %vm320, %v321, %v286
      %v323 = vshrl.u32 %v322, 4
      %v324 = vand.u32 %v322, 15
      %v325 = vsub.s32 0, %v324
      %v326 = vsel %vm320, %v325, %v324
      %vm327 = vcmp.lt.s32.totalorder %v287, 0
      %v328 = vsub.s32 0, %v287
      %v329 = vsel %vm327, %v328, %v287
      %v330 = vshrl.u32 %v329, 4
      %v331 = vand.u32 %v329, 15
      %v332 = vsub.s32 0, %v331
      %v333 = vsel %vm327, %v332, %v331
      %vm334 = vcmp.lt.s32.totalorder %v288, 0
      %v335 = vsub.s32 0, %v288
      %v336 = vsel %vm334, %v335, %v288
      %v337 = vshrl.u32 %v336, 4
      %v338 = vand.u32 %v336, 15
      %v339 = vsub.s32 0, %v338
      %v340 = vsel %vm334, %v339, %v338
      %vm341 = vcmp.lt.s32.totalorder %v289, 0
      %v342 = vsub.s32 0, %v289
      %v343 = vsel %vm341, %v342, %v289
      %v344 = vshrl.u32 %v343, 4
      %v345 = vand.u32 %v343, 15
      %v346 = vsub.s32 0, %v345
      %v347 = vsel %vm341, %v346, %v345
      %vm348 = vcmp.lt.s32.totalorder %v290, 0
      %v349 = vsub.s32 0, %v290
      %v350 = vsel %vm348, %v349, %v290
      %v351 = vshrl.u32 %v350, 4
      %v352 = vand.u32 %v350, 15
      %v353 = vsub.s32 0, %v352
      %v354 = vsel %vm348, %v353, %v352
      %vm355 = vcmp.lt.s32.totalorder %v291, 0
      %v356 = vsub.s32 0, %v291
      %v357 = vsel %vm355, %v356, %v291
      %v358 = vshrl.u32 %v357, 4
      %v359 = vand.u32 %v357, 15
      %v360 = vsub.s32 0, %v359
      %v361 = vsel %vm355, %v360, %v359
      %vm362 = vcmp.lt.s32.totalorder %v292, 0
      %v363 = vsub.s32 0, %v292
      %v364 = vsel %vm362, %v363, %v292
      %v365 = vshrl.u32 %v364, 4
      %v366 = vand.u32 %v364, 15
      %v367 = vsub.s32 0, %v366
      %v368 = vsel %vm362, %v367, %v366
      %vm369 = vcmp.lt.s32.totalorder %v293, 0
      %v370 = vsub.s32 0, %v293
      %v371 = vsel %vm369, %v370, %v293
      %v372 = vshrl.u32 %v371, 4
      %v373 = vand.u32 %v371, 15
      %v374 = vsub.s32 0, %v373
      %v375 = vsel %vm369, %v374, %v373
      %vm376 = vcmp.lt.s32.totalorder %v294, 0
      %v377 = vsub.s32 0, %v294
      %v378 = vsel %vm376, %v377, %v294
      %v379 = vshrl.u32 %v378, 4
      %v380 = vand.u32 %v378, 15
      %v381 = vsub.s32 0, %v380
      %v382 = vsel %vm376, %v381, %v380
      %vm383 = vcmp.lt.s32.totalorder %v295, 0
      %v384 = vsub.s32 0, %v295
      %v385 = vsel %vm383, %v384, %v295
      %v386 = vshrl.u32 %v385, 4
      %v387 = vand.u32 %v385, 15
      %v388 = vsub.s32 0, %v387
      %v389 = vsel %vm383, %v388, %v387
      %vm390 = vcmp.lt.s32.totalorder %v296, 0
      %v391 = vsub.s32 0, %v296
      %v392 = vsel %vm390, %v391, %v296
      %v393 = vshrl.u32 %v392, 4
      %v394 = vand.u32 %v392, 15
      %v395 = vsub.s32 0, %v394
      %v396 = vsel %vm390, %v395, %v394
      %vm397 = vcmp.lt.s32.totalorder %v297, 0
      %v398 = vsub.s32 0, %v297
      %v399 = vsel %vm397, %v398, %v297
      %v400 = vshrl.u32 %v399, 4
      %v401 = vand.u32 %v399, 15
      %v402 = vsub.s32 0, %v401
      %v403 = vsel %vm397, %v402, %v401
      %vm404 = vcmp.lt.s32.totalorder %v298, 0
      %v405 = vsub.s32 0, %v298
      %v406 = vsel %vm404, %v405, %v298
      %v407 = vshrl.u32 %v406, 4
      %v408 = vand.u32 %v406, 15
      %v409 = vsub.s32 0, %v408
      %v410 = vsel %vm404, %v409, %v408
      %vm411 = vcmp.ne.s32.totalorder %v305, 0
      %vm412 = vcmp.ne.s32.totalorder %v312, 0
      %vm413 = vcmp.ne.s32.totalorder %v319, 0
      %vm414 = vcmp.ne.s32.totalorder %v326, 0
      %vm415 = vcmp.ne.s32.totalorder %v333, 0
      %vm416 = vcmp.ne.s32.totalorder %v340, 0
      %vm417 = vcmp.ne.s32.totalorder %v347, 0
      %vm418 = vcmp.ne.s32.totalorder %v354, 0
      %vm419 = vcmp.ne.s32.totalorder %v361, 0
      %vm420 = vcmp.ne.s32.totalorder %v368, 0
      %vm421 = vcmp.ne.s32.totalorder %v375, 0
      %vm422 = vcmp.ne.s32.totalorder %v382, 0
      %vm423 = vcmp.ne.s32.totalorder %v389, 0
      %vm424 = vcmp.ne.s32.totalorder %v396, 0
      %vm425 = vcmp.ne.s32.totalorder %v403, 0
      %vm426 = vcmp.ne.s32.totalorder %v410, 0
      %vm427 = vcmp.lt.s32.totalorder %v305, 0
      %vm428 = vcmp.lt.s32.totalorder %v312, 0
      %vm429 = vcmp.lt.s32.totalorder %v319, 0
      %vm430 = vcmp.lt.s32.totalorder %v326, 0
      %vm431 = vcmp.lt.s32.totalorder %v333, 0
      %vm432 = vcmp.lt.s32.totalorder %v340, 0
      %vm433 = vcmp.lt.s32.totalorder %v347, 0
      %vm434 = vcmp.lt.s32.totalorder %v354, 0
      %vm435 = vcmp.lt.s32.totalorder %v361, 0
      %vm436 = vcmp.lt.s32.totalorder %v368, 0
      %vm437 = vcmp.lt.s32.totalorder %v375, 0
      %vm438 = vcmp.lt.s32.totalorder %v382, 0
      %vm439 = vcmp.lt.s32.totalorder %v389, 0
      %vm440 = vcmp.lt.s32.totalorder %v396, 0
      %vm441 = vcmp.lt.s32.totalorder %v403, 0
      %vm442 = vcmp.lt.s32.totalorder %v410, 0
      %vm443 = vmand %vm427, %vm411
      %vm444 = vmand %vm428, %vm412
      %vm445 = vmand %vm429, %vm413
      %vm446 = vmand %vm430, %vm414
      %vm447 = vmand %vm431, %vm415
      %vm448 = vmand %vm432, %vm416
      %vm449 = vmand %vm433, %vm417
      %vm450 = vmand %vm434, %vm418
      %vm451 = vmand %vm435, %vm419
      %vm452 = vmand %vm436, %vm420
      %vm453 = vmand %vm437, %vm421
      %vm454 = vmand %vm438, %vm422
      %vm455 = vmand %vm439, %vm423
      %vm456 = vmand %vm440, %vm424
      %vm457 = vmand %vm441, %vm425
      %vm458 = vmand %vm442, %vm426
      %v459 = vadd.s32 %v305, 16
      %v460 = vadd.s32 %v312, 16
      %v461 = vadd.s32 %v319, 16
      %v462 = vadd.s32 %v326, 16
      %v463 = vadd.s32 %v333, 16
      %v464 = vadd.s32 %v340, 16
      %v465 = vadd.s32 %v347, 16
      %v466 = vadd.s32 %v354, 16
      %v467 = vadd.s32 %v361, 16
      %v468 = vadd.s32 %v368, 16
      %v469 = vadd.s32 %v375, 16
      %v470 = vadd.s32 %v382, 16
      %v471 = vadd.s32 %v389, 16
      %v472 = vadd.s32 %v396, 16
      %v473 = vadd.s32 %v403, 16
      %v474 = vadd.s32 %v410, 16
      %v475 = vsel %vm443, %v459, %v305
      %v476 = vsel %vm444, %v460, %v312
      %v477 = vsel %vm445, %v461, %v319
      %v478 = vsel %vm446, %v462, %v326
      %v479 = vsel %vm447, %v463, %v333
      %v480 = vsel %vm448, %v464, %v340
      %v481 = vsel %vm449, %v465, %v347
      %v482 = vsel %vm450, %v466, %v354
      %v483 = vsel %vm451, %v467, %v361
      %v484 = vsel %vm452, %v468, %v368
      %v485 = vsel %vm453, %v469, %v375
      %v486 = vsel %vm454, %v470, %v382
      %v487 = vsel %vm455, %v471, %v389
      %v488 = vsel %vm456, %v472, %v396
      %v489 = vsel %vm457, %v473, %v403
      %v490 = vsel %vm458, %v474, %v410
      %v491 = vadd.s32 %v475, 4294967294
      %v492 = vadd.s32 %v476, 4294967294
      %v493 = vadd.s32 %v477, 4294967294
      %v494 = vadd.s32 %v478, 4294967294
      %v495 = vadd.s32 %v479, 4294967294
      %v496 = vadd.s32 %v480, 4294967294
      %v497 = vadd.s32 %v481, 4294967294
      %v498 = vadd.s32 %v482, 4294967294
      %v499 = vadd.s32 %v483, 4294967294
      %v500 = vadd.s32 %v484, 4294967294
      %v501 = vadd.s32 %v485, 4294967294
      %v502 = vadd.s32 %v486, 4294967294
      %v503 = vadd.s32 %v487, 4294967294
      %v504 = vadd.s32 %v488, 4294967294
      %v505 = vadd.s32 %v489, 4294967294
      %v506 = vadd.s32 %v490, 4294967294
      %vm507 = vcmp.ge.s32.totalorder %v491, 0
      %vm508 = vcmp.ge.s32.totalorder %v492, 0
      %vm509 = vcmp.ge.s32.totalorder %v493, 0
      %vm510 = vcmp.ge.s32.totalorder %v494, 0
      %vm511 = vcmp.ge.s32.totalorder %v495, 0
      %vm512 = vcmp.ge.s32.totalorder %v496, 0
      %vm513 = vcmp.ge.s32.totalorder %v497, 0
      %vm514 = vcmp.ge.s32.totalorder %v498, 0
      %vm515 = vcmp.ge.s32.totalorder %v499, 0
      %vm516 = vcmp.ge.s32.totalorder %v500, 0
      %vm517 = vcmp.ge.s32.totalorder %v501, 0
      %vm518 = vcmp.ge.s32.totalorder %v502, 0
      %vm519 = vcmp.ge.s32.totalorder %v503, 0
      %vm520 = vcmp.ge.s32.totalorder %v504, 0
      %vm521 = vcmp.ge.s32.totalorder %v505, 0
      %vm522 = vcmp.ge.s32.totalorder %v506, 0
      %vm523 = vcmp.lt.s32.totalorder %v491, 16
      %vm524 = vcmp.lt.s32.totalorder %v492, 16
      %vm525 = vcmp.lt.s32.totalorder %v493, 16
      %vm526 = vcmp.lt.s32.totalorder %v494, 16
      %vm527 = vcmp.lt.s32.totalorder %v495, 16
      %vm528 = vcmp.lt.s32.totalorder %v496, 16
      %vm529 = vcmp.lt.s32.totalorder %v497, 16
      %vm530 = vcmp.lt.s32.totalorder %v498, 16
      %vm531 = vcmp.lt.s32.totalorder %v499, 16
      %vm532 = vcmp.lt.s32.totalorder %v500, 16
      %vm533 = vcmp.lt.s32.totalorder %v501, 16
      %vm534 = vcmp.lt.s32.totalorder %v502, 16
      %vm535 = vcmp.lt.s32.totalorder %v503, 16
      %vm536 = vcmp.lt.s32.totalorder %v504, 16
      %vm537 = vcmp.lt.s32.totalorder %v505, 16
      %vm538 = vcmp.lt.s32.totalorder %v506, 16
      %vm539 = vmand %vm507, %vm523
      %vm540 = vmand %vm508, %vm524
      %vm541 = vmand %vm509, %vm525
      %vm542 = vmand %vm510, %vm526
      %vm543 = vmand %vm511, %vm527
      %vm544 = vmand %vm512, %vm528
      %vm545 = vmand %vm513, %vm529
      %vm546 = vmand %vm514, %vm530
      %vm547 = vmand %vm515, %vm531
      %vm548 = vmand %vm516, %vm532
      %vm549 = vmand %vm517, %vm533
      %vm550 = vmand %vm518, %vm534
      %vm551 = vmand %vm519, %vm535
      %vm552 = vmand %vm520, %vm536
      %vm553 = vmand %vm521, %vm537
      %vm554 = vmand %vm522, %vm538
      %v555 = vadd.s32 %v475, 4294967295
      %v556 = vadd.s32 %v476, 4294967295
      %v557 = vadd.s32 %v477, 4294967295
      %v558 = vadd.s32 %v478, 4294967295
      %v559 = vadd.s32 %v479, 4294967295
      %v560 = vadd.s32 %v480, 4294967295
      %v561 = vadd.s32 %v481, 4294967295
      %v562 = vadd.s32 %v482, 4294967295
      %v563 = vadd.s32 %v483, 4294967295
      %v564 = vadd.s32 %v484, 4294967295
      %v565 = vadd.s32 %v485, 4294967295
      %v566 = vadd.s32 %v486, 4294967295
      %v567 = vadd.s32 %v487, 4294967295
      %v568 = vadd.s32 %v488, 4294967295
      %v569 = vadd.s32 %v489, 4294967295
      %v570 = vadd.s32 %v490, 4294967295
      %vm571 = vcmp.ge.s32.totalorder %v555, 0
      %vm572 = vcmp.ge.s32.totalorder %v556, 0
      %vm573 = vcmp.ge.s32.totalorder %v557, 0
      %vm574 = vcmp.ge.s32.totalorder %v558, 0
      %vm575 = vcmp.ge.s32.totalorder %v559, 0
      %vm576 = vcmp.ge.s32.totalorder %v560, 0
      %vm577 = vcmp.ge.s32.totalorder %v561, 0
      %vm578 = vcmp.ge.s32.totalorder %v562, 0
      %vm579 = vcmp.ge.s32.totalorder %v563, 0
      %vm580 = vcmp.ge.s32.totalorder %v564, 0
      %vm581 = vcmp.ge.s32.totalorder %v565, 0
      %vm582 = vcmp.ge.s32.totalorder %v566, 0
      %vm583 = vcmp.ge.s32.totalorder %v567, 0
      %vm584 = vcmp.ge.s32.totalorder %v568, 0
      %vm585 = vcmp.ge.s32.totalorder %v569, 0
      %vm586 = vcmp.ge.s32.totalorder %v570, 0
      %vm587 = vcmp.lt.s32.totalorder %v555, 16
      %vm588 = vcmp.lt.s32.totalorder %v556, 16
      %vm589 = vcmp.lt.s32.totalorder %v557, 16
      %vm590 = vcmp.lt.s32.totalorder %v558, 16
      %vm591 = vcmp.lt.s32.totalorder %v559, 16
      %vm592 = vcmp.lt.s32.totalorder %v560, 16
      %vm593 = vcmp.lt.s32.totalorder %v561, 16
      %vm594 = vcmp.lt.s32.totalorder %v562, 16
      %vm595 = vcmp.lt.s32.totalorder %v563, 16
      %vm596 = vcmp.lt.s32.totalorder %v564, 16
      %vm597 = vcmp.lt.s32.totalorder %v565, 16
      %vm598 = vcmp.lt.s32.totalorder %v566, 16
      %vm599 = vcmp.lt.s32.totalorder %v567, 16
      %vm600 = vcmp.lt.s32.totalorder %v568, 16
      %vm601 = vcmp.lt.s32.totalorder %v569, 16
      %vm602 = vcmp.lt.s32.totalorder %v570, 16
      %vm603 = vmand %vm571, %vm587
      %vm604 = vmand %vm572, %vm588
      %vm605 = vmand %vm573, %vm589
      %vm606 = vmand %vm574, %vm590
      %vm607 = vmand %vm575, %vm591
      %vm608 = vmand %vm576, %vm592
      %vm609 = vmand %vm577, %vm593
      %vm610 = vmand %vm578, %vm594
      %vm611 = vmand %vm579, %vm595
      %vm612 = vmand %vm580, %vm596
      %vm613 = vmand %vm581, %vm597
      %vm614 = vmand %vm582, %vm598
      %vm615 = vmand %vm583, %vm599
      %vm616 = vmand %vm584, %vm600
      %vm617 = vmand %vm585, %vm601
      %vm618 = vmand %vm586, %vm602
      %v619 = vadd.s32 %v475, 1
      %v620 = vadd.s32 %v476, 1
      %v621 = vadd.s32 %v477, 1
      %v622 = vadd.s32 %v478, 1
      %v623 = vadd.s32 %v479, 1
      %v624 = vadd.s32 %v480, 1
      %v625 = vadd.s32 %v481, 1
      %v626 = vadd.s32 %v482, 1
      %v627 = vadd.s32 %v483, 1
      %v628 = vadd.s32 %v484, 1
      %v629 = vadd.s32 %v485, 1
      %v630 = vadd.s32 %v486, 1
      %v631 = vadd.s32 %v487, 1
      %v632 = vadd.s32 %v488, 1
      %v633 = vadd.s32 %v489, 1
      %v634 = vadd.s32 %v490, 1
      %vm635 = vcmp.ge.s32.totalorder %v619, 0
      %vm636 = vcmp.ge.s32.totalorder %v620, 0
      %vm637 = vcmp.ge.s32.totalorder %v621, 0
      %vm638 = vcmp.ge.s32.totalorder %v622, 0
      %vm639 = vcmp.ge.s32.totalorder %v623, 0
      %vm640 = vcmp.ge.s32.totalorder %v624, 0
      %vm641 = vcmp.ge.s32.totalorder %v625, 0
      %vm642 = vcmp.ge.s32.totalorder %v626, 0
      %vm643 = vcmp.ge.s32.totalorder %v627, 0
      %vm644 = vcmp.ge.s32.totalorder %v628, 0
      %vm645 = vcmp.ge.s32.totalorder %v629, 0
      %vm646 = vcmp.ge.s32.totalorder %v630, 0
      %vm647 = vcmp.ge.s32.totalorder %v631, 0
      %vm648 = vcmp.ge.s32.totalorder %v632, 0
      %vm649 = vcmp.ge.s32.totalorder %v633, 0
      %vm650 = vcmp.ge.s32.totalorder %v634, 0
      %vm651 = vcmp.lt.s32.totalorder %v619, 16
      %vm652 = vcmp.lt.s32.totalorder %v620, 16
      %vm653 = vcmp.lt.s32.totalorder %v621, 16
      %vm654 = vcmp.lt.s32.totalorder %v622, 16
      %vm655 = vcmp.lt.s32.totalorder %v623, 16
      %vm656 = vcmp.lt.s32.totalorder %v624, 16
      %vm657 = vcmp.lt.s32.totalorder %v625, 16
      %vm658 = vcmp.lt.s32.totalorder %v626, 16
      %vm659 = vcmp.lt.s32.totalorder %v627, 16
      %vm660 = vcmp.lt.s32.totalorder %v628, 16
      %vm661 = vcmp.lt.s32.totalorder %v629, 16
      %vm662 = vcmp.lt.s32.totalorder %v630, 16
      %vm663 = vcmp.lt.s32.totalorder %v631, 16
      %vm664 = vcmp.lt.s32.totalorder %v632, 16
      %vm665 = vcmp.lt.s32.totalorder %v633, 16
      %vm666 = vcmp.lt.s32.totalorder %v634, 16
      %vm667 = vmand %vm635, %vm651
      %vm668 = vmand %vm636, %vm652
      %vm669 = vmand %vm637, %vm653
      %vm670 = vmand %vm638, %vm654
      %vm671 = vmand %vm639, %vm655
      %vm672 = vmand %vm640, %vm656
      %vm673 = vmand %vm641, %vm657
      %vm674 = vmand %vm642, %vm658
      %vm675 = vmand %vm643, %vm659
      %vm676 = vmand %vm644, %vm660
      %vm677 = vmand %vm645, %vm661
      %vm678 = vmand %vm646, %vm662
      %vm679 = vmand %vm647, %vm663
      %vm680 = vmand %vm648, %vm664
      %vm681 = vmand %vm649, %vm665
      %vm682 = vmand %vm650, %vm666
      %v683 = vadd.s32 %v475, 2
      %v684 = vadd.s32 %v476, 2
      %v685 = vadd.s32 %v477, 2
      %v686 = vadd.s32 %v478, 2
      %v687 = vadd.s32 %v479, 2
      %v688 = vadd.s32 %v480, 2
      %v689 = vadd.s32 %v481, 2
      %v690 = vadd.s32 %v482, 2
      %v691 = vadd.s32 %v483, 2
      %v692 = vadd.s32 %v484, 2
      %v693 = vadd.s32 %v485, 2
      %v694 = vadd.s32 %v486, 2
      %v695 = vadd.s32 %v487, 2
      %v696 = vadd.s32 %v488, 2
      %v697 = vadd.s32 %v489, 2
      %v698 = vadd.s32 %v490, 2
      %vm699 = vcmp.ge.s32.totalorder %v683, 0
      %vm700 = vcmp.ge.s32.totalorder %v684, 0
      %vm701 = vcmp.ge.s32.totalorder %v685, 0
      %vm702 = vcmp.ge.s32.totalorder %v686, 0
      %vm703 = vcmp.ge.s32.totalorder %v687, 0
      %vm704 = vcmp.ge.s32.totalorder %v688, 0
      %vm705 = vcmp.ge.s32.totalorder %v689, 0
      %vm706 = vcmp.ge.s32.totalorder %v690, 0
      %vm707 = vcmp.ge.s32.totalorder %v691, 0
      %vm708 = vcmp.ge.s32.totalorder %v692, 0
      %vm709 = vcmp.ge.s32.totalorder %v693, 0
      %vm710 = vcmp.ge.s32.totalorder %v694, 0
      %vm711 = vcmp.ge.s32.totalorder %v695, 0
      %vm712 = vcmp.ge.s32.totalorder %v696, 0
      %vm713 = vcmp.ge.s32.totalorder %v697, 0
      %vm714 = vcmp.ge.s32.totalorder %v698, 0
      %vm715 = vcmp.lt.s32.totalorder %v683, 16
      %vm716 = vcmp.lt.s32.totalorder %v684, 16
      %vm717 = vcmp.lt.s32.totalorder %v685, 16
      %vm718 = vcmp.lt.s32.totalorder %v686, 16
      %vm719 = vcmp.lt.s32.totalorder %v687, 16
      %vm720 = vcmp.lt.s32.totalorder %v688, 16
      %vm721 = vcmp.lt.s32.totalorder %v689, 16
      %vm722 = vcmp.lt.s32.totalorder %v690, 16
      %vm723 = vcmp.lt.s32.totalorder %v691, 16
      %vm724 = vcmp.lt.s32.totalorder %v692, 16
      %vm725 = vcmp.lt.s32.totalorder %v693, 16
      %vm726 = vcmp.lt.s32.totalorder %v694, 16
      %vm727 = vcmp.lt.s32.totalorder %v695, 16
      %vm728 = vcmp.lt.s32.totalorder %v696, 16
      %vm729 = vcmp.lt.s32.totalorder %v697, 16
      %vm730 = vcmp.lt.s32.totalorder %v698, 16
      %vm731 = vmand %vm699, %vm715
      %vm732 = vmand %vm700, %vm716
      %vm733 = vmand %vm701, %vm717
      %vm734 = vmand %vm702, %vm718
      %vm735 = vmand %vm703, %vm719
      %vm736 = vmand %vm704, %vm720
      %vm737 = vmand %vm705, %vm721
      %vm738 = vmand %vm706, %vm722
      %vm739 = vmand %vm707, %vm723
      %vm740 = vmand %vm708, %vm724
      %vm741 = vmand %vm709, %vm725
      %vm742 = vmand %vm710, %vm726
      %vm743 = vmand %vm711, %vm727
      %vm744 = vmand %vm712, %vm728
      %vm745 = vmand %vm713, %vm729
      %vm746 = vmand %vm714, %vm730
      %v747 = vld [vmem:[%s274] sm:$0xff]
      %v748 = vld [vmem:[%s274 + $0x8] sm:$0xff]
      %v749 = vld [vmem:[%s274 + $0x10] sm:$0xff]
      %v750 = vld [vmem:[%s274 + $0x18] sm:$0xff]
      %v751 = vld [vmem:[%s274 + $0x20] sm:$0xff]
      %v752 = vld [vmem:[%s274 + $0x28] sm:$0xff]
      %v753 = vld [vmem:[%s274 + $0x30] sm:$0xff]
      %v754 = vld [vmem:[%s274 + $0x38] sm:$0xff]
      %v755 = vld [vmem:[%s274 + $0x40] sm:$0xff]
      %v756 = vld [vmem:[%s274 + $0x48] sm:$0xff]
      %v757 = vld [vmem:[%s274 + $0x50] sm:$0xff]
      %v758 = vld [vmem:[%s274 + $0x58] sm:$0xff]
      %v759 = vld [vmem:[%s274 + $0x60] sm:$0xff]
      %v760 = vld [vmem:[%s274 + $0x68] sm:$0xff]
      %v761 = vld [vmem:[%s274 + $0x70] sm:$0xff]
      %v762 = vld [vmem:[%s274 + $0x78] sm:$0xff]
      %v763 = vld [vmem:[%s1] sm:$0xff]
      %v764 = vld [vmem:[%s1 + $0x8] sm:$0xff]
      %v765 = vld [vmem:[%s1 + $0x10] sm:$0xff]
      %v766 = vld [vmem:[%s1 + $0x18] sm:$0xff]
      %v767 = vld [vmem:[%s1 + $0x20] sm:$0xff]
      %v768 = vld [vmem:[%s1 + $0x28] sm:$0xff]
      %v769 = vld [vmem:[%s1 + $0x30] sm:$0xff]
      %v770 = vld [vmem:[%s1 + $0x38] sm:$0xff]
      %v771 = vld [vmem:[%s1 + $0x40] sm:$0xff]
      %v772 = vld [vmem:[%s1 + $0x48] sm:$0xff]
      %v773 = vld [vmem:[%s1 + $0x50] sm:$0xff]
      %v774 = vld [vmem:[%s1 + $0x58] sm:$0xff]
      %v775 = vld [vmem:[%s1 + $0x60] sm:$0xff]
      %v776 = vld [vmem:[%s1 + $0x68] sm:$0xff]
      %v777 = vld [vmem:[%s1 + $0x70] sm:$0xff]
      %v778 = vld [vmem:[%s1 + $0x78] sm:$0xff]
      %v779 = vld [vmem:[%s2] sm:$0x1]
      %v781 = vlaneseq
      %v782 = vshrl.u32 %v781, 7
      %v783 = vsub.s32 0, %v782
      %v784 = vrot.slane %v779, %v783
      %786 = vmatprep.subr.mxu0 0.0
      %787 = vmatpush1.msra.mxu0 %v778
      %788 = vmatprep.subr.mxu0 0.0
      %789 = vmatpush1.msra.mxu0 %v777
      %790 = vmatprep.subr.mxu0 0.0
      %791 = vmatpush1.msra.mxu0 %v776
      %792 = vmatprep.subr.mxu0 0.0
      %793 = vmatpush1.msra.mxu0 %v775
      %794 = vmatprep.subr.mxu0 0.0
      %795 = vmatpush1.msra.mxu0 %v774
      %796 = vmatprep.subr.mxu0 0.0
      %797 = vmatpush1.msra.mxu0 %v773
      %798 = vmatprep.subr.mxu0 0.0
      %799 = vmatpush1.msra.mxu0 %v772
      %800 = vmatprep.subr.mxu0 0.0
      %801 = vmatpush1.msra.mxu0 %v771
      %802 = vmatprep.subr.mxu0 0.0
      %803 = vmatpush1.msra.mxu0 %v770
      %804 = vmatprep.subr.mxu0 0.0
      %805 = vmatpush1.msra.mxu0 %v769
      %806 = vmatprep.subr.mxu0 0.0
      %807 = vmatpush1.msra.mxu0 %v768
      %808 = vmatprep.subr.mxu0 0.0
      %809 = vmatpush1.msra.mxu0 %v767
      %810 = vmatprep.subr.mxu0 0.0
      %811 = vmatpush1.msra.mxu0 %v766
      %812 = vmatprep.subr.mxu0 0.0
      %813 = vmatpush1.msra.mxu0 %v765
      %814 = vmatprep.subr.mxu0 0.0
      %815 = vmatpush1.msra.mxu0 %v764
      %816 = vmatprep.subr.mxu0 0.0
      %817 = vmatpush1.msra.mxu0 %v763
      %818 = vmatprep.subr.mxu0 0.0
      %819 = vmatpush2.msra.mxu0 0.0
      %820 = vmatprep.subr.mxu0 0.0
      %821 = vmatpush2.msra.mxu0 0.0
      %822 = vmatprep.subr.mxu0 0.0
      %823 = vmatpush2.msra.mxu0 0.0
      %824 = vmatprep.subr.mxu0 0.0
      %825 = vmatpush2.msra.mxu0 0.0
      %826 = vmatprep.subr.mxu0 0.0
      %827 = vmatpush2.msra.mxu0 0.0
      %828 = vmatprep.subr.mxu0 0.0
      %829 = vmatpush2.msra.mxu0 0.0
      %830 = vmatprep.subr.mxu0 0.0
      %831 = vmatpush2.msra.mxu0 0.0
      %832 = vmatprep.subr.mxu0 0.0
      %833 = vmatpush2.msra.mxu0 0.0
      %834 = vmatprep.subr.mxu0 0.0
      %835 = vmatpush2.msra.mxu0 0.0
      %836 = vmatprep.subr.mxu0 0.0
      %837 = vmatpush2.msra.mxu0 0.0
      %838 = vmatprep.subr.mxu0 0.0
      %839 = vmatpush2.msra.mxu0 0.0
      %840 = vmatprep.subr.mxu0 0.0
      %841 = vmatpush2.msra.mxu0 0.0
      %842 = vmatprep.subr.mxu0 0.0
      %843 = vmatpush2.msra.mxu0 0.0
      %844 = vmatprep.subr.mxu0 0.0
      %845 = vmatpush2.msra.mxu0 0.0
      %846 = vmatprep.subr.mxu0 0.0
      %847 = vmatpush2.msra.mxu0 0.0
      %848 = vmatprep.subr.mxu0 0.0
      %849 = vmatpush2.msra.mxu0 0.0
      %850 = vmatprep.mubr.f32.mxu0 0.0
      %851 = vmatmul.mubr.f32.gmra.mxu0 %v747
      %v852 = vpop.f32.mrf.mxu0
      %v853 = vadd.f32 %v784, %v852
      %v854 = vpop.f32.mrf.mxu0
      %855 = vmatprep.mubr.f32.mxu0 0.0
      %856 = vmatmul.mubr.f32.gmra.mxu0 %v748
      %v857 = vpop.f32.mrf.mxu0
      %v858 = vadd.f32 %v784, %v857
      %v859 = vpop.f32.mrf.mxu0
      %860 = vmatprep.mubr.f32.mxu0 0.0
      %861 = vmatmul.mubr.f32.gmra.mxu0 %v749
      %v862 = vpop.f32.mrf.mxu0
      %v863 = vadd.f32 %v784, %v862
      %v864 = vpop.f32.mrf.mxu0
      %865 = vmatprep.mubr.f32.mxu0 0.0
      %866 = vmatmul.mubr.f32.gmra.mxu0 %v750
      %v867 = vpop.f32.mrf.mxu0
      %v868 = vadd.f32 %v784, %v867
      %v869 = vpop.f32.mrf.mxu0
      %870 = vmatprep.mubr.f32.mxu0 0.0
      %871 = vmatmul.mubr.f32.gmra.mxu0 %v751
      %v872 = vpop.f32.mrf.mxu0
      %v873 = vadd.f32 %v784, %v872
      %v874 = vpop.f32.mrf.mxu0
      %875 = vmatprep.mubr.f32.mxu0 0.0
      %876 = vmatmul.mubr.f32.gmra.mxu0 %v752
      %v877 = vpop.f32.mrf.mxu0
      %v878 = vadd.f32 %v784, %v877
      %v879 = vpop.f32.mrf.mxu0
      %880 = vmatprep.mubr.f32.mxu0 0.0
      %881 = vmatmul.mubr.f32.gmra.mxu0 %v753
      %v882 = vpop.f32.mrf.mxu0
      %v883 = vadd.f32 %v784, %v882
      %v884 = vpop.f32.mrf.mxu0
      %885 = vmatprep.mubr.f32.mxu0 0.0
      %886 = vmatmul.mubr.f32.gmra.mxu0 %v754
      %v887 = vpop.f32.mrf.mxu0
      %v888 = vadd.f32 %v784, %v887
      %v889 = vpop.f32.mrf.mxu0
      %890 = vmatprep.mubr.f32.mxu0 0.0
      %891 = vmatmul.mubr.f32.gmra.mxu0 %v755
      %v892 = vpop.f32.mrf.mxu0
      %v893 = vadd.f32 %v784, %v892
      %v894 = vpop.f32.mrf.mxu0
      %895 = vmatprep.mubr.f32.mxu0 0.0
      %896 = vmatmul.mubr.f32.gmra.mxu0 %v756
      %v897 = vpop.f32.mrf.mxu0
      %v898 = vadd.f32 %v784, %v897
      %v899 = vpop.f32.mrf.mxu0
      %900 = vmatprep.mubr.f32.mxu0 0.0
      %901 = vmatmul.mubr.f32.gmra.mxu0 %v757
      %v902 = vpop.f32.mrf.mxu0
      %v903 = vadd.f32 %v784, %v902
      %v904 = vpop.f32.mrf.mxu0
      %905 = vmatprep.mubr.f32.mxu0 0.0
      %906 = vmatmul.mubr.f32.gmra.mxu0 %v758
      %v907 = vpop.f32.mrf.mxu0
      %v908 = vadd.f32 %v784, %v907
      %v909 = vpop.f32.mrf.mxu0
      %910 = vmatprep.mubr.f32.mxu0 0.0
      %911 = vmatmul.mubr.f32.gmra.mxu0 %v759
      %v912 = vpop.f32.mrf.mxu0
      %v913 = vadd.f32 %v784, %v912
      %v914 = vpop.f32.mrf.mxu0
      %915 = vmatprep.mubr.f32.mxu0 0.0
      %916 = vmatmul.mubr.f32.gmra.mxu0 %v760
      %v917 = vpop.f32.mrf.mxu0
      %v918 = vadd.f32 %v784, %v917
      %v919 = vpop.f32.mrf.mxu0
      %920 = vmatprep.mubr.f32.mxu0 0.0
      %921 = vmatmul.mubr.f32.gmra.mxu0 %v761
      %v922 = vpop.f32.mrf.mxu0
      %v923 = vadd.f32 %v784, %v922
      %v924 = vpop.f32.mrf.mxu0
      %925 = vmatprep.mubr.f32.mxu0 0.0
      %926 = vmatmul.mubr.f32.gmra.mxu0 %v762
      %v927 = vpop.f32.mrf.mxu0
      %v928 = vadd.f32 %v784, %v927
      %v929 = vpop.f32.mrf.mxu0
      %930 = vdwg.mxu0
      %v931 = vmax.f32 %v853, 0.0
      %v932 = vmax.f32 %v858, 0.0
      %v933 = vmax.f32 %v863, 0.0
      %v934 = vmax.f32 %v868, 0.0
      %v935 = vmax.f32 %v873, 0.0
      %v936 = vmax.f32 %v878, 0.0
      %v937 = vmax.f32 %v883, 0.0
      %v938 = vmax.f32 %v888, 0.0
      %v939 = vmax.f32 %v893, 0.0
      %v940 = vmax.f32 %v898, 0.0
      %v941 = vmax.f32 %v903, 0.0
      %v942 = vmax.f32 %v908, 0.0
      %v943 = vmax.f32 %v913, 0.0
      %v944 = vmax.f32 %v918, 0.0
      %v945 = vmax.f32 %v923, 0.0
      %v946 = vmax.f32 %v928, 0.0
      %v947 = vld [vmem:[%s3] sm:$0x1f]
      %v948 = vlaneseq
      %v949 = vshrl.u32 %v948, 7
      %v950 = vsub.s32 0, %v949
      %v951 = vrot.slane %v947, %v950
      %v952 = vlaneseq
      %v953 = vshrl.u32 %v952, 7
      %v954 = vsub.s32 2, %v953
      %v955 = vrot.slane %v947, %v954
      %v957 = vrot.slane %v947, 6
      %v959 = vmul.f32 %v947, %v957
      %v961 = vrot.slane %v959, 1
      %v963 = vadd.f32 %v947, %v961
      %v964 = vlaneseq
      %v965 = vshrl.u32 %v964, 7
      %v966 = vsub.s32 1, %v965
      %v967 = vrot.slane %v963, %v966
      %v968 = vrot.slane %v947, 1
      %v970 = vadd.f32 %v947, %v968
      %v971 = vlaneseq
      %v972 = vshrl.u32 %v971, 7
      %v973 = vsub.s32 1, %v972
      %v974 = vrot.slane %v970, %v973
      %v975 = vmul.f32 %v974, %v931
      %v976 = vmul.f32 %v974, %v932
      %v977 = vmul.f32 %v951, %v931
      %v978 = vmul.f32 %v951, %v932
      %v979 = vadd.f32 %v977, %v975
      %v980 = vadd.f32 %v978, %v976
      %v981 = vmul.f32 %v955, %v975
      %v982 = vmul.f32 %v955, %v976
      %v983 = vmul.f32 %v955, 0.0
      %v984 = vadd.f32 %v983, %v931
      %v985 = vadd.f32 %v983, %v932
      %v986 = vmul.f32 %v951, %v933
      %v987 = vmul.f32 %v951, %v934
      %v988 = vmul.f32 %v967, %v984
      %v989 = vmul.f32 %v967, %v985
      %v990 = vadd.f32 %v986, %v988
      %v991 = vadd.f32 %v987, %v989
      %v992 = vadd.f32 %v990, %v981
      %v993 = vadd.f32 %v991, %v982
      %v994 = vmul.f32 %v955, %v981
      %v995 = vmul.f32 %v955, %v982
      %v996 = vmul.f32 %v955, %v984
      %v997 = vmul.f32 %v955, %v985
      %v998 = vadd.f32 %v996, %v933
      %v999 = vadd.f32 %v997, %v934
      %v1000 = vmul.f32 %v951, %v935
      %v1001 = vmul.f32 %v951, %v936
      %v1002 = vmul.f32 %v967, %v998
      %v1003 = vmul.f32 %v967, %v999
      %v1004 = vadd.f32 %v1000, %v1002
      %v1005 = vadd.f32 %v1001, %v1003
      %v1006 = vadd.f32 %v1004, %v994
      %v1007 = vadd.f32 %v1005, %v995
      %v1008 = vmul.f32 %v955, %v994
      %v1009 = vmul.f32 %v955, %v995
      %v1010 = vmul.f32 %v955, %v998
      %v1011 = vmul.f32 %v955, %v999
      %v1012 = vadd.f32 %v1010, %v935
      %v1013 = vadd.f32 %v1011, %v936
      %v1014 = vmul.f32 %v951, %v937
      %v1015 = vmul.f32 %v951, %v938
      %v1016 = vmul.f32 %v967, %v1012
      %v1017 = vmul.f32 %v967, %v1013
      %v1018 = vadd.f32 %v1014, %v1016
      %v1019 = vadd.f32 %v1015, %v1017
      %v1020 = vadd.f32 %v1018, %v1008
      %v1021 = vadd.f32 %v1019, %v1009
      %v1022 = vmul.f32 %v955, %v1008
      %v1023 = vmul.f32 %v955, %v1009
      %v1024 = vmul.f32 %v955, %v1012
      %v1025 = vmul.f32 %v955, %v1013
      %v1026 = vadd.f32 %v1024, %v937
      %v1027 = vadd.f32 %v1025, %v938
      %v1028 = vmul.f32 %v951, %v939
      %v1029 = vmul.f32 %v951, %v940
      %v1030 = vmul.f32 %v967, %v1026
      %v1031 = vmul.f32 %v967, %v1027
      %v1032 = vadd.f32 %v1028, %v1030
      %v1033 = vadd.f32 %v1029, %v1031
      %v1034 = vadd.f32 %v1032, %v1022
      %v1035 = vadd.f32 %v1033, %v1023
      %v1036 = vmul.f32 %v955, %v1022
      %v1037 = vmul.f32 %v955, %v1023
      %v1038 = vmul.f32 %v955, %v1026
      %v1039 = vmul.f32 %v955, %v1027
      %v1040 = vadd.f32 %v1038, %v939
      %v1041 = vadd.f32 %v1039, %v940
      %v1042 = vmul.f32 %v951, %v941
      %v1043 = vmul.f32 %v951, %v942
      %v1044 = vmul.f32 %v967, %v1040
      %v1045 = vmul.f32 %v967, %v1041
      %v1046 = vadd.f32 %v1042, %v1044
      %v1047 = vadd.f32 %v1043, %v1045
      %v1048 = vadd.f32 %v1046, %v1036
      %v1049 = vadd.f32 %v1047, %v1037
      %v1050 = vmul.f32 %v955, %v1036
      %v1051 = vmul.f32 %v955, %v1037
      %v1052 = vmul.f32 %v955, %v1040
      %v1053 = vmul.f32 %v955, %v1041
      %v1054 = vadd.f32 %v1052, %v941
      %v1055 = vadd.f32 %v1053, %v942
      %v1056 = vmul.f32 %v951, %v943
      %v1057 = vmul.f32 %v951, %v944
      %v1058 = vmul.f32 %v967, %v1054
      %v1059 = vmul.f32 %v967, %v1055
      %v1060 = vadd.f32 %v1056, %v1058
      %v1061 = vadd.f32 %v1057, %v1059
      %v1062 = vadd.f32 %v1060, %v1050
      %v1063 = vadd.f32 %v1061, %v1051
      %v1064 = vmul.f32 %v955, %v1050
      %v1065 = vmul.f32 %v955, %v1051
      %v1066 = vmul.f32 %v955, %v1054
      %v1067 = vmul.f32 %v955, %v1055
      %v1068 = vadd.f32 %v1066, %v943
      %v1069 = vadd.f32 %v1067, %v944
      %v1070 = vmul.f32 %v951, %v945
      %v1071 = vmul.f32 %v951, %v946
      %v1072 = vmul.f32 %v967, %v1068
      %v1073 = vmul.f32 %v967, %v1069
      %v1074 = vadd.f32 %v1070, %v1072
      %v1075 = vadd.f32 %v1071, %v1073
      %v1076 = vadd.f32 %v1074, %v1064
      %v1077 = vadd.f32 %v1075, %v1065
      %v1078 = vlaneseq
      %v1079 = vshrl.u32 %v1078, 7
      %v1080 = vsub.s32 3, %v1079
      %v1081 = vrot.slane %v947, %v1080
      %v1082 = vmul.f32 %v979, %v1081
      %v1083 = vmul.f32 %v980, %v1081
      %v1084 = vmul.f32 %v992, %v1081
      %v1085 = vmul.f32 %v993, %v1081
      %v1086 = vmul.f32 %v1006, %v1081
      %v1087 = vmul.f32 %v1007, %v1081
      %v1088 = vmul.f32 %v1020, %v1081
      %v1089 = vmul.f32 %v1021, %v1081
      %v1090 = vmul.f32 %v1034, %v1081
      %v1091 = vmul.f32 %v1035, %v1081
      %v1092 = vmul.f32 %v1048, %v1081
      %v1093 = vmul.f32 %v1049, %v1081
      %v1094 = vmul.f32 %v1062, %v1081
      %v1095 = vmul.f32 %v1063, %v1081
      %v1096 = vmul.f32 %v1076, %v1081
      %v1097 = vmul.f32 %v1077, %v1081
      %v1098 = vlaneseq
      %v1099 = vshrl.u32 %v1098, 7
      %v1100 = vsub.s32 4, %v1099
      %v1101 = vrot.slane %v947, %v1100
      %v1102 = vadd.f32 %v1082, %v1101
      %v1103 = vadd.f32 %v1083, %v1101
      %v1104 = vadd.f32 %v1084, %v1101
      %v1105 = vadd.f32 %v1085, %v1101
      %v1106 = vadd.f32 %v1086, %v1101
      %v1107 = vadd.f32 %v1087, %v1101
      %v1108 = vadd.f32 %v1088, %v1101
      %v1109 = vadd.f32 %v1089, %v1101
      %v1110 = vadd.f32 %v1090, %v1101
      %v1111 = vadd.f32 %v1091, %v1101
      %v1112 = vadd.f32 %v1092, %v1101
      %v1113 = vadd.f32 %v1093, %v1101
      %v1114 = vadd.f32 %v1094, %v1101
      %v1115 = vadd.f32 %v1095, %v1101
      %v1116 = vadd.f32 %v1096, %v1101
      %v1117 = vadd.f32 %v1097, %v1101
      %v1118 = vmax.f32 %v1102, -8.0
      %v1119 = vmax.f32 %v1103, -8.0
      %v1120 = vmax.f32 %v1104, -8.0
      %v1121 = vmax.f32 %v1105, -8.0
      %v1122 = vmax.f32 %v1106, -8.0
      %v1123 = vmax.f32 %v1107, -8.0
      %v1124 = vmax.f32 %v1108, -8.0
      %v1125 = vmax.f32 %v1109, -8.0
      %v1126 = vmax.f32 %v1110, -8.0
      %v1127 = vmax.f32 %v1111, -8.0
      %v1128 = vmax.f32 %v1112, -8.0
      %v1129 = vmax.f32 %v1113, -8.0
      %v1130 = vmax.f32 %v1114, -8.0
      %v1131 = vmax.f32 %v1115, -8.0
      %v1132 = vmax.f32 %v1116, -8.0
      %v1133 = vmax.f32 %v1117, -8.0
      %v1134 = vmin.f32 %v1118, 8.0
      %v1135 = vmin.f32 %v1119, 8.0
      %v1136 = vmin.f32 %v1120, 8.0
      %v1137 = vmin.f32 %v1121, 8.0
      %v1138 = vmin.f32 %v1122, 8.0
      %v1139 = vmin.f32 %v1123, 8.0
      %v1140 = vmin.f32 %v1124, 8.0
      %v1141 = vmin.f32 %v1125, 8.0
      %v1142 = vmin.f32 %v1126, 8.0
      %v1143 = vmin.f32 %v1127, 8.0
      %v1144 = vmin.f32 %v1128, 8.0
      %v1145 = vmin.f32 %v1129, 8.0
      %v1146 = vmin.f32 %v1130, 8.0
      %v1147 = vmin.f32 %v1131, 8.0
      %v1148 = vmin.f32 %v1132, 8.0
      %v1149 = vmin.f32 %v1133, 8.0
      %v1150 = vld [vmem:[%s4] sm:$0x3f]
      %v1151 = vlaneseq
      %v1152 = vshrl.u32 %v1151, 7
      %v1153 = vsub.s32 2, %v1152
      %v1154 = vrot.slane %v1150, %v1153
      %v1155 = vmul.f32 %v1154, %v1134
      %v1156 = vmul.f32 %v1154, %v1135
      %v1157 = vmul.f32 %v1154, %v1136
      %v1158 = vmul.f32 %v1154, %v1137
      %v1159 = vmul.f32 %v1154, %v1138
      %v1160 = vmul.f32 %v1154, %v1139
      %v1161 = vmul.f32 %v1154, %v1140
      %v1162 = vmul.f32 %v1154, %v1141
      %v1163 = vmul.f32 %v1154, %v1142
      %v1164 = vmul.f32 %v1154, %v1143
      %v1165 = vmul.f32 %v1154, %v1144
      %v1166 = vmul.f32 %v1154, %v1145
      %v1167 = vmul.f32 %v1154, %v1146
      %v1168 = vmul.f32 %v1154, %v1147
      %v1169 = vmul.f32 %v1154, %v1148
      %v1170 = vmul.f32 %v1154, %v1149
      %v1171 = vlaneseq
      %v1172 = vshrl.u32 %v1171, 7
      %v1173 = vsub.s32 5, %v1172
      %v1174 = vrot.slane %v1150, %v1173
      %v1175 = vadd.f32 %v1155, %v1174
      %v1176 = vadd.f32 %v1156, %v1174
      %v1177 = vadd.f32 %v1157, %v1174
      %v1178 = vadd.f32 %v1158, %v1174
      %v1179 = vadd.f32 %v1159, %v1174
      %v1180 = vadd.f32 %v1160, %v1174
      %v1181 = vadd.f32 %v1161, %v1174
      %v1182 = vadd.f32 %v1162, %v1174
      %v1183 = vadd.f32 %v1163, %v1174
      %v1184 = vadd.f32 %v1164, %v1174
      %v1185 = vadd.f32 %v1165, %v1174
      %v1186 = vadd.f32 %v1166, %v1174
      %v1187 = vadd.f32 %v1167, %v1174
      %v1188 = vadd.f32 %v1168, %v1174
      %v1189 = vadd.f32 %v1169, %v1174
      %v1190 = vadd.f32 %v1170, %v1174
      %v1191 = vrot.slane %v1134, 6
      %v1192 = vrot.slane %v1135, 6
      %v1193 = vrot.slane %v1136, 6
      %v1194 = vrot.slane %v1137, 6
      %v1195 = vrot.slane %v1138, 6
      %v1196 = vrot.slane %v1139, 6
      %v1197 = vrot.slane %v1140, 6
      %v1198 = vrot.slane %v1141, 6
      %v1199 = vrot.slane %v1142, 6
      %v1200 = vrot.slane %v1143, 6
      %v1201 = vrot.slane %v1144, 6
      %v1202 = vrot.slane %v1145, 6
      %v1203 = vrot.slane %v1146, 6
      %v1204 = vrot.slane %v1147, 6
      %v1205 = vrot.slane %v1148, 6
      %v1206 = vrot.slane %v1149, 6
      %vm1207 = vcmp.lt.s32.totalorder %v283, 2
      %v1208 = vsel %vm1207, %v1205, %v1206
      %v1209 = vsel %vm1207, %v1204, %v1205
      %v1210 = vsel %vm1207, %v1203, %v1204
      %v1211 = vsel %vm1207, %v1202, %v1203
      %v1212 = vsel %vm1207, %v1201, %v1202
      %v1213 = vsel %vm1207, %v1200, %v1201
      %v1214 = vsel %vm1207, %v1199, %v1200
      %v1215 = vsel %vm1207, %v1198, %v1199
      %v1216 = vsel %vm1207, %v1197, %v1198
      %v1217 = vsel %vm1207, %v1196, %v1197
      %v1218 = vsel %vm1207, %v1195, %v1196
      %v1219 = vsel %vm1207, %v1194, %v1195
      %v1220 = vsel %vm1207, %v1193, %v1194
      %v1221 = vsel %vm1207, %v1192, %v1193
      %v1222 = vsel %vm1207, %v1191, %v1192
      %v1223 = vsel %vm1207, %v1206, %v1191
      %v1224 = vlaneseq
      %v1225 = vshrl.u32 %v1224, 7
      %v1226 = vsub.s32 0, %v1225
      %v1227 = vrot.slane %v1150, %v1226
      %v1228 = vmul.f32 %v1227, %v1223
      %v1229 = vmul.f32 %v1227, %v1222
      %v1230 = vmul.f32 %v1227, %v1221
      %v1231 = vmul.f32 %v1227, %v1220
      %v1232 = vmul.f32 %v1227, %v1219
      %v1233 = vmul.f32 %v1227, %v1218
      %v1234 = vmul.f32 %v1227, %v1217
      %v1235 = vmul.f32 %v1227, %v1216
      %v1236 = vmul.f32 %v1227, %v1215
      %v1237 = vmul.f32 %v1227, %v1214
      %v1238 = vmul.f32 %v1227, %v1213
      %v1239 = vmul.f32 %v1227, %v1212
      %v1240 = vmul.f32 %v1227, %v1211
      %v1241 = vmul.f32 %v1227, %v1210
      %v1242 = vmul.f32 %v1227, %v1209
      %v1243 = vmul.f32 %v1227, %v1208
      %v1244 = vsel %vm539, 1, 0
      %v1245 = vsel %vm540, 1, 0
      %v1246 = vsel %vm541, 1, 0
      %v1247 = vsel %vm542, 1, 0
      %v1248 = vsel %vm543, 1, 0
      %v1249 = vsel %vm544, 1, 0
      %v1250 = vsel %vm545, 1, 0
      %v1251 = vsel %vm546, 1, 0
      %v1252 = vsel %vm547, 1, 0
      %v1253 = vsel %vm548, 1, 0
      %v1254 = vsel %vm549, 1, 0
      %v1255 = vsel %vm550, 1, 0
      %v1256 = vsel %vm551, 1, 0
      %v1257 = vsel %vm552, 1, 0
      %v1258 = vsel %vm553, 1, 0
      %v1259 = vsel %vm554, 1, 0
      %vm1260 = vcmp.eq.s32.totalorder %v1244, 1
      %vm1261 = vcmp.eq.s32.totalorder %v1245, 1
      %vm1262 = vcmp.eq.s32.totalorder %v1246, 1
      %vm1263 = vcmp.eq.s32.totalorder %v1247, 1
      %vm1264 = vcmp.eq.s32.totalorder %v1248, 1
      %vm1265 = vcmp.eq.s32.totalorder %v1249, 1
      %vm1266 = vcmp.eq.s32.totalorder %v1250, 1
      %vm1267 = vcmp.eq.s32.totalorder %v1251, 1
      %vm1268 = vcmp.eq.s32.totalorder %v1252, 1
      %vm1269 = vcmp.eq.s32.totalorder %v1253, 1
      %vm1270 = vcmp.eq.s32.totalorder %v1254, 1
      %vm1271 = vcmp.eq.s32.totalorder %v1255, 1
      %vm1272 = vcmp.eq.s32.totalorder %v1256, 1
      %vm1273 = vcmp.eq.s32.totalorder %v1257, 1
      %vm1274 = vcmp.eq.s32.totalorder %v1258, 1
      %vm1275 = vcmp.eq.s32.totalorder %v1259, 1
      %v1276 = vsel %vm1260, %v1228, 0.0
      %v1277 = vsel %vm1261, %v1229, 0.0
      %v1278 = vsel %vm1262, %v1230, 0.0
      %v1279 = vsel %vm1263, %v1231, 0.0
      %v1280 = vsel %vm1264, %v1232, 0.0
      %v1281 = vsel %vm1265, %v1233, 0.0
      %v1282 = vsel %vm1266, %v1234, 0.0
      %v1283 = vsel %vm1267, %v1235, 0.0
      %v1284 = vsel %vm1268, %v1236, 0.0
      %v1285 = vsel %vm1269, %v1237, 0.0
      %v1286 = vsel %vm1270, %v1238, 0.0
      %v1287 = vsel %vm1271, %v1239, 0.0
      %v1288 = vsel %vm1272, %v1240, 0.0
      %v1289 = vsel %vm1273, %v1241, 0.0
      %v1290 = vsel %vm1274, %v1242, 0.0
      %v1291 = vsel %vm1275, %v1243, 0.0
      %v1292 = vadd.f32 %v1175, %v1276
      %v1293 = vadd.f32 %v1176, %v1277
      %v1294 = vadd.f32 %v1177, %v1278
      %v1295 = vadd.f32 %v1178, %v1279
      %v1296 = vadd.f32 %v1179, %v1280
      %v1297 = vadd.f32 %v1180, %v1281
      %v1298 = vadd.f32 %v1181, %v1282
      %v1299 = vadd.f32 %v1182, %v1283
      %v1300 = vadd.f32 %v1183, %v1284
      %v1301 = vadd.f32 %v1184, %v1285
      %v1302 = vadd.f32 %v1185, %v1286
      %v1303 = vadd.f32 %v1186, %v1287
      %v1304 = vadd.f32 %v1187, %v1288
      %v1305 = vadd.f32 %v1188, %v1289
      %v1306 = vadd.f32 %v1189, %v1290
      %v1307 = vadd.f32 %v1190, %v1291
      %v1308 = vrot.slane %v1134, 7
      %v1309 = vrot.slane %v1135, 7
      %v1310 = vrot.slane %v1136, 7
      %v1311 = vrot.slane %v1137, 7
      %v1312 = vrot.slane %v1138, 7
      %v1313 = vrot.slane %v1139, 7
      %v1314 = vrot.slane %v1140, 7
      %v1315 = vrot.slane %v1141, 7
      %v1316 = vrot.slane %v1142, 7
      %v1317 = vrot.slane %v1143, 7
      %v1318 = vrot.slane %v1144, 7
      %v1319 = vrot.slane %v1145, 7
      %v1320 = vrot.slane %v1146, 7
      %v1321 = vrot.slane %v1147, 7
      %v1322 = vrot.slane %v1148, 7
      %v1323 = vrot.slane %v1149, 7
      %vm1324 = vcmp.lt.s32.totalorder %v283, 1
      %v1325 = vsel %vm1324, %v1322, %v1323
      %v1326 = vsel %vm1324, %v1321, %v1322
      %v1327 = vsel %vm1324, %v1320, %v1321
      %v1328 = vsel %vm1324, %v1319, %v1320
      %v1329 = vsel %vm1324, %v1318, %v1319
      %v1330 = vsel %vm1324, %v1317, %v1318
      %v1331 = vsel %vm1324, %v1316, %v1317
      %v1332 = vsel %vm1324, %v1315, %v1316
      %v1333 = vsel %vm1324, %v1314, %v1315
      %v1334 = vsel %vm1324, %v1313, %v1314
      %v1335 = vsel %vm1324, %v1312, %v1313
      %v1336 = vsel %vm1324, %v1311, %v1312
      %v1337 = vsel %vm1324, %v1310, %v1311
      %v1338 = vsel %vm1324, %v1309, %v1310
      %v1339 = vsel %vm1324, %v1308, %v1309
      %v1340 = vsel %vm1324, %v1323, %v1308
      %v1341 = vlaneseq
      %v1342 = vshrl.u32 %v1341, 7
      %v1343 = vsub.s32 1, %v1342
      %v1344 = vrot.slane %v1150, %v1343
      %v1345 = vmul.f32 %v1344, %v1340
      %v1346 = vmul.f32 %v1344, %v1339
      %v1347 = vmul.f32 %v1344, %v1338
      %v1348 = vmul.f32 %v1344, %v1337
      %v1349 = vmul.f32 %v1344, %v1336
      %v1350 = vmul.f32 %v1344, %v1335
      %v1351 = vmul.f32 %v1344, %v1334
      %v1352 = vmul.f32 %v1344, %v1333
      %v1353 = vmul.f32 %v1344, %v1332
      %v1354 = vmul.f32 %v1344, %v1331
      %v1355 = vmul.f32 %v1344, %v1330
      %v1356 = vmul.f32 %v1344, %v1329
      %v1357 = vmul.f32 %v1344, %v1328
      %v1358 = vmul.f32 %v1344, %v1327
      %v1359 = vmul.f32 %v1344, %v1326
      %v1360 = vmul.f32 %v1344, %v1325
      %v1361 = vsel %vm603, 1, 0
      %v1362 = vsel %vm604, 1, 0
      %v1363 = vsel %vm605, 1, 0
      %v1364 = vsel %vm606, 1, 0
      %v1365 = vsel %vm607, 1, 0
      %v1366 = vsel %vm608, 1, 0
      %v1367 = vsel %vm609, 1, 0
      %v1368 = vsel %vm610, 1, 0
      %v1369 = vsel %vm611, 1, 0
      %v1370 = vsel %vm612, 1, 0
      %v1371 = vsel %vm613, 1, 0
      %v1372 = vsel %vm614, 1, 0
      %v1373 = vsel %vm615, 1, 0
      %v1374 = vsel %vm616, 1, 0
      %v1375 = vsel %vm617, 1, 0
      %v1376 = vsel %vm618, 1, 0
      %vm1377 = vcmp.eq.s32.totalorder %v1361, 1
      %vm1378 = vcmp.eq.s32.totalorder %v1362, 1
      %vm1379 = vcmp.eq.s32.totalorder %v1363, 1
      %vm1380 = vcmp.eq.s32.totalorder %v1364, 1
      %vm1381 = vcmp.eq.s32.totalorder %v1365, 1
      %vm1382 = vcmp.eq.s32.totalorder %v1366, 1
      %vm1383 = vcmp.eq.s32.totalorder %v1367, 1
      %vm1384 = vcmp.eq.s32.totalorder %v1368, 1
      %vm1385 = vcmp.eq.s32.totalorder %v1369, 1
      %vm1386 = vcmp.eq.s32.totalorder %v1370, 1
      %vm1387 = vcmp.eq.s32.totalorder %v1371, 1
      %vm1388 = vcmp.eq.s32.totalorder %v1372, 1
      %vm1389 = vcmp.eq.s32.totalorder %v1373, 1
      %vm1390 = vcmp.eq.s32.totalorder %v1374, 1
      %vm1391 = vcmp.eq.s32.totalorder %v1375, 1
      %vm1392 = vcmp.eq.s32.totalorder %v1376, 1
      %v1393 = vsel %vm1377, %v1345, 0.0
      %v1394 = vsel %vm1378, %v1346, 0.0
      %v1395 = vsel %vm1379, %v1347, 0.0
      %v1396 = vsel %vm1380, %v1348, 0.0
      %v1397 = vsel %vm1381, %v1349, 0.0
      %v1398 = vsel %vm1382, %v1350, 0.0
      %v1399 = vsel %vm1383, %v1351, 0.0
      %v1400 = vsel %vm1384, %v1352, 0.0
      %v1401 = vsel %vm1385, %v1353, 0.0
      %v1402 = vsel %vm1386, %v1354, 0.0
      %v1403 = vsel %vm1387, %v1355, 0.0
      %v1404 = vsel %vm1388, %v1356, 0.0
      %v1405 = vsel %vm1389, %v1357, 0.0
      %v1406 = vsel %vm1390, %v1358, 0.0
      %v1407 = vsel %vm1391, %v1359, 0.0
      %v1408 = vsel %vm1392, %v1360, 0.0
      %v1409 = vadd.f32 %v1292, %v1393
      %v1410 = vadd.f32 %v1293, %v1394
      %v1411 = vadd.f32 %v1294, %v1395
      %v1412 = vadd.f32 %v1295, %v1396
      %v1413 = vadd.f32 %v1296, %v1397
      %v1414 = vadd.f32 %v1297, %v1398
      %v1415 = vadd.f32 %v1298, %v1399
      %v1416 = vadd.f32 %v1299, %v1400
      %v1417 = vadd.f32 %v1300, %v1401
      %v1418 = vadd.f32 %v1301, %v1402
      %v1419 = vadd.f32 %v1302, %v1403
      %v1420 = vadd.f32 %v1303, %v1404
      %v1421 = vadd.f32 %v1304, %v1405
      %v1422 = vadd.f32 %v1305, %v1406
      %v1423 = vadd.f32 %v1306, %v1407
      %v1424 = vadd.f32 %v1307, %v1408
      %v1425 = vrot.slane %v1134, 1
      %v1426 = vrot.slane %v1135, 1
      %v1427 = vrot.slane %v1136, 1
      %v1428 = vrot.slane %v1137, 1
      %v1429 = vrot.slane %v1138, 1
      %v1430 = vrot.slane %v1139, 1
      %v1431 = vrot.slane %v1140, 1
      %v1432 = vrot.slane %v1141, 1
      %v1433 = vrot.slane %v1142, 1
      %v1434 = vrot.slane %v1143, 1
      %v1435 = vrot.slane %v1144, 1
      %v1436 = vrot.slane %v1145, 1
      %v1437 = vrot.slane %v1146, 1
      %v1438 = vrot.slane %v1147, 1
      %v1439 = vrot.slane %v1148, 1
      %v1440 = vrot.slane %v1149, 1
      %vm1441 = vcmp.lt.s32.totalorder %v283, 7
      %v1442 = vsel %vm1441, %v1439, %v1440
      %v1443 = vsel %vm1441, %v1438, %v1439
      %v1444 = vsel %vm1441, %v1437, %v1438
      %v1445 = vsel %vm1441, %v1436, %v1437
      %v1446 = vsel %vm1441, %v1435, %v1436
      %v1447 = vsel %vm1441, %v1434, %v1435
      %v1448 = vsel %vm1441, %v1433, %v1434
      %v1449 = vsel %vm1441, %v1432, %v1433
      %v1450 = vsel %vm1441, %v1431, %v1432
      %v1451 = vsel %vm1441, %v1430, %v1431
      %v1452 = vsel %vm1441, %v1429, %v1430
      %v1453 = vsel %vm1441, %v1428, %v1429
      %v1454 = vsel %vm1441, %v1427, %v1428
      %v1455 = vsel %vm1441, %v1426, %v1427
      %v1456 = vsel %vm1441, %v1425, %v1426
      %v1457 = vsel %vm1441, %v1440, %v1425
      %v1458 = vlaneseq
      %v1459 = vshrl.u32 %v1458, 7
      %v1460 = vsub.s32 3, %v1459
      %v1461 = vrot.slane %v1150, %v1460
      %v1462 = vmul.f32 %v1461, %v1456
      %v1463 = vmul.f32 %v1461, %v1455
      %v1464 = vmul.f32 %v1461, %v1454
      %v1465 = vmul.f32 %v1461, %v1453
      %v1466 = vmul.f32 %v1461, %v1452
      %v1467 = vmul.f32 %v1461, %v1451
      %v1468 = vmul.f32 %v1461, %v1450
      %v1469 = vmul.f32 %v1461, %v1449
      %v1470 = vmul.f32 %v1461, %v1448
      %v1471 = vmul.f32 %v1461, %v1447
      %v1472 = vmul.f32 %v1461, %v1446
      %v1473 = vmul.f32 %v1461, %v1445
      %v1474 = vmul.f32 %v1461, %v1444
      %v1475 = vmul.f32 %v1461, %v1443
      %v1476 = vmul.f32 %v1461, %v1442
      %v1477 = vmul.f32 %v1461, %v1457
      %v1478 = vsel %vm667, 1, 0
      %v1479 = vsel %vm668, 1, 0
      %v1480 = vsel %vm669, 1, 0
      %v1481 = vsel %vm670, 1, 0
      %v1482 = vsel %vm671, 1, 0
      %v1483 = vsel %vm672, 1, 0
      %v1484 = vsel %vm673, 1, 0
      %v1485 = vsel %vm674, 1, 0
      %v1486 = vsel %vm675, 1, 0
      %v1487 = vsel %vm676, 1, 0
      %v1488 = vsel %vm677, 1, 0
      %v1489 = vsel %vm678, 1, 0
      %v1490 = vsel %vm679, 1, 0
      %v1491 = vsel %vm680, 1, 0
      %v1492 = vsel %vm681, 1, 0
      %v1493 = vsel %vm682, 1, 0
      %vm1494 = vcmp.eq.s32.totalorder %v1478, 1
      %vm1495 = vcmp.eq.s32.totalorder %v1479, 1
      %vm1496 = vcmp.eq.s32.totalorder %v1480, 1
      %vm1497 = vcmp.eq.s32.totalorder %v1481, 1
      %vm1498 = vcmp.eq.s32.totalorder %v1482, 1
      %vm1499 = vcmp.eq.s32.totalorder %v1483, 1
      %vm1500 = vcmp.eq.s32.totalorder %v1484, 1
      %vm1501 = vcmp.eq.s32.totalorder %v1485, 1
      %vm1502 = vcmp.eq.s32.totalorder %v1486, 1
      %vm1503 = vcmp.eq.s32.totalorder %v1487, 1
      %vm1504 = vcmp.eq.s32.totalorder %v1488, 1
      %vm1505 = vcmp.eq.s32.totalorder %v1489, 1
      %vm1506 = vcmp.eq.s32.totalorder %v1490, 1
      %vm1507 = vcmp.eq.s32.totalorder %v1491, 1
      %vm1508 = vcmp.eq.s32.totalorder %v1492, 1
      %vm1509 = vcmp.eq.s32.totalorder %v1493, 1
      %v1510 = vsel %vm1494, %v1462, 0.0
      %v1511 = vsel %vm1495, %v1463, 0.0
      %v1512 = vsel %vm1496, %v1464, 0.0
      %v1513 = vsel %vm1497, %v1465, 0.0
      %v1514 = vsel %vm1498, %v1466, 0.0
      %v1515 = vsel %vm1499, %v1467, 0.0
      %v1516 = vsel %vm1500, %v1468, 0.0
      %v1517 = vsel %vm1501, %v1469, 0.0
      %v1518 = vsel %vm1502, %v1470, 0.0
      %v1519 = vsel %vm1503, %v1471, 0.0
      %v1520 = vsel %vm1504, %v1472, 0.0
      %v1521 = vsel %vm1505, %v1473, 0.0
      %v1522 = vsel %vm1506, %v1474, 0.0
      %v1523 = vsel %vm1507, %v1475, 0.0
      %v1524 = vsel %vm1508, %v1476, 0.0
      %v1525 = vsel %vm1509, %v1477, 0.0
      %v1526 = vadd.f32 %v1409, %v1510
      %v1527 = vadd.f32 %v1410, %v1511
      %v1528 = vadd.f32 %v1411, %v1512
      %v1529 = vadd.f32 %v1412, %v1513
      %v1530 = vadd.f32 %v1413, %v1514
      %v1531 = vadd.f32 %v1414, %v1515
      %v1532 = vadd.f32 %v1415, %v1516
      %v1533 = vadd.f32 %v1416, %v1517
      %v1534 = vadd.f32 %v1417, %v1518
      %v1535 = vadd.f32 %v1418, %v1519
      %v1536 = vadd.f32 %v1419, %v1520
      %v1537 = vadd.f32 %v1420, %v1521
      %v1538 = vadd.f32 %v1421, %v1522
      %v1539 = vadd.f32 %v1422, %v1523
      %v1540 = vadd.f32 %v1423, %v1524
      %v1541 = vadd.f32 %v1424, %v1525
      %v1542 = vrot.slane %v1134, 2
      %v1543 = vrot.slane %v1135, 2
      %v1544 = vrot.slane %v1136, 2
      %v1545 = vrot.slane %v1137, 2
      %v1546 = vrot.slane %v1138, 2
      %v1547 = vrot.slane %v1139, 2
      %v1548 = vrot.slane %v1140, 2
      %v1549 = vrot.slane %v1141, 2
      %v1550 = vrot.slane %v1142, 2
      %v1551 = vrot.slane %v1143, 2
      %v1552 = vrot.slane %v1144, 2
      %v1553 = vrot.slane %v1145, 2
      %v1554 = vrot.slane %v1146, 2
      %v1555 = vrot.slane %v1147, 2
      %v1556 = vrot.slane %v1148, 2
      %v1557 = vrot.slane %v1149, 2
      %vm1558 = vcmp.lt.s32.totalorder %v283, 6
      %v1559 = vsel %vm1558, %v1556, %v1557
      %v1560 = vsel %vm1558, %v1555, %v1556
      %v1561 = vsel %vm1558, %v1554, %v1555
      %v1562 = vsel %vm1558, %v1553, %v1554
      %v1563 = vsel %vm1558, %v1552, %v1553
      %v1564 = vsel %vm1558, %v1551, %v1552
      %v1565 = vsel %vm1558, %v1550, %v1551
      %v1566 = vsel %vm1558, %v1549, %v1550
      %v1567 = vsel %vm1558, %v1548, %v1549
      %v1568 = vsel %vm1558, %v1547, %v1548
      %v1569 = vsel %vm1558, %v1546, %v1547
      %v1570 = vsel %vm1558, %v1545, %v1546
      %v1571 = vsel %vm1558, %v1544, %v1545
      %v1572 = vsel %vm1558, %v1543, %v1544
      %v1573 = vsel %vm1558, %v1542, %v1543
      %v1574 = vsel %vm1558, %v1557, %v1542
      %v1575 = vlaneseq
      %v1576 = vshrl.u32 %v1575, 7
      %v1577 = vsub.s32 4, %v1576
      %v1578 = vrot.slane %v1150, %v1577
      %v1579 = vmul.f32 %v1578, %v1573
      %v1580 = vmul.f32 %v1578, %v1572
      %v1581 = vmul.f32 %v1578, %v1571
      %v1582 = vmul.f32 %v1578, %v1570
      %v1583 = vmul.f32 %v1578, %v1569
      %v1584 = vmul.f32 %v1578, %v1568
      %v1585 = vmul.f32 %v1578, %v1567
      %v1586 = vmul.f32 %v1578, %v1566
      %v1587 = vmul.f32 %v1578, %v1565
      %v1588 = vmul.f32 %v1578, %v1564
      %v1589 = vmul.f32 %v1578, %v1563
      %v1590 = vmul.f32 %v1578, %v1562
      %v1591 = vmul.f32 %v1578, %v1561
      %v1592 = vmul.f32 %v1578, %v1560
      %v1593 = vmul.f32 %v1578, %v1559
      %v1594 = vmul.f32 %v1578, %v1574
      %v1595 = vsel %vm731, 1, 0
      %v1596 = vsel %vm732, 1, 0
      %v1597 = vsel %vm733, 1, 0
      %v1598 = vsel %vm734, 1, 0
      %v1599 = vsel %vm735, 1, 0
      %v1600 = vsel %vm736, 1, 0
      %v1601 = vsel %vm737, 1, 0
      %v1602 = vsel %vm738, 1, 0
      %v1603 = vsel %vm739, 1, 0
      %v1604 = vsel %vm740, 1, 0
      %v1605 = vsel %vm741, 1, 0
      %v1606 = vsel %vm742, 1, 0
      %v1607 = vsel %vm743, 1, 0
      %v1608 = vsel %vm744, 1, 0
      %v1609 = vsel %vm745, 1, 0
      %v1610 = vsel %vm746, 1, 0
      %vm1611 = vcmp.eq.s32.totalorder %v1595, 1
      %vm1612 = vcmp.eq.s32.totalorder %v1596, 1
      %vm1613 = vcmp.eq.s32.totalorder %v1597, 1
      %vm1614 = vcmp.eq.s32.totalorder %v1598, 1
      %vm1615 = vcmp.eq.s32.totalorder %v1599, 1
      %vm1616 = vcmp.eq.s32.totalorder %v1600, 1
      %vm1617 = vcmp.eq.s32.totalorder %v1601, 1
      %vm1618 = vcmp.eq.s32.totalorder %v1602, 1
      %vm1619 = vcmp.eq.s32.totalorder %v1603, 1
      %vm1620 = vcmp.eq.s32.totalorder %v1604, 1
      %vm1621 = vcmp.eq.s32.totalorder %v1605, 1
      %vm1622 = vcmp.eq.s32.totalorder %v1606, 1
      %vm1623 = vcmp.eq.s32.totalorder %v1607, 1
      %vm1624 = vcmp.eq.s32.totalorder %v1608, 1
      %vm1625 = vcmp.eq.s32.totalorder %v1609, 1
      %vm1626 = vcmp.eq.s32.totalorder %v1610, 1
      %v1627 = vsel %vm1611, %v1579, 0.0
      %v1628 = vsel %vm1612, %v1580, 0.0
      %v1629 = vsel %vm1613, %v1581, 0.0
      %v1630 = vsel %vm1614, %v1582, 0.0
      %v1631 = vsel %vm1615, %v1583, 0.0
      %v1632 = vsel %vm1616, %v1584, 0.0
      %v1633 = vsel %vm1617, %v1585, 0.0
      %v1634 = vsel %vm1618, %v1586, 0.0
      %v1635 = vsel %vm1619, %v1587, 0.0
      %v1636 = vsel %vm1620, %v1588, 0.0
      %v1637 = vsel %vm1621, %v1589, 0.0
      %v1638 = vsel %vm1622, %v1590, 0.0
      %v1639 = vsel %vm1623, %v1591, 0.0
      %v1640 = vsel %vm1624, %v1592, 0.0
      %v1641 = vsel %vm1625, %v1593, 0.0
      %v1642 = vsel %vm1626, %v1594, 0.0
      %v1643 = vadd.f32 %v1526, %v1627
      %v1644 = vadd.f32 %v1527, %v1628
      %v1645 = vadd.f32 %v1528, %v1629
      %v1646 = vadd.f32 %v1529, %v1630
      %v1647 = vadd.f32 %v1530, %v1631
      %v1648 = vadd.f32 %v1531, %v1632
      %v1649 = vadd.f32 %v1532, %v1633
      %v1650 = vadd.f32 %v1533, %v1634
      %v1651 = vadd.f32 %v1534, %v1635
      %v1652 = vadd.f32 %v1535, %v1636
      %v1653 = vadd.f32 %v1536, %v1637
      %v1654 = vadd.f32 %v1537, %v1638
      %v1655 = vadd.f32 %v1538, %v1639
      %v1656 = vadd.f32 %v1539, %v1640
      %v1657 = vadd.f32 %v1540, %v1641
      %v1658 = vadd.f32 %v1541, %v1642
      %v1659 = vmax.f32 %v1643, -8.0
      %v1660 = vmax.f32 %v1644, -8.0
      %v1661 = vmax.f32 %v1645, -8.0
      %v1662 = vmax.f32 %v1646, -8.0
      %v1663 = vmax.f32 %v1647, -8.0
      %v1664 = vmax.f32 %v1648, -8.0
      %v1665 = vmax.f32 %v1649, -8.0
      %v1666 = vmax.f32 %v1650, -8.0
      %v1667 = vmax.f32 %v1651, -8.0
      %v1668 = vmax.f32 %v1652, -8.0
      %v1669 = vmax.f32 %v1653, -8.0
      %v1670 = vmax.f32 %v1654, -8.0
      %v1671 = vmax.f32 %v1655, -8.0
      %v1672 = vmax.f32 %v1656, -8.0
      %v1673 = vmax.f32 %v1657, -8.0
      %v1674 = vmax.f32 %v1658, -8.0
      %v1675 = vmin.f32 %v1659, 8.0
      %v1676 = vmin.f32 %v1660, 8.0
      %v1677 = vmin.f32 %v1661, 8.0
      %v1678 = vmin.f32 %v1662, 8.0
      %v1679 = vmin.f32 %v1663, 8.0
      %v1680 = vmin.f32 %v1664, 8.0
      %v1681 = vmin.f32 %v1665, 8.0
      %v1682 = vmin.f32 %v1666, 8.0
      %v1683 = vmin.f32 %v1667, 8.0
      %v1684 = vmin.f32 %v1668, 8.0
      %v1685 = vmin.f32 %v1669, 8.0
      %v1686 = vmin.f32 %v1670, 8.0
      %v1687 = vmin.f32 %v1671, 8.0
      %v1688 = vmin.f32 %v1672, 8.0
      %v1689 = vmin.f32 %v1673, 8.0
      %v1690 = vmin.f32 %v1674, 8.0
      %v1691 = vld [vmem:[%s5] sm:$0xff]
      %v1692 = vld [vmem:[%s5 + $0x8] sm:$0xff]
      %v1693 = vld [vmem:[%s5 + $0x10] sm:$0xff]
      %v1694 = vld [vmem:[%s5 + $0x18] sm:$0xff]
      %v1695 = vld [vmem:[%s5 + $0x20] sm:$0xff]
      %v1696 = vld [vmem:[%s5 + $0x28] sm:$0xff]
      %v1697 = vld [vmem:[%s5 + $0x30] sm:$0xff]
      %v1698 = vld [vmem:[%s5 + $0x38] sm:$0xff]
      %v1699 = vld [vmem:[%s5 + $0x40] sm:$0xff]
      %v1700 = vld [vmem:[%s5 + $0x48] sm:$0xff]
      %v1701 = vld [vmem:[%s5 + $0x50] sm:$0xff]
      %v1702 = vld [vmem:[%s5 + $0x58] sm:$0xff]
      %v1703 = vld [vmem:[%s5 + $0x60] sm:$0xff]
      %v1704 = vld [vmem:[%s5 + $0x68] sm:$0xff]
      %v1705 = vld [vmem:[%s5 + $0x70] sm:$0xff]
      %v1706 = vld [vmem:[%s5 + $0x78] sm:$0xff]
      %v1707 = vld [vmem:[%s6] sm:$0x1]
      %v1709 = vlaneseq
      %v1710 = vshrl.u32 %v1709, 7
      %v1711 = vsub.s32 0, %v1710
      %v1712 = vrot.slane %v1707, %v1711
      %1714 = vmatprep.subr.mxu0 0.0
      %1715 = vmatpush1.msra.mxu0 %v1706
      %1716 = vmatprep.subr.mxu0 0.0
      %1717 = vmatpush1.msra.mxu0 %v1705
      %1718 = vmatprep.subr.mxu0 0.0
      %1719 = vmatpush1.msra.mxu0 %v1704
      %1720 = vmatprep.subr.mxu0 0.0
      %1721 = vmatpush1.msra.mxu0 %v1703
      %1722 = vmatprep.subr.mxu0 0.0
      %1723 = vmatpush1.msra.mxu0 %v1702
      %1724 = vmatprep.subr.mxu0 0.0
      %1725 = vmatpush1.msra.mxu0 %v1701
      %1726 = vmatprep.subr.mxu0 0.0
      %1727 = vmatpush1.msra.mxu0 %v1700
      %1728 = vmatprep.subr.mxu0 0.0
      %1729 = vmatpush1.msra.mxu0 %v1699
      %1730 = vmatprep.subr.mxu0 0.0
      %1731 = vmatpush1.msra.mxu0 %v1698
      %1732 = vmatprep.subr.mxu0 0.0
      %1733 = vmatpush1.msra.mxu0 %v1697
      %1734 = vmatprep.subr.mxu0 0.0
      %1735 = vmatpush1.msra.mxu0 %v1696
      %1736 = vmatprep.subr.mxu0 0.0
      %1737 = vmatpush1.msra.mxu0 %v1695
      %1738 = vmatprep.subr.mxu0 0.0
      %1739 = vmatpush1.msra.mxu0 %v1694
      %1740 = vmatprep.subr.mxu0 0.0
      %1741 = vmatpush1.msra.mxu0 %v1693
      %1742 = vmatprep.subr.mxu0 0.0
      %1743 = vmatpush1.msra.mxu0 %v1692
      %1744 = vmatprep.subr.mxu0 0.0
      %1745 = vmatpush1.msra.mxu0 %v1691
      %1746 = vmatprep.subr.mxu0 0.0
      %1747 = vmatpush2.msra.mxu0 0.0
      %1748 = vmatprep.subr.mxu0 0.0
      %1749 = vmatpush2.msra.mxu0 0.0
      %1750 = vmatprep.subr.mxu0 0.0
      %1751 = vmatpush2.msra.mxu0 0.0
      %1752 = vmatprep.subr.mxu0 0.0
      %1753 = vmatpush2.msra.mxu0 0.0
      %1754 = vmatprep.subr.mxu0 0.0
      %1755 = vmatpush2.msra.mxu0 0.0
      %1756 = vmatprep.subr.mxu0 0.0
      %1757 = vmatpush2.msra.mxu0 0.0
      %1758 = vmatprep.subr.mxu0 0.0
      %1759 = vmatpush2.msra.mxu0 0.0
      %1760 = vmatprep.subr.mxu0 0.0
      %1761 = vmatpush2.msra.mxu0 0.0
      %1762 = vmatprep.subr.mxu0 0.0
      %1763 = vmatpush2.msra.mxu0 0.0
      %1764 = vmatprep.subr.mxu0 0.0
      %1765 = vmatpush2.msra.mxu0 0.0
      %1766 = vmatprep.subr.mxu0 0.0
      %1767 = vmatpush2.msra.mxu0 0.0
      %1768 = vmatprep.subr.mxu0 0.0
      %1769 = vmatpush2.msra.mxu0 0.0
      %1770 = vmatprep.subr.mxu0 0.0
      %1771 = vmatpush2.msra.mxu0 0.0
      %1772 = vmatprep.subr.mxu0 0.0
      %1773 = vmatpush2.msra.mxu0 0.0
      %1774 = vmatprep.subr.mxu0 0.0
      %1775 = vmatpush2.msra.mxu0 0.0
      %1776 = vmatprep.subr.mxu0 0.0
      %1777 = vmatpush2.msra.mxu0 0.0
      %1778 = vmatprep.mubr.f32.mxu0 0.0
      %1779 = vmatmul.mubr.f32.gmra.mxu0 %v1675
      %v1780 = vpop.f32.mrf.mxu0
      %v1781 = vadd.f32 %v1712, %v1780
      %v1782 = vpop.f32.mrf.mxu0
      %1783 = vmatprep.mubr.f32.mxu0 0.0
      %1784 = vmatmul.mubr.f32.gmra.mxu0 %v1676
      %v1785 = vpop.f32.mrf.mxu0
      %v1786 = vadd.f32 %v1712, %v1785
      %v1787 = vpop.f32.mrf.mxu0
      %1788 = vmatprep.mubr.f32.mxu0 0.0
      %1789 = vmatmul.mubr.f32.gmra.mxu0 %v1677
      %v1790 = vpop.f32.mrf.mxu0
      %v1791 = vadd.f32 %v1712, %v1790
      %v1792 = vpop.f32.mrf.mxu0
      %1793 = vmatprep.mubr.f32.mxu0 0.0
      %1794 = vmatmul.mubr.f32.gmra.mxu0 %v1678
      %v1795 = vpop.f32.mrf.mxu0
      %v1796 = vadd.f32 %v1712, %v1795
      %v1797 = vpop.f32.mrf.mxu0
      %1798 = vmatprep.mubr.f32.mxu0 0.0
      %1799 = vmatmul.mubr.f32.gmra.mxu0 %v1679
      %v1800 = vpop.f32.mrf.mxu0
      %v1801 = vadd.f32 %v1712, %v1800
      %v1802 = vpop.f32.mrf.mxu0
      %1803 = vmatprep.mubr.f32.mxu0 0.0
      %1804 = vmatmul.mubr.f32.gmra.mxu0 %v1680
      %v1805 = vpop.f32.mrf.mxu0
      %v1806 = vadd.f32 %v1712, %v1805
      %v1807 = vpop.f32.mrf.mxu0
      %1808 = vmatprep.mubr.f32.mxu0 0.0
      %1809 = vmatmul.mubr.f32.gmra.mxu0 %v1681
      %v1810 = vpop.f32.mrf.mxu0
      %v1811 = vadd.f32 %v1712, %v1810
      %v1812 = vpop.f32.mrf.mxu0
      %1813 = vmatprep.mubr.f32.mxu0 0.0
      %1814 = vmatmul.mubr.f32.gmra.mxu0 %v1682
      %v1815 = vpop.f32.mrf.mxu0
      %v1816 = vadd.f32 %v1712, %v1815
      %v1817 = vpop.f32.mrf.mxu0
      %1818 = vmatprep.mubr.f32.mxu0 0.0
      %1819 = vmatmul.mubr.f32.gmra.mxu0 %v1683
      %v1820 = vpop.f32.mrf.mxu0
      %v1821 = vadd.f32 %v1712, %v1820
      %v1822 = vpop.f32.mrf.mxu0
      %1823 = vmatprep.mubr.f32.mxu0 0.0
      %1824 = vmatmul.mubr.f32.gmra.mxu0 %v1684
      %v1825 = vpop.f32.mrf.mxu0
      %v1826 = vadd.f32 %v1712, %v1825
      %v1827 = vpop.f32.mrf.mxu0
      %1828 = vmatprep.mubr.f32.mxu0 0.0
      %1829 = vmatmul.mubr.f32.gmra.mxu0 %v1685
      %v1830 = vpop.f32.mrf.mxu0
      %v1831 = vadd.f32 %v1712, %v1830
      %v1832 = vpop.f32.mrf.mxu0
      %1833 = vmatprep.mubr.f32.mxu0 0.0
      %1834 = vmatmul.mubr.f32.gmra.mxu0 %v1686
      %v1835 = vpop.f32.mrf.mxu0
      %v1836 = vadd.f32 %v1712, %v1835
      %v1837 = vpop.f32.mrf.mxu0
      %1838 = vmatprep.mubr.f32.mxu0 0.0
      %1839 = vmatmul.mubr.f32.gmra.mxu0 %v1687
      %v1840 = vpop.f32.mrf.mxu0
      %v1841 = vadd.f32 %v1712, %v1840
      %v1842 = vpop.f32.mrf.mxu0
      %1843 = vmatprep.mubr.f32.mxu0 0.0
      %1844 = vmatmul.mubr.f32.gmra.mxu0 %v1688
      %v1845 = vpop.f32.mrf.mxu0
      %v1846 = vadd.f32 %v1712, %v1845
      %v1847 = vpop.f32.mrf.mxu0
      %1848 = vmatprep.mubr.f32.mxu0 0.0
      %1849 = vmatmul.mubr.f32.gmra.mxu0 %v1689
      %v1850 = vpop.f32.mrf.mxu0
      %v1851 = vadd.f32 %v1712, %v1850
      %v1852 = vpop.f32.mrf.mxu0
      %1853 = vmatprep.mubr.f32.mxu0 0.0
      %1854 = vmatmul.mubr.f32.gmra.mxu0 %v1690
      %v1855 = vpop.f32.mrf.mxu0
      %v1856 = vadd.f32 %v1712, %v1855
      %v1857 = vpop.f32.mrf.mxu0
      %1858 = vdwg.mxu0
      %v1859 = vmax.f32 %v1781, 0.0
      %v1860 = vmax.f32 %v1786, 0.0
      %v1861 = vmax.f32 %v1791, 0.0
      %v1862 = vmax.f32 %v1796, 0.0
      %v1863 = vmax.f32 %v1801, 0.0
      %v1864 = vmax.f32 %v1806, 0.0
      %v1865 = vmax.f32 %v1811, 0.0
      %v1866 = vmax.f32 %v1816, 0.0
      %v1867 = vmax.f32 %v1821, 0.0
      %v1868 = vmax.f32 %v1826, 0.0
      %v1869 = vmax.f32 %v1831, 0.0
      %v1870 = vmax.f32 %v1836, 0.0
      %v1871 = vmax.f32 %v1841, 0.0
      %v1872 = vmax.f32 %v1846, 0.0
      %v1873 = vmax.f32 %v1851, 0.0
      %v1874 = vmax.f32 %v1856, 0.0
      %s1875 = scalar_lea.vmem %s3, 8
      %v1876 = vld [vmem:[%s1875] sm:$0x1f]
      %v1877 = vlaneseq
      %v1878 = vshrl.u32 %v1877, 7
      %v1879 = vsub.s32 0, %v1878
      %v1880 = vrot.slane %v1876, %v1879
      %v1881 = vlaneseq
      %v1882 = vshrl.u32 %v1881, 7
      %v1883 = vsub.s32 2, %v1882
      %v1884 = vrot.slane %v1876, %v1883
      %v1886 = vrot.slane %v1876, 6
      %v1888 = vmul.f32 %v1876, %v1886
      %v1890 = vrot.slane %v1888, 1
      %v1892 = vadd.f32 %v1876, %v1890
      %v1893 = vlaneseq
      %v1894 = vshrl.u32 %v1893, 7
      %v1895 = vsub.s32 1, %v1894
      %v1896 = vrot.slane %v1892, %v1895
      %v1897 = vrot.slane %v1876, 1
      %v1899 = vadd.f32 %v1876, %v1897
      %v1900 = vlaneseq
      %v1901 = vshrl.u32 %v1900, 7
      %v1902 = vsub.s32 1, %v1901
      %v1903 = vrot.slane %v1899, %v1902
      %v1904 = vmul.f32 %v1903, %v1859
      %v1905 = vmul.f32 %v1903, %v1860
      %v1906 = vmul.f32 %v1880, %v1859
      %v1907 = vmul.f32 %v1880, %v1860
      %v1908 = vadd.f32 %v1906, %v1904
      %v1909 = vadd.f32 %v1907, %v1905
      %v1910 = vmul.f32 %v1884, %v1904
      %v1911 = vmul.f32 %v1884, %v1905
      %v1912 = vmul.f32 %v1884, 0.0
      %v1913 = vadd.f32 %v1912, %v1859
      %v1914 = vadd.f32 %v1912, %v1860
      %v1915 = vmul.f32 %v1880, %v1861
      %v1916 = vmul.f32 %v1880, %v1862
      %v1917 = vmul.f32 %v1896, %v1913
      %v1918 = vmul.f32 %v1896, %v1914
      %v1919 = vadd.f32 %v1915, %v1917
      %v1920 = vadd.f32 %v1916, %v1918
      %v1921 = vadd.f32 %v1919, %v1910
      %v1922 = vadd.f32 %v1920, %v1911
      %v1923 = vmul.f32 %v1884, %v1910
      %v1924 = vmul.f32 %v1884, %v1911
      %v1925 = vmul.f32 %v1884, %v1913
      %v1926 = vmul.f32 %v1884, %v1914
      %v1927 = vadd.f32 %v1925, %v1861
      %v1928 = vadd.f32 %v1926, %v1862
      %v1929 = vmul.f32 %v1880, %v1863
      %v1930 = vmul.f32 %v1880, %v1864
      %v1931 = vmul.f32 %v1896, %v1927
      %v1932 = vmul.f32 %v1896, %v1928
      %v1933 = vadd.f32 %v1929, %v1931
      %v1934 = vadd.f32 %v1930, %v1932
      %v1935 = vadd.f32 %v1933, %v1923
      %v1936 = vadd.f32 %v1934, %v1924
      %v1937 = vmul.f32 %v1884, %v1923
      %v1938 = vmul.f32 %v1884, %v1924
      %v1939 = vmul.f32 %v1884, %v1927
      %v1940 = vmul.f32 %v1884, %v1928
      %v1941 = vadd.f32 %v1939, %v1863
      %v1942 = vadd.f32 %v1940, %v1864
      %v1943 = vmul.f32 %v1880, %v1865
      %v1944 = vmul.f32 %v1880, %v1866
      %v1945 = vmul.f32 %v1896, %v1941
      %v1946 = vmul.f32 %v1896, %v1942
      %v1947 = vadd.f32 %v1943, %v1945
      %v1948 = vadd.f32 %v1944, %v1946
      %v1949 = vadd.f32 %v1947, %v1937
      %v1950 = vadd.f32 %v1948, %v1938
      %v1951 = vmul.f32 %v1884, %v1937
      %v1952 = vmul.f32 %v1884, %v1938
      %v1953 = vmul.f32 %v1884, %v1941
      %v1954 = vmul.f32 %v1884, %v1942
      %v1955 = vadd.f32 %v1953, %v1865
      %v1956 = vadd.f32 %v1954, %v1866
      %v1957 = vmul.f32 %v1880, %v1867
      %v1958 = vmul.f32 %v1880, %v1868
      %v1959 = vmul.f32 %v1896, %v1955
      %v1960 = vmul.f32 %v1896, %v1956
      %v1961 = vadd.f32 %v1957, %v1959
      %v1962 = vadd.f32 %v1958, %v1960
      %v1963 = vadd.f32 %v1961, %v1951
      %v1964 = vadd.f32 %v1962, %v1952
      %v1965 = vmul.f32 %v1884, %v1951
      %v1966 = vmul.f32 %v1884, %v1952
      %v1967 = vmul.f32 %v1884, %v1955
      %v1968 = vmul.f32 %v1884, %v1956
      %v1969 = vadd.f32 %v1967, %v1867
      %v1970 = vadd.f32 %v1968, %v1868
      %v1971 = vmul.f32 %v1880, %v1869
      %v1972 = vmul.f32 %v1880, %v1870
      %v1973 = vmul.f32 %v1896, %v1969
      %v1974 = vmul.f32 %v1896, %v1970
      %v1975 = vadd.f32 %v1971, %v1973
      %v1976 = vadd.f32 %v1972, %v1974
      %v1977 = vadd.f32 %v1975, %v1965
      %v1978 = vadd.f32 %v1976, %v1966
      %v1979 = vmul.f32 %v1884, %v1965
      %v1980 = vmul.f32 %v1884, %v1966
      %v1981 = vmul.f32 %v1884, %v1969
      %v1982 = vmul.f32 %v1884, %v1970
      %v1983 = vadd.f32 %v1981, %v1869
      %v1984 = vadd.f32 %v1982, %v1870
      %v1985 = vmul.f32 %v1880, %v1871
      %v1986 = vmul.f32 %v1880, %v1872
      %v1987 = vmul.f32 %v1896, %v1983
      %v1988 = vmul.f32 %v1896, %v1984
      %v1989 = vadd.f32 %v1985, %v1987
      %v1990 = vadd.f32 %v1986, %v1988
      %v1991 = vadd.f32 %v1989, %v1979
      %v1992 = vadd.f32 %v1990, %v1980
      %v1993 = vmul.f32 %v1884, %v1979
      %v1994 = vmul.f32 %v1884, %v1980
      %v1995 = vmul.f32 %v1884, %v1983
      %v1996 = vmul.f32 %v1884, %v1984
      %v1997 = vadd.f32 %v1995, %v1871
      %v1998 = vadd.f32 %v1996, %v1872
      %v1999 = vmul.f32 %v1880, %v1873
      %v2000 = vmul.f32 %v1880, %v1874
      %v2001 = vmul.f32 %v1896, %v1997
      %v2002 = vmul.f32 %v1896, %v1998
      %v2003 = vadd.f32 %v1999, %v2001
      %v2004 = vadd.f32 %v2000, %v2002
      %v2005 = vadd.f32 %v2003, %v1993
      %v2006 = vadd.f32 %v2004, %v1994
      %v2007 = vlaneseq
      %v2008 = vshrl.u32 %v2007, 7
      %v2009 = vsub.s32 3, %v2008
      %v2010 = vrot.slane %v1876, %v2009
      %v2011 = vmul.f32 %v1908, %v2010
      %v2012 = vmul.f32 %v1909, %v2010
      %v2013 = vmul.f32 %v1921, %v2010
      %v2014 = vmul.f32 %v1922, %v2010
      %v2015 = vmul.f32 %v1935, %v2010
      %v2016 = vmul.f32 %v1936, %v2010
      %v2017 = vmul.f32 %v1949, %v2010
      %v2018 = vmul.f32 %v1950, %v2010
      %v2019 = vmul.f32 %v1963, %v2010
      %v2020 = vmul.f32 %v1964, %v2010
      %v2021 = vmul.f32 %v1977, %v2010
      %v2022 = vmul.f32 %v1978, %v2010
      %v2023 = vmul.f32 %v1991, %v2010
      %v2024 = vmul.f32 %v1992, %v2010
      %v2025 = vmul.f32 %v2005, %v2010
      %v2026 = vmul.f32 %v2006, %v2010
      %v2027 = vlaneseq
      %v2028 = vshrl.u32 %v2027, 7
      %v2029 = vsub.s32 4, %v2028
      %v2030 = vrot.slane %v1876, %v2029
      %v2031 = vadd.f32 %v2011, %v2030
      %v2032 = vadd.f32 %v2012, %v2030
      %v2033 = vadd.f32 %v2013, %v2030
      %v2034 = vadd.f32 %v2014, %v2030
      %v2035 = vadd.f32 %v2015, %v2030
      %v2036 = vadd.f32 %v2016, %v2030
      %v2037 = vadd.f32 %v2017, %v2030
      %v2038 = vadd.f32 %v2018, %v2030
      %v2039 = vadd.f32 %v2019, %v2030
      %v2040 = vadd.f32 %v2020, %v2030
      %v2041 = vadd.f32 %v2021, %v2030
      %v2042 = vadd.f32 %v2022, %v2030
      %v2043 = vadd.f32 %v2023, %v2030
      %v2044 = vadd.f32 %v2024, %v2030
      %v2045 = vadd.f32 %v2025, %v2030
      %v2046 = vadd.f32 %v2026, %v2030
      %v2047 = vmax.f32 %v2031, -8.0
      %v2048 = vmax.f32 %v2032, -8.0
      %v2049 = vmax.f32 %v2033, -8.0
      %v2050 = vmax.f32 %v2034, -8.0
      %v2051 = vmax.f32 %v2035, -8.0
      %v2052 = vmax.f32 %v2036, -8.0
      %v2053 = vmax.f32 %v2037, -8.0
      %v2054 = vmax.f32 %v2038, -8.0
      %v2055 = vmax.f32 %v2039, -8.0
      %v2056 = vmax.f32 %v2040, -8.0
      %v2057 = vmax.f32 %v2041, -8.0
      %v2058 = vmax.f32 %v2042, -8.0
      %v2059 = vmax.f32 %v2043, -8.0
      %v2060 = vmax.f32 %v2044, -8.0
      %v2061 = vmax.f32 %v2045, -8.0
      %v2062 = vmax.f32 %v2046, -8.0
      %v2063 = vmin.f32 %v2047, 8.0
      %v2064 = vmin.f32 %v2048, 8.0
      %v2065 = vmin.f32 %v2049, 8.0
      %v2066 = vmin.f32 %v2050, 8.0
      %v2067 = vmin.f32 %v2051, 8.0
      %v2068 = vmin.f32 %v2052, 8.0
      %v2069 = vmin.f32 %v2053, 8.0
      %v2070 = vmin.f32 %v2054, 8.0
      %v2071 = vmin.f32 %v2055, 8.0
      %v2072 = vmin.f32 %v2056, 8.0
      %v2073 = vmin.f32 %v2057, 8.0
      %v2074 = vmin.f32 %v2058, 8.0
      %v2075 = vmin.f32 %v2059, 8.0
      %v2076 = vmin.f32 %v2060, 8.0
      %v2077 = vmin.f32 %v2061, 8.0
      %v2078 = vmin.f32 %v2062, 8.0
      %s2079 = scalar_lea.vmem %s4, 8
      %v2080 = vld [vmem:[%s2079] sm:$0x3f]
      %v2081 = vlaneseq
      %v2082 = vshrl.u32 %v2081, 7
      %v2083 = vsub.s32 2, %v2082
      %v2084 = vrot.slane %v2080, %v2083
      %v2085 = vmul.f32 %v2084, %v2063
      %v2086 = vmul.f32 %v2084, %v2064
      %v2087 = vmul.f32 %v2084, %v2065
      %v2088 = vmul.f32 %v2084, %v2066
      %v2089 = vmul.f32 %v2084, %v2067
      %v2090 = vmul.f32 %v2084, %v2068
      %v2091 = vmul.f32 %v2084, %v2069
      %v2092 = vmul.f32 %v2084, %v2070
      %v2093 = vmul.f32 %v2084, %v2071
      %v2094 = vmul.f32 %v2084, %v2072
      %v2095 = vmul.f32 %v2084, %v2073
      %v2096 = vmul.f32 %v2084, %v2074
      %v2097 = vmul.f32 %v2084, %v2075
      %v2098 = vmul.f32 %v2084, %v2076
      %v2099 = vmul.f32 %v2084, %v2077
      %v2100 = vmul.f32 %v2084, %v2078
      %v2101 = vlaneseq
      %v2102 = vshrl.u32 %v2101, 7
      %v2103 = vsub.s32 5, %v2102
      %v2104 = vrot.slane %v2080, %v2103
      %v2105 = vadd.f32 %v2085, %v2104
      %v2106 = vadd.f32 %v2086, %v2104
      %v2107 = vadd.f32 %v2087, %v2104
      %v2108 = vadd.f32 %v2088, %v2104
      %v2109 = vadd.f32 %v2089, %v2104
      %v2110 = vadd.f32 %v2090, %v2104
      %v2111 = vadd.f32 %v2091, %v2104
      %v2112 = vadd.f32 %v2092, %v2104
      %v2113 = vadd.f32 %v2093, %v2104
      %v2114 = vadd.f32 %v2094, %v2104
      %v2115 = vadd.f32 %v2095, %v2104
      %v2116 = vadd.f32 %v2096, %v2104
      %v2117 = vadd.f32 %v2097, %v2104
      %v2118 = vadd.f32 %v2098, %v2104
      %v2119 = vadd.f32 %v2099, %v2104
      %v2120 = vadd.f32 %v2100, %v2104
      %v2121 = vrot.slane %v2063, 6
      %v2122 = vrot.slane %v2064, 6
      %v2123 = vrot.slane %v2065, 6
      %v2124 = vrot.slane %v2066, 6
      %v2125 = vrot.slane %v2067, 6
      %v2126 = vrot.slane %v2068, 6
      %v2127 = vrot.slane %v2069, 6
      %v2128 = vrot.slane %v2070, 6
      %v2129 = vrot.slane %v2071, 6
      %v2130 = vrot.slane %v2072, 6
      %v2131 = vrot.slane %v2073, 6
      %v2132 = vrot.slane %v2074, 6
      %v2133 = vrot.slane %v2075, 6
      %v2134 = vrot.slane %v2076, 6
      %v2135 = vrot.slane %v2077, 6
      %v2136 = vrot.slane %v2078, 6
      %v2137 = vsel %vm1207, %v2135, %v2136
      %v2138 = vsel %vm1207, %v2134, %v2135
      %v2139 = vsel %vm1207, %v2133, %v2134
      %v2140 = vsel %vm1207, %v2132, %v2133
      %v2141 = vsel %vm1207, %v2131, %v2132
      %v2142 = vsel %vm1207, %v2130, %v2131
      %v2143 = vsel %vm1207, %v2129, %v2130
      %v2144 = vsel %vm1207, %v2128, %v2129
      %v2145 = vsel %vm1207, %v2127, %v2128
      %v2146 = vsel %vm1207, %v2126, %v2127
      %v2147 = vsel %vm1207, %v2125, %v2126
      %v2148 = vsel %vm1207, %v2124, %v2125
      %v2149 = vsel %vm1207, %v2123, %v2124
      %v2150 = vsel %vm1207, %v2122, %v2123
      %v2151 = vsel %vm1207, %v2121, %v2122
      %v2152 = vsel %vm1207, %v2136, %v2121
      %v2153 = vlaneseq
      %v2154 = vshrl.u32 %v2153, 7
      %v2155 = vsub.s32 0, %v2154
      %v2156 = vrot.slane %v2080, %v2155
      %v2157 = vmul.f32 %v2156, %v2152
      %v2158 = vmul.f32 %v2156, %v2151
      %v2159 = vmul.f32 %v2156, %v2150
      %v2160 = vmul.f32 %v2156, %v2149
      %v2161 = vmul.f32 %v2156, %v2148
      %v2162 = vmul.f32 %v2156, %v2147
      %v2163 = vmul.f32 %v2156, %v2146
      %v2164 = vmul.f32 %v2156, %v2145
      %v2165 = vmul.f32 %v2156, %v2144
      %v2166 = vmul.f32 %v2156, %v2143
      %v2167 = vmul.f32 %v2156, %v2142
      %v2168 = vmul.f32 %v2156, %v2141
      %v2169 = vmul.f32 %v2156, %v2140
      %v2170 = vmul.f32 %v2156, %v2139
      %v2171 = vmul.f32 %v2156, %v2138
      %v2172 = vmul.f32 %v2156, %v2137
      %v2173 = vsel %vm1260, %v2157, 0.0
      %v2174 = vsel %vm1261, %v2158, 0.0
      %v2175 = vsel %vm1262, %v2159, 0.0
      %v2176 = vsel %vm1263, %v2160, 0.0
      %v2177 = vsel %vm1264, %v2161, 0.0
      %v2178 = vsel %vm1265, %v2162, 0.0
      %v2179 = vsel %vm1266, %v2163, 0.0
      %v2180 = vsel %vm1267, %v2164, 0.0
      %v2181 = vsel %vm1268, %v2165, 0.0
      %v2182 = vsel %vm1269, %v2166, 0.0
      %v2183 = vsel %vm1270, %v2167, 0.0
      %v2184 = vsel %vm1271, %v2168, 0.0
      %v2185 = vsel %vm1272, %v2169, 0.0
      %v2186 = vsel %vm1273, %v2170, 0.0
      %v2187 = vsel %vm1274, %v2171, 0.0
      %v2188 = vsel %vm1275, %v2172, 0.0
      %v2189 = vadd.f32 %v2105, %v2173
      %v2190 = vadd.f32 %v2106, %v2174
      %v2191 = vadd.f32 %v2107, %v2175
      %v2192 = vadd.f32 %v2108, %v2176
      %v2193 = vadd.f32 %v2109, %v2177
      %v2194 = vadd.f32 %v2110, %v2178
      %v2195 = vadd.f32 %v2111, %v2179
      %v2196 = vadd.f32 %v2112, %v2180
      %v2197 = vadd.f32 %v2113, %v2181
      %v2198 = vadd.f32 %v2114, %v2182
      %v2199 = vadd.f32 %v2115, %v2183
      %v2200 = vadd.f32 %v2116, %v2184
      %v2201 = vadd.f32 %v2117, %v2185
      %v2202 = vadd.f32 %v2118, %v2186
      %v2203 = vadd.f32 %v2119, %v2187
      %v2204 = vadd.f32 %v2120, %v2188
      %v2205 = vrot.slane %v2063, 7
      %v2206 = vrot.slane %v2064, 7
      %v2207 = vrot.slane %v2065, 7
      %v2208 = vrot.slane %v2066, 7
      %v2209 = vrot.slane %v2067, 7
      %v2210 = vrot.slane %v2068, 7
      %v2211 = vrot.slane %v2069, 7
      %v2212 = vrot.slane %v2070, 7
      %v2213 = vrot.slane %v2071, 7
      %v2214 = vrot.slane %v2072, 7
      %v2215 = vrot.slane %v2073, 7
      %v2216 = vrot.slane %v2074, 7
      %v2217 = vrot.slane %v2075, 7
      %v2218 = vrot.slane %v2076, 7
      %v2219 = vrot.slane %v2077, 7
      %v2220 = vrot.slane %v2078, 7
      %v2221 = vsel %vm1324, %v2219, %v2220
      %v2222 = vsel %vm1324, %v2218, %v2219
      %v2223 = vsel %vm1324, %v2217, %v2218
      %v2224 = vsel %vm1324, %v2216, %v2217
      %v2225 = vsel %vm1324, %v2215, %v2216
      %v2226 = vsel %vm1324, %v2214, %v2215
      %v2227 = vsel %vm1324, %v2213, %v2214
      %v2228 = vsel %vm1324, %v2212, %v2213
      %v2229 = vsel %vm1324, %v2211, %v2212
      %v2230 = vsel %vm1324, %v2210, %v2211
      %v2231 = vsel %vm1324, %v2209, %v2210
      %v2232 = vsel %vm1324, %v2208, %v2209
      %v2233 = vsel %vm1324, %v2207, %v2208
      %v2234 = vsel %vm1324, %v2206, %v2207
      %v2235 = vsel %vm1324, %v2205, %v2206
      %v2236 = vsel %vm1324, %v2220, %v2205
      %v2237 = vlaneseq
      %v2238 = vshrl.u32 %v2237, 7
      %v2239 = vsub.s32 1, %v2238
      %v2240 = vrot.slane %v2080, %v2239
      %v2241 = vmul.f32 %v2240, %v2236
      %v2242 = vmul.f32 %v2240, %v2235
      %v2243 = vmul.f32 %v2240, %v2234
      %v2244 = vmul.f32 %v2240, %v2233
      %v2245 = vmul.f32 %v2240, %v2232
      %v2246 = vmul.f32 %v2240, %v2231
      %v2247 = vmul.f32 %v2240, %v2230
      %v2248 = vmul.f32 %v2240, %v2229
      %v2249 = vmul.f32 %v2240, %v2228
      %v2250 = vmul.f32 %v2240, %v2227
      %v2251 = vmul.f32 %v2240, %v2226
      %v2252 = vmul.f32 %v2240, %v2225
      %v2253 = vmul.f32 %v2240, %v2224
      %v2254 = vmul.f32 %v2240, %v2223
      %v2255 = vmul.f32 %v2240, %v2222
      %v2256 = vmul.f32 %v2240, %v2221
      %v2257 = vsel %vm1377, %v2241, 0.0
      %v2258 = vsel %vm1378, %v2242, 0.0
      %v2259 = vsel %vm1379, %v2243, 0.0
      %v2260 = vsel %vm1380, %v2244, 0.0
      %v2261 = vsel %vm1381, %v2245, 0.0
      %v2262 = vsel %vm1382, %v2246, 0.0
      %v2263 = vsel %vm1383, %v2247, 0.0
      %v2264 = vsel %vm1384, %v2248, 0.0
      %v2265 = vsel %vm1385, %v2249, 0.0
      %v2266 = vsel %vm1386, %v2250, 0.0
      %v2267 = vsel %vm1387, %v2251, 0.0
      %v2268 = vsel %vm1388, %v2252, 0.0
      %v2269 = vsel %vm1389, %v2253, 0.0
      %v2270 = vsel %vm1390, %v2254, 0.0
      %v2271 = vsel %vm1391, %v2255, 0.0
      %v2272 = vsel %vm1392, %v2256, 0.0
      %v2273 = vadd.f32 %v2189, %v2257
      %v2274 = vadd.f32 %v2190, %v2258
      %v2275 = vadd.f32 %v2191, %v2259
      %v2276 = vadd.f32 %v2192, %v2260
      %v2277 = vadd.f32 %v2193, %v2261
      %v2278 = vadd.f32 %v2194, %v2262
      %v2279 = vadd.f32 %v2195, %v2263
      %v2280 = vadd.f32 %v2196, %v2264
      %v2281 = vadd.f32 %v2197, %v2265
      %v2282 = vadd.f32 %v2198, %v2266
      %v2283 = vadd.f32 %v2199, %v2267
      %v2284 = vadd.f32 %v2200, %v2268
      %v2285 = vadd.f32 %v2201, %v2269
      %v2286 = vadd.f32 %v2202, %v2270
      %v2287 = vadd.f32 %v2203, %v2271
      %v2288 = vadd.f32 %v2204, %v2272
      %v2289 = vrot.slane %v2063, 1
      %v2290 = vrot.slane %v2064, 1
      %v2291 = vrot.slane %v2065, 1
      %v2292 = vrot.slane %v2066, 1
      %v2293 = vrot.slane %v2067, 1
      %v2294 = vrot.slane %v2068, 1
      %v2295 = vrot.slane %v2069, 1
      %v2296 = vrot.slane %v2070, 1
      %v2297 = vrot.slane %v2071, 1
      %v2298 = vrot.slane %v2072, 1
      %v2299 = vrot.slane %v2073, 1
      %v2300 = vrot.slane %v2074, 1
      %v2301 = vrot.slane %v2075, 1
      %v2302 = vrot.slane %v2076, 1
      %v2303 = vrot.slane %v2077, 1
      %v2304 = vrot.slane %v2078, 1
      %v2305 = vsel %vm1441, %v2303, %v2304
      %v2306 = vsel %vm1441, %v2302, %v2303
      %v2307 = vsel %vm1441, %v2301, %v2302
      %v2308 = vsel %vm1441, %v2300, %v2301
      %v2309 = vsel %vm1441, %v2299, %v2300
      %v2310 = vsel %vm1441, %v2298, %v2299
      %v2311 = vsel %vm1441, %v2297, %v2298
      %v2312 = vsel %vm1441, %v2296, %v2297
      %v2313 = vsel %vm1441, %v2295, %v2296
      %v2314 = vsel %vm1441, %v2294, %v2295
      %v2315 = vsel %vm1441, %v2293, %v2294
      %v2316 = vsel %vm1441, %v2292, %v2293
      %v2317 = vsel %vm1441, %v2291, %v2292
      %v2318 = vsel %vm1441, %v2290, %v2291
      %v2319 = vsel %vm1441, %v2289, %v2290
      %v2320 = vsel %vm1441, %v2304, %v2289
      %v2321 = vlaneseq
      %v2322 = vshrl.u32 %v2321, 7
      %v2323 = vsub.s32 3, %v2322
      %v2324 = vrot.slane %v2080, %v2323
      %v2325 = vmul.f32 %v2324, %v2319
      %v2326 = vmul.f32 %v2324, %v2318
      %v2327 = vmul.f32 %v2324, %v2317
      %v2328 = vmul.f32 %v2324, %v2316
      %v2329 = vmul.f32 %v2324, %v2315
      %v2330 = vmul.f32 %v2324, %v2314
      %v2331 = vmul.f32 %v2324, %v2313
      %v2332 = vmul.f32 %v2324, %v2312
      %v2333 = vmul.f32 %v2324, %v2311
      %v2334 = vmul.f32 %v2324, %v2310
      %v2335 = vmul.f32 %v2324, %v2309
      %v2336 = vmul.f32 %v2324, %v2308
      %v2337 = vmul.f32 %v2324, %v2307
      %v2338 = vmul.f32 %v2324, %v2306
      %v2339 = vmul.f32 %v2324, %v2305
      %v2340 = vmul.f32 %v2324, %v2320
      %v2341 = vsel %vm1494, %v2325, 0.0
      %v2342 = vsel %vm1495, %v2326, 0.0
      %v2343 = vsel %vm1496, %v2327, 0.0
      %v2344 = vsel %vm1497, %v2328, 0.0
      %v2345 = vsel %vm1498, %v2329, 0.0
      %v2346 = vsel %vm1499, %v2330, 0.0
      %v2347 = vsel %vm1500, %v2331, 0.0
      %v2348 = vsel %vm1501, %v2332, 0.0
      %v2349 = vsel %vm1502, %v2333, 0.0
      %v2350 = vsel %vm1503, %v2334, 0.0
      %v2351 = vsel %vm1504, %v2335, 0.0
      %v2352 = vsel %vm1505, %v2336, 0.0
      %v2353 = vsel %vm1506, %v2337, 0.0
      %v2354 = vsel %vm1507, %v2338, 0.0
      %v2355 = vsel %vm1508, %v2339, 0.0
      %v2356 = vsel %vm1509, %v2340, 0.0
      %v2357 = vadd.f32 %v2273, %v2341
      %v2358 = vadd.f32 %v2274, %v2342
      %v2359 = vadd.f32 %v2275, %v2343
      %v2360 = vadd.f32 %v2276, %v2344
      %v2361 = vadd.f32 %v2277, %v2345
      %v2362 = vadd.f32 %v2278, %v2346
      %v2363 = vadd.f32 %v2279, %v2347
      %v2364 = vadd.f32 %v2280, %v2348
      %v2365 = vadd.f32 %v2281, %v2349
      %v2366 = vadd.f32 %v2282, %v2350
      %v2367 = vadd.f32 %v2283, %v2351
      %v2368 = vadd.f32 %v2284, %v2352
      %v2369 = vadd.f32 %v2285, %v2353
      %v2370 = vadd.f32 %v2286, %v2354
      %v2371 = vadd.f32 %v2287, %v2355
      %v2372 = vadd.f32 %v2288, %v2356
      %v2373 = vrot.slane %v2063, 2
      %v2374 = vrot.slane %v2064, 2
      %v2375 = vrot.slane %v2065, 2
      %v2376 = vrot.slane %v2066, 2
      %v2377 = vrot.slane %v2067, 2
      %v2378 = vrot.slane %v2068, 2
      %v2379 = vrot.slane %v2069, 2
      %v2380 = vrot.slane %v2070, 2
      %v2381 = vrot.slane %v2071, 2
      %v2382 = vrot.slane %v2072, 2
      %v2383 = vrot.slane %v2073, 2
      %v2384 = vrot.slane %v2074, 2
      %v2385 = vrot.slane %v2075, 2
      %v2386 = vrot.slane %v2076, 2
      %v2387 = vrot.slane %v2077, 2
      %v2388 = vrot.slane %v2078, 2
      %v2389 = vsel %vm1558, %v2387, %v2388
      %v2390 = vsel %vm1558, %v2386, %v2387
      %v2391 = vsel %vm1558, %v2385, %v2386
      %v2392 = vsel %vm1558, %v2384, %v2385
      %v2393 = vsel %vm1558, %v2383, %v2384
      %v2394 = vsel %vm1558, %v2382, %v2383
      %v2395 = vsel %vm1558, %v2381, %v2382
      %v2396 = vsel %vm1558, %v2380, %v2381
      %v2397 = vsel %vm1558, %v2379, %v2380
      %v2398 = vsel %vm1558, %v2378, %v2379
      %v2399 = vsel %vm1558, %v2377, %v2378
      %v2400 = vsel %vm1558, %v2376, %v2377
      %v2401 = vsel %vm1558, %v2375, %v2376
      %v2402 = vsel %vm1558, %v2374, %v2375
      %v2403 = vsel %vm1558, %v2373, %v2374
      %v2404 = vsel %vm1558, %v2388, %v2373
      %v2405 = vlaneseq
      %v2406 = vshrl.u32 %v2405, 7
      %v2407 = vsub.s32 4, %v2406
      %v2408 = vrot.slane %v2080, %v2407
      %v2409 = vmul.f32 %v2408, %v2403
      %v2410 = vmul.f32 %v2408, %v2402
      %v2411 = vmul.f32 %v2408, %v2401
      %v2412 = vmul.f32 %v2408, %v2400
      %v2413 = vmul.f32 %v2408, %v2399
      %v2414 = vmul.f32 %v2408, %v2398
      %v2415 = vmul.f32 %v2408, %v2397
      %v2416 = vmul.f32 %v2408, %v2396
      %v2417 = vmul.f32 %v2408, %v2395
      %v2418 = vmul.f32 %v2408, %v2394
      %v2419 = vmul.f32 %v2408, %v2393
      %v2420 = vmul.f32 %v2408, %v2392
      %v2421 = vmul.f32 %v2408, %v2391
      %v2422 = vmul.f32 %v2408, %v2390
      %v2423 = vmul.f32 %v2408, %v2389
      %v2424 = vmul.f32 %v2408, %v2404
      %v2425 = vsel %vm1611, %v2409, 0.0
      %v2426 = vsel %vm1612, %v2410, 0.0
      %v2427 = vsel %vm1613, %v2411, 0.0
      %v2428 = vsel %vm1614, %v2412, 0.0
      %v2429 = vsel %vm1615, %v2413, 0.0
      %v2430 = vsel %vm1616, %v2414, 0.0
      %v2431 = vsel %vm1617, %v2415, 0.0
      %v2432 = vsel %vm1618, %v2416, 0.0
      %v2433 = vsel %vm1619, %v2417, 0.0
      %v2434 = vsel %vm1620, %v2418, 0.0
      %v2435 = vsel %vm1621, %v2419, 0.0
      %v2436 = vsel %vm1622, %v2420, 0.0
      %v2437 = vsel %vm1623, %v2421, 0.0
      %v2438 = vsel %vm1624, %v2422, 0.0
      %v2439 = vsel %vm1625, %v2423, 0.0
      %v2440 = vsel %vm1626, %v2424, 0.0
      %v2441 = vadd.f32 %v2357, %v2425
      %v2442 = vadd.f32 %v2358, %v2426
      %v2443 = vadd.f32 %v2359, %v2427
      %v2444 = vadd.f32 %v2360, %v2428
      %v2445 = vadd.f32 %v2361, %v2429
      %v2446 = vadd.f32 %v2362, %v2430
      %v2447 = vadd.f32 %v2363, %v2431
      %v2448 = vadd.f32 %v2364, %v2432
      %v2449 = vadd.f32 %v2365, %v2433
      %v2450 = vadd.f32 %v2366, %v2434
      %v2451 = vadd.f32 %v2367, %v2435
      %v2452 = vadd.f32 %v2368, %v2436
      %v2453 = vadd.f32 %v2369, %v2437
      %v2454 = vadd.f32 %v2370, %v2438
      %v2455 = vadd.f32 %v2371, %v2439
      %v2456 = vadd.f32 %v2372, %v2440
      %v2457 = vmax.f32 %v2441, -8.0
      %v2458 = vmax.f32 %v2442, -8.0
      %v2459 = vmax.f32 %v2443, -8.0
      %v2460 = vmax.f32 %v2444, -8.0
      %v2461 = vmax.f32 %v2445, -8.0
      %v2462 = vmax.f32 %v2446, -8.0
      %v2463 = vmax.f32 %v2447, -8.0
      %v2464 = vmax.f32 %v2448, -8.0
      %v2465 = vmax.f32 %v2449, -8.0
      %v2466 = vmax.f32 %v2450, -8.0
      %v2467 = vmax.f32 %v2451, -8.0
      %v2468 = vmax.f32 %v2452, -8.0
      %v2469 = vmax.f32 %v2453, -8.0
      %v2470 = vmax.f32 %v2454, -8.0
      %v2471 = vmax.f32 %v2455, -8.0
      %v2472 = vmax.f32 %v2456, -8.0
      %v2473 = vmin.f32 %v2457, 8.0
      %v2474 = vmin.f32 %v2458, 8.0
      %v2475 = vmin.f32 %v2459, 8.0
      %v2476 = vmin.f32 %v2460, 8.0
      %v2477 = vmin.f32 %v2461, 8.0
      %v2478 = vmin.f32 %v2462, 8.0
      %v2479 = vmin.f32 %v2463, 8.0
      %v2480 = vmin.f32 %v2464, 8.0
      %v2481 = vmin.f32 %v2465, 8.0
      %v2482 = vmin.f32 %v2466, 8.0
      %v2483 = vmin.f32 %v2467, 8.0
      %v2484 = vmin.f32 %v2468, 8.0
      %v2485 = vmin.f32 %v2469, 8.0
      %v2486 = vmin.f32 %v2470, 8.0
      %v2487 = vmin.f32 %v2471, 8.0
      %v2488 = vmin.f32 %v2472, 8.0
      %s2489 = scalar_lea.vmem %s5, 128
      %v2490 = vld [vmem:[%s2489] sm:$0xff]
      %v2491 = vld [vmem:[%s2489 + $0x8] sm:$0xff]
      %v2492 = vld [vmem:[%s2489 + $0x10] sm:$0xff]
      %v2493 = vld [vmem:[%s2489 + $0x18] sm:$0xff]
      %v2494 = vld [vmem:[%s2489 + $0x20] sm:$0xff]
      %v2495 = vld [vmem:[%s2489 + $0x28] sm:$0xff]
      %v2496 = vld [vmem:[%s2489 + $0x30] sm:$0xff]
      %v2497 = vld [vmem:[%s2489 + $0x38] sm:$0xff]
      %v2498 = vld [vmem:[%s2489 + $0x40] sm:$0xff]
      %v2499 = vld [vmem:[%s2489 + $0x48] sm:$0xff]
      %v2500 = vld [vmem:[%s2489 + $0x50] sm:$0xff]
      %v2501 = vld [vmem:[%s2489 + $0x58] sm:$0xff]
      %v2502 = vld [vmem:[%s2489 + $0x60] sm:$0xff]
      %v2503 = vld [vmem:[%s2489 + $0x68] sm:$0xff]
      %v2504 = vld [vmem:[%s2489 + $0x70] sm:$0xff]
      %v2505 = vld [vmem:[%s2489 + $0x78] sm:$0xff]
      %s2506 = scalar_lea.vmem %s6, 1
      %v2507 = vld [vmem:[%s2506] sm:$0x1]
      %v2509 = vlaneseq
      %v2510 = vshrl.u32 %v2509, 7
      %v2511 = vsub.s32 0, %v2510
      %v2512 = vrot.slane %v2507, %v2511
      %2514 = vmatprep.subr.mxu0 0.0
      %2515 = vmatpush1.msra.mxu0 %v2505
      %2516 = vmatprep.subr.mxu0 0.0
      %2517 = vmatpush1.msra.mxu0 %v2504
      %2518 = vmatprep.subr.mxu0 0.0
      %2519 = vmatpush1.msra.mxu0 %v2503
      %2520 = vmatprep.subr.mxu0 0.0
      %2521 = vmatpush1.msra.mxu0 %v2502
      %2522 = vmatprep.subr.mxu0 0.0
      %2523 = vmatpush1.msra.mxu0 %v2501
      %2524 = vmatprep.subr.mxu0 0.0
      %2525 = vmatpush1.msra.mxu0 %v2500
      %2526 = vmatprep.subr.mxu0 0.0
      %2527 = vmatpush1.msra.mxu0 %v2499
      %2528 = vmatprep.subr.mxu0 0.0
      %2529 = vmatpush1.msra.mxu0 %v2498
      %2530 = vmatprep.subr.mxu0 0.0
      %2531 = vmatpush1.msra.mxu0 %v2497
      %2532 = vmatprep.subr.mxu0 0.0
      %2533 = vmatpush1.msra.mxu0 %v2496
      %2534 = vmatprep.subr.mxu0 0.0
      %2535 = vmatpush1.msra.mxu0 %v2495
      %2536 = vmatprep.subr.mxu0 0.0
      %2537 = vmatpush1.msra.mxu0 %v2494
      %2538 = vmatprep.subr.mxu0 0.0
      %2539 = vmatpush1.msra.mxu0 %v2493
      %2540 = vmatprep.subr.mxu0 0.0
      %2541 = vmatpush1.msra.mxu0 %v2492
      %2542 = vmatprep.subr.mxu0 0.0
      %2543 = vmatpush1.msra.mxu0 %v2491
      %2544 = vmatprep.subr.mxu0 0.0
      %2545 = vmatpush1.msra.mxu0 %v2490
      %2546 = vmatprep.subr.mxu0 0.0
      %2547 = vmatpush2.msra.mxu0 0.0
      %2548 = vmatprep.subr.mxu0 0.0
      %2549 = vmatpush2.msra.mxu0 0.0
      %2550 = vmatprep.subr.mxu0 0.0
      %2551 = vmatpush2.msra.mxu0 0.0
      %2552 = vmatprep.subr.mxu0 0.0
      %2553 = vmatpush2.msra.mxu0 0.0
      %2554 = vmatprep.subr.mxu0 0.0
      %2555 = vmatpush2.msra.mxu0 0.0
      %2556 = vmatprep.subr.mxu0 0.0
      %2557 = vmatpush2.msra.mxu0 0.0
      %2558 = vmatprep.subr.mxu0 0.0
      %2559 = vmatpush2.msra.mxu0 0.0
      %2560 = vmatprep.subr.mxu0 0.0
      %2561 = vmatpush2.msra.mxu0 0.0
      %2562 = vmatprep.subr.mxu0 0.0
      %2563 = vmatpush2.msra.mxu0 0.0
      %2564 = vmatprep.subr.mxu0 0.0
      %2565 = vmatpush2.msra.mxu0 0.0
      %2566 = vmatprep.subr.mxu0 0.0
      %2567 = vmatpush2.msra.mxu0 0.0
      %2568 = vmatprep.subr.mxu0 0.0
      %2569 = vmatpush2.msra.mxu0 0.0
      %2570 = vmatprep.subr.mxu0 0.0
      %2571 = vmatpush2.msra.mxu0 0.0
      %2572 = vmatprep.subr.mxu0 0.0
      %2573 = vmatpush2.msra.mxu0 0.0
      %2574 = vmatprep.subr.mxu0 0.0
      %2575 = vmatpush2.msra.mxu0 0.0
      %2576 = vmatprep.subr.mxu0 0.0
      %2577 = vmatpush2.msra.mxu0 0.0
      %2578 = vmatprep.mubr.f32.mxu0 0.0
      %2579 = vmatmul.mubr.f32.gmra.mxu0 %v2473
      %v2580 = vpop.f32.mrf.mxu0
      %v2581 = vadd.f32 %v2512, %v2580
      %v2582 = vpop.f32.mrf.mxu0
      %2583 = vmatprep.mubr.f32.mxu0 0.0
      %2584 = vmatmul.mubr.f32.gmra.mxu0 %v2474
      %v2585 = vpop.f32.mrf.mxu0
      %v2586 = vadd.f32 %v2512, %v2585
      %v2587 = vpop.f32.mrf.mxu0
      %2588 = vmatprep.mubr.f32.mxu0 0.0
      %2589 = vmatmul.mubr.f32.gmra.mxu0 %v2475
      %v2590 = vpop.f32.mrf.mxu0
      %v2591 = vadd.f32 %v2512, %v2590
      %v2592 = vpop.f32.mrf.mxu0
      %2593 = vmatprep.mubr.f32.mxu0 0.0
      %2594 = vmatmul.mubr.f32.gmra.mxu0 %v2476
      %v2595 = vpop.f32.mrf.mxu0
      %v2596 = vadd.f32 %v2512, %v2595
      %v2597 = vpop.f32.mrf.mxu0
      %2598 = vmatprep.mubr.f32.mxu0 0.0
      %2599 = vmatmul.mubr.f32.gmra.mxu0 %v2477
      %v2600 = vpop.f32.mrf.mxu0
      %v2601 = vadd.f32 %v2512, %v2600
      %v2602 = vpop.f32.mrf.mxu0
      %2603 = vmatprep.mubr.f32.mxu0 0.0
      %2604 = vmatmul.mubr.f32.gmra.mxu0 %v2478
      %v2605 = vpop.f32.mrf.mxu0
      %v2606 = vadd.f32 %v2512, %v2605
      %v2607 = vpop.f32.mrf.mxu0
      %2608 = vmatprep.mubr.f32.mxu0 0.0
      %2609 = vmatmul.mubr.f32.gmra.mxu0 %v2479
      %v2610 = vpop.f32.mrf.mxu0
      %v2611 = vadd.f32 %v2512, %v2610
      %v2612 = vpop.f32.mrf.mxu0
      %2613 = vmatprep.mubr.f32.mxu0 0.0
      %2614 = vmatmul.mubr.f32.gmra.mxu0 %v2480
      %v2615 = vpop.f32.mrf.mxu0
      %v2616 = vadd.f32 %v2512, %v2615
      %v2617 = vpop.f32.mrf.mxu0
      %2618 = vmatprep.mubr.f32.mxu0 0.0
      %2619 = vmatmul.mubr.f32.gmra.mxu0 %v2481
      %v2620 = vpop.f32.mrf.mxu0
      %v2621 = vadd.f32 %v2512, %v2620
      %v2622 = vpop.f32.mrf.mxu0
      %2623 = vmatprep.mubr.f32.mxu0 0.0
      %2624 = vmatmul.mubr.f32.gmra.mxu0 %v2482
      %v2625 = vpop.f32.mrf.mxu0
      %v2626 = vadd.f32 %v2512, %v2625
      %v2627 = vpop.f32.mrf.mxu0
      %2628 = vmatprep.mubr.f32.mxu0 0.0
      %2629 = vmatmul.mubr.f32.gmra.mxu0 %v2483
      %v2630 = vpop.f32.mrf.mxu0
      %v2631 = vadd.f32 %v2512, %v2630
      %v2632 = vpop.f32.mrf.mxu0
      %2633 = vmatprep.mubr.f32.mxu0 0.0
      %2634 = vmatmul.mubr.f32.gmra.mxu0 %v2484
      %v2635 = vpop.f32.mrf.mxu0
      %v2636 = vadd.f32 %v2512, %v2635
      %v2637 = vpop.f32.mrf.mxu0
      %2638 = vmatprep.mubr.f32.mxu0 0.0
      %2639 = vmatmul.mubr.f32.gmra.mxu0 %v2485
      %v2640 = vpop.f32.mrf.mxu0
      %v2641 = vadd.f32 %v2512, %v2640
      %v2642 = vpop.f32.mrf.mxu0
      %2643 = vmatprep.mubr.f32.mxu0 0.0
      %2644 = vmatmul.mubr.f32.gmra.mxu0 %v2486
      %v2645 = vpop.f32.mrf.mxu0
      %v2646 = vadd.f32 %v2512, %v2645
      %v2647 = vpop.f32.mrf.mxu0
      %2648 = vmatprep.mubr.f32.mxu0 0.0
      %2649 = vmatmul.mubr.f32.gmra.mxu0 %v2487
      %v2650 = vpop.f32.mrf.mxu0
      %v2651 = vadd.f32 %v2512, %v2650
      %v2652 = vpop.f32.mrf.mxu0
      %2653 = vmatprep.mubr.f32.mxu0 0.0
      %2654 = vmatmul.mubr.f32.gmra.mxu0 %v2488
      %v2655 = vpop.f32.mrf.mxu0
      %v2656 = vadd.f32 %v2512, %v2655
      %v2657 = vpop.f32.mrf.mxu0
      %2658 = vdwg.mxu0
      %v2659 = vmax.f32 %v2581, 0.0
      %v2660 = vmax.f32 %v2586, 0.0
      %v2661 = vmax.f32 %v2591, 0.0
      %v2662 = vmax.f32 %v2596, 0.0
      %v2663 = vmax.f32 %v2601, 0.0
      %v2664 = vmax.f32 %v2606, 0.0
      %v2665 = vmax.f32 %v2611, 0.0
      %v2666 = vmax.f32 %v2616, 0.0
      %v2667 = vmax.f32 %v2621, 0.0
      %v2668 = vmax.f32 %v2626, 0.0
      %v2669 = vmax.f32 %v2631, 0.0
      %v2670 = vmax.f32 %v2636, 0.0
      %v2671 = vmax.f32 %v2641, 0.0
      %v2672 = vmax.f32 %v2646, 0.0
      %v2673 = vmax.f32 %v2651, 0.0
      %v2674 = vmax.f32 %v2656, 0.0
      %v2675 = vadd.f32 %v931, %v2659
      %v2676 = vadd.f32 %v932, %v2660
      %v2677 = vadd.f32 %v933, %v2661
      %v2678 = vadd.f32 %v934, %v2662
      %v2679 = vadd.f32 %v935, %v2663
      %v2680 = vadd.f32 %v936, %v2664
      %v2681 = vadd.f32 %v937, %v2665
      %v2682 = vadd.f32 %v938, %v2666
      %v2683 = vadd.f32 %v939, %v2667
      %v2684 = vadd.f32 %v940, %v2668
      %v2685 = vadd.f32 %v941, %v2669
      %v2686 = vadd.f32 %v942, %v2670
      %v2687 = vadd.f32 %v943, %v2671
      %v2688 = vadd.f32 %v944, %v2672
      %v2689 = vadd.f32 %v945, %v2673
      %v2690 = vadd.f32 %v946, %v2674
      %s2691 = scalar_lea.vmem %s3, 16
      %v2692 = vld [vmem:[%s2691] sm:$0x1f]
      %v2693 = vlaneseq
      %v2694 = vshrl.u32 %v2693, 7
      %v2695 = vsub.s32 0, %v2694
      %v2696 = vrot.slane %v2692, %v2695
      %v2697 = vlaneseq
      %v2698 = vshrl.u32 %v2697, 7
      %v2699 = vsub.s32 2, %v2698
      %v2700 = vrot.slane %v2692, %v2699
      %v2702 = vrot.slane %v2692, 6
      %v2704 = vmul.f32 %v2692, %v2702
      %v2706 = vrot.slane %v2704, 1
      %v2708 = vadd.f32 %v2692, %v2706
      %v2709 = vlaneseq
      %v2710 = vshrl.u32 %v2709, 7
      %v2711 = vsub.s32 1, %v2710
      %v2712 = vrot.slane %v2708, %v2711
      %v2713 = vrot.slane %v2692, 1
      %v2715 = vadd.f32 %v2692, %v2713
      %v2716 = vlaneseq
      %v2717 = vshrl.u32 %v2716, 7
      %v2718 = vsub.s32 1, %v2717
      %v2719 = vrot.slane %v2715, %v2718
      %v2720 = vmul.f32 %v2719, %v2675
      %v2721 = vmul.f32 %v2719, %v2676
      %v2722 = vmul.f32 %v2696, %v2675
      %v2723 = vmul.f32 %v2696, %v2676
      %v2724 = vadd.f32 %v2722, %v2720
      %v2725 = vadd.f32 %v2723, %v2721
      %v2726 = vmul.f32 %v2700, %v2720
      %v2727 = vmul.f32 %v2700, %v2721
      %v2728 = vmul.f32 %v2700, 0.0
      %v2729 = vadd.f32 %v2728, %v2675
      %v2730 = vadd.f32 %v2728, %v2676
      %v2731 = vmul.f32 %v2696, %v2677
      %v2732 = vmul.f32 %v2696, %v2678
      %v2733 = vmul.f32 %v2712, %v2729
      %v2734 = vmul.f32 %v2712, %v2730
      %v2735 = vadd.f32 %v2731, %v2733
      %v2736 = vadd.f32 %v2732, %v2734
      %v2737 = vadd.f32 %v2735, %v2726
      %v2738 = vadd.f32 %v2736, %v2727
      %v2739 = vmul.f32 %v2700, %v2726
      %v2740 = vmul.f32 %v2700, %v2727
      %v2741 = vmul.f32 %v2700, %v2729
      %v2742 = vmul.f32 %v2700, %v2730
      %v2743 = vadd.f32 %v2741, %v2677
      %v2744 = vadd.f32 %v2742, %v2678
      %v2745 = vmul.f32 %v2696, %v2679
      %v2746 = vmul.f32 %v2696, %v2680
      %v2747 = vmul.f32 %v2712, %v2743
      %v2748 = vmul.f32 %v2712, %v2744
      %v2749 = vadd.f32 %v2745, %v2747
      %v2750 = vadd.f32 %v2746, %v2748
      %v2751 = vadd.f32 %v2749, %v2739
      %v2752 = vadd.f32 %v2750, %v2740
      %v2753 = vmul.f32 %v2700, %v2739
      %v2754 = vmul.f32 %v2700, %v2740
      %v2755 = vmul.f32 %v2700, %v2743
      %v2756 = vmul.f32 %v2700, %v2744
      %v2757 = vadd.f32 %v2755, %v2679
      %v2758 = vadd.f32 %v2756, %v2680
      %v2759 = vmul.f32 %v2696, %v2681
      %v2760 = vmul.f32 %v2696, %v2682
      %v2761 = vmul.f32 %v2712, %v2757
      %v2762 = vmul.f32 %v2712, %v2758
      %v2763 = vadd.f32 %v2759, %v2761
      %v2764 = vadd.f32 %v2760, %v2762
      %v2765 = vadd.f32 %v2763, %v2753
      %v2766 = vadd.f32 %v2764, %v2754
      %v2767 = vmul.f32 %v2700, %v2753
      %v2768 = vmul.f32 %v2700, %v2754
      %v2769 = vmul.f32 %v2700, %v2757
      %v2770 = vmul.f32 %v2700, %v2758
      %v2771 = vadd.f32 %v2769, %v2681
      %v2772 = vadd.f32 %v2770, %v2682
      %v2773 = vmul.f32 %v2696, %v2683
      %v2774 = vmul.f32 %v2696, %v2684
      %v2775 = vmul.f32 %v2712, %v2771
      %v2776 = vmul.f32 %v2712, %v2772
      %v2777 = vadd.f32 %v2773, %v2775
      %v2778 = vadd.f32 %v2774, %v2776
      %v2779 = vadd.f32 %v2777, %v2767
      %v2780 = vadd.f32 %v2778, %v2768
      %v2781 = vmul.f32 %v2700, %v2767
      %v2782 = vmul.f32 %v2700, %v2768
      %v2783 = vmul.f32 %v2700, %v2771
      %v2784 = vmul.f32 %v2700, %v2772
      %v2785 = vadd.f32 %v2783, %v2683
      %v2786 = vadd.f32 %v2784, %v2684
      %v2787 = vmul.f32 %v2696, %v2685
      %v2788 = vmul.f32 %v2696, %v2686
      %v2789 = vmul.f32 %v2712, %v2785
      %v2790 = vmul.f32 %v2712, %v2786
      %v2791 = vadd.f32 %v2787, %v2789
      %v2792 = vadd.f32 %v2788, %v2790
      %v2793 = vadd.f32 %v2791, %v2781
      %v2794 = vadd.f32 %v2792, %v2782
      %v2795 = vmul.f32 %v2700, %v2781
      %v2796 = vmul.f32 %v2700, %v2782
      %v2797 = vmul.f32 %v2700, %v2785
      %v2798 = vmul.f32 %v2700, %v2786
      %v2799 = vadd.f32 %v2797, %v2685
      %v2800 = vadd.f32 %v2798, %v2686
      %v2801 = vmul.f32 %v2696, %v2687
      %v2802 = vmul.f32 %v2696, %v2688
      %v2803 = vmul.f32 %v2712, %v2799
      %v2804 = vmul.f32 %v2712, %v2800
      %v2805 = vadd.f32 %v2801, %v2803
      %v2806 = vadd.f32 %v2802, %v2804
      %v2807 = vadd.f32 %v2805, %v2795
      %v2808 = vadd.f32 %v2806, %v2796
      %v2809 = vmul.f32 %v2700, %v2795
      %v2810 = vmul.f32 %v2700, %v2796
      %v2811 = vmul.f32 %v2700, %v2799
      %v2812 = vmul.f32 %v2700, %v2800
      %v2813 = vadd.f32 %v2811, %v2687
      %v2814 = vadd.f32 %v2812, %v2688
      %v2815 = vmul.f32 %v2696, %v2689
      %v2816 = vmul.f32 %v2696, %v2690
      %v2817 = vmul.f32 %v2712, %v2813
      %v2818 = vmul.f32 %v2712, %v2814
      %v2819 = vadd.f32 %v2815, %v2817
      %v2820 = vadd.f32 %v2816, %v2818
      %v2821 = vadd.f32 %v2819, %v2809
      %v2822 = vadd.f32 %v2820, %v2810
      %v2823 = vlaneseq
      %v2824 = vshrl.u32 %v2823, 7
      %v2825 = vsub.s32 3, %v2824
      %v2826 = vrot.slane %v2692, %v2825
      %v2827 = vmul.f32 %v2724, %v2826
      %v2828 = vmul.f32 %v2725, %v2826
      %v2829 = vmul.f32 %v2737, %v2826
      %v2830 = vmul.f32 %v2738, %v2826
      %v2831 = vmul.f32 %v2751, %v2826
      %v2832 = vmul.f32 %v2752, %v2826
      %v2833 = vmul.f32 %v2765, %v2826
      %v2834 = vmul.f32 %v2766, %v2826
      %v2835 = vmul.f32 %v2779, %v2826
      %v2836 = vmul.f32 %v2780, %v2826
      %v2837 = vmul.f32 %v2793, %v2826
      %v2838 = vmul.f32 %v2794, %v2826
      %v2839 = vmul.f32 %v2807, %v2826
      %v2840 = vmul.f32 %v2808, %v2826
      %v2841 = vmul.f32 %v2821, %v2826
      %v2842 = vmul.f32 %v2822, %v2826
      %v2843 = vlaneseq
      %v2844 = vshrl.u32 %v2843, 7
      %v2845 = vsub.s32 4, %v2844
      %v2846 = vrot.slane %v2692, %v2845
      %v2847 = vadd.f32 %v2827, %v2846
      %v2848 = vadd.f32 %v2828, %v2846
      %v2849 = vadd.f32 %v2829, %v2846
      %v2850 = vadd.f32 %v2830, %v2846
      %v2851 = vadd.f32 %v2831, %v2846
      %v2852 = vadd.f32 %v2832, %v2846
      %v2853 = vadd.f32 %v2833, %v2846
      %v2854 = vadd.f32 %v2834, %v2846
      %v2855 = vadd.f32 %v2835, %v2846
      %v2856 = vadd.f32 %v2836, %v2846
      %v2857 = vadd.f32 %v2837, %v2846
      %v2858 = vadd.f32 %v2838, %v2846
      %v2859 = vadd.f32 %v2839, %v2846
      %v2860 = vadd.f32 %v2840, %v2846
      %v2861 = vadd.f32 %v2841, %v2846
      %v2862 = vadd.f32 %v2842, %v2846
      %v2863 = vmax.f32 %v2847, -8.0
      %v2864 = vmax.f32 %v2848, -8.0
      %v2865 = vmax.f32 %v2849, -8.0
      %v2866 = vmax.f32 %v2850, -8.0
      %v2867 = vmax.f32 %v2851, -8.0
      %v2868 = vmax.f32 %v2852, -8.0
      %v2869 = vmax.f32 %v2853, -8.0
      %v2870 = vmax.f32 %v2854, -8.0
      %v2871 = vmax.f32 %v2855, -8.0
      %v2872 = vmax.f32 %v2856, -8.0
      %v2873 = vmax.f32 %v2857, -8.0
      %v2874 = vmax.f32 %v2858, -8.0
      %v2875 = vmax.f32 %v2859, -8.0
      %v2876 = vmax.f32 %v2860, -8.0
      %v2877 = vmax.f32 %v2861, -8.0
      %v2878 = vmax.f32 %v2862, -8.0
      %v2879 = vmin.f32 %v2863, 8.0
      %v2880 = vmin.f32 %v2864, 8.0
      %v2881 = vmin.f32 %v2865, 8.0
      %v2882 = vmin.f32 %v2866, 8.0
      %v2883 = vmin.f32 %v2867, 8.0
      %v2884 = vmin.f32 %v2868, 8.0
      %v2885 = vmin.f32 %v2869, 8.0
      %v2886 = vmin.f32 %v2870, 8.0
      %v2887 = vmin.f32 %v2871, 8.0
      %v2888 = vmin.f32 %v2872, 8.0
      %v2889 = vmin.f32 %v2873, 8.0
      %v2890 = vmin.f32 %v2874, 8.0
      %v2891 = vmin.f32 %v2875, 8.0
      %v2892 = vmin.f32 %v2876, 8.0
      %v2893 = vmin.f32 %v2877, 8.0
      %v2894 = vmin.f32 %v2878, 8.0
      %s2895 = scalar_lea.vmem %s4, 16
      %v2896 = vld [vmem:[%s2895] sm:$0x3f]
      %v2897 = vlaneseq
      %v2898 = vshrl.u32 %v2897, 7
      %v2899 = vsub.s32 2, %v2898
      %v2900 = vrot.slane %v2896, %v2899
      %v2901 = vmul.f32 %v2900, %v2879
      %v2902 = vmul.f32 %v2900, %v2880
      %v2903 = vmul.f32 %v2900, %v2881
      %v2904 = vmul.f32 %v2900, %v2882
      %v2905 = vmul.f32 %v2900, %v2883
      %v2906 = vmul.f32 %v2900, %v2884
      %v2907 = vmul.f32 %v2900, %v2885
      %v2908 = vmul.f32 %v2900, %v2886
      %v2909 = vmul.f32 %v2900, %v2887
      %v2910 = vmul.f32 %v2900, %v2888
      %v2911 = vmul.f32 %v2900, %v2889
      %v2912 = vmul.f32 %v2900, %v2890
      %v2913 = vmul.f32 %v2900, %v2891
      %v2914 = vmul.f32 %v2900, %v2892
      %v2915 = vmul.f32 %v2900, %v2893
      %v2916 = vmul.f32 %v2900, %v2894
      %v2917 = vlaneseq
      %v2918 = vshrl.u32 %v2917, 7
      %v2919 = vsub.s32 5, %v2918
      %v2920 = vrot.slane %v2896, %v2919
      %v2921 = vadd.f32 %v2901, %v2920
      %v2922 = vadd.f32 %v2902, %v2920
      %v2923 = vadd.f32 %v2903, %v2920
      %v2924 = vadd.f32 %v2904, %v2920
      %v2925 = vadd.f32 %v2905, %v2920
      %v2926 = vadd.f32 %v2906, %v2920
      %v2927 = vadd.f32 %v2907, %v2920
      %v2928 = vadd.f32 %v2908, %v2920
      %v2929 = vadd.f32 %v2909, %v2920
      %v2930 = vadd.f32 %v2910, %v2920
      %v2931 = vadd.f32 %v2911, %v2920
      %v2932 = vadd.f32 %v2912, %v2920
      %v2933 = vadd.f32 %v2913, %v2920
      %v2934 = vadd.f32 %v2914, %v2920
      %v2935 = vadd.f32 %v2915, %v2920
      %v2936 = vadd.f32 %v2916, %v2920
      %v2937 = vrot.slane %v2879, 6
      %v2938 = vrot.slane %v2880, 6
      %v2939 = vrot.slane %v2881, 6
      %v2940 = vrot.slane %v2882, 6
      %v2941 = vrot.slane %v2883, 6
      %v2942 = vrot.slane %v2884, 6
      %v2943 = vrot.slane %v2885, 6
      %v2944 = vrot.slane %v2886, 6
      %v2945 = vrot.slane %v2887, 6
      %v2946 = vrot.slane %v2888, 6
      %v2947 = vrot.slane %v2889, 6
      %v2948 = vrot.slane %v2890, 6
      %v2949 = vrot.slane %v2891, 6
      %v2950 = vrot.slane %v2892, 6
      %v2951 = vrot.slane %v2893, 6
      %v2952 = vrot.slane %v2894, 6
      %v2953 = vsel %vm1207, %v2951, %v2952
      %v2954 = vsel %vm1207, %v2950, %v2951
      %v2955 = vsel %vm1207, %v2949, %v2950
      %v2956 = vsel %vm1207, %v2948, %v2949
      %v2957 = vsel %vm1207, %v2947, %v2948
      %v2958 = vsel %vm1207, %v2946, %v2947
      %v2959 = vsel %vm1207, %v2945, %v2946
      %v2960 = vsel %vm1207, %v2944, %v2945
      %v2961 = vsel %vm1207, %v2943, %v2944
      %v2962 = vsel %vm1207, %v2942, %v2943
      %v2963 = vsel %vm1207, %v2941, %v2942
      %v2964 = vsel %vm1207, %v2940, %v2941
      %v2965 = vsel %vm1207, %v2939, %v2940
      %v2966 = vsel %vm1207, %v2938, %v2939
      %v2967 = vsel %vm1207, %v2937, %v2938
      %v2968 = vsel %vm1207, %v2952, %v2937
      %v2969 = vlaneseq
      %v2970 = vshrl.u32 %v2969, 7
      %v2971 = vsub.s32 0, %v2970
      %v2972 = vrot.slane %v2896, %v2971
      %v2973 = vmul.f32 %v2972, %v2968
      %v2974 = vmul.f32 %v2972, %v2967
      %v2975 = vmul.f32 %v2972, %v2966
      %v2976 = vmul.f32 %v2972, %v2965
      %v2977 = vmul.f32 %v2972, %v2964
      %v2978 = vmul.f32 %v2972, %v2963
      %v2979 = vmul.f32 %v2972, %v2962
      %v2980 = vmul.f32 %v2972, %v2961
      %v2981 = vmul.f32 %v2972, %v2960
      %v2982 = vmul.f32 %v2972, %v2959
      %v2983 = vmul.f32 %v2972, %v2958
      %v2984 = vmul.f32 %v2972, %v2957
      %v2985 = vmul.f32 %v2972, %v2956
      %v2986 = vmul.f32 %v2972, %v2955
      %v2987 = vmul.f32 %v2972, %v2954
      %v2988 = vmul.f32 %v2972, %v2953
      %v2989 = vsel %vm1260, %v2973, 0.0
      %v2990 = vsel %vm1261, %v2974, 0.0
      %v2991 = vsel %vm1262, %v2975, 0.0
      %v2992 = vsel %vm1263, %v2976, 0.0
      %v2993 = vsel %vm1264, %v2977, 0.0
      %v2994 = vsel %vm1265, %v2978, 0.0
      %v2995 = vsel %vm1266, %v2979, 0.0
      %v2996 = vsel %vm1267, %v2980, 0.0
      %v2997 = vsel %vm1268, %v2981, 0.0
      %v2998 = vsel %vm1269, %v2982, 0.0
      %v2999 = vsel %vm1270, %v2983, 0.0
      %v3000 = vsel %vm1271, %v2984, 0.0
      %v3001 = vsel %vm1272, %v2985, 0.0
      %v3002 = vsel %vm1273, %v2986, 0.0
      %v3003 = vsel %vm1274, %v2987, 0.0
      %v3004 = vsel %vm1275, %v2988, 0.0
      %v3005 = vadd.f32 %v2921, %v2989
      %v3006 = vadd.f32 %v2922, %v2990
      %v3007 = vadd.f32 %v2923, %v2991
      %v3008 = vadd.f32 %v2924, %v2992
      %v3009 = vadd.f32 %v2925, %v2993
      %v3010 = vadd.f32 %v2926, %v2994
      %v3011 = vadd.f32 %v2927, %v2995
      %v3012 = vadd.f32 %v2928, %v2996
      %v3013 = vadd.f32 %v2929, %v2997
      %v3014 = vadd.f32 %v2930, %v2998
      %v3015 = vadd.f32 %v2931, %v2999
      %v3016 = vadd.f32 %v2932, %v3000
      %v3017 = vadd.f32 %v2933, %v3001
      %v3018 = vadd.f32 %v2934, %v3002
      %v3019 = vadd.f32 %v2935, %v3003
      %v3020 = vadd.f32 %v2936, %v3004
      %v3021 = vrot.slane %v2879, 7
      %v3022 = vrot.slane %v2880, 7
      %v3023 = vrot.slane %v2881, 7
      %v3024 = vrot.slane %v2882, 7
      %v3025 = vrot.slane %v2883, 7
      %v3026 = vrot.slane %v2884, 7
      %v3027 = vrot.slane %v2885, 7
      %v3028 = vrot.slane %v2886, 7
      %v3029 = vrot.slane %v2887, 7
      %v3030 = vrot.slane %v2888, 7
      %v3031 = vrot.slane %v2889, 7
      %v3032 = vrot.slane %v2890, 7
      %v3033 = vrot.slane %v2891, 7
      %v3034 = vrot.slane %v2892, 7
      %v3035 = vrot.slane %v2893, 7
      %v3036 = vrot.slane %v2894, 7
      %v3037 = vsel %vm1324, %v3035, %v3036
      %v3038 = vsel %vm1324, %v3034, %v3035
      %v3039 = vsel %vm1324, %v3033, %v3034
      %v3040 = vsel %vm1324, %v3032, %v3033
      %v3041 = vsel %vm1324, %v3031, %v3032
      %v3042 = vsel %vm1324, %v3030, %v3031
      %v3043 = vsel %vm1324, %v3029, %v3030
      %v3044 = vsel %vm1324, %v3028, %v3029
      %v3045 = vsel %vm1324, %v3027, %v3028
      %v3046 = vsel %vm1324, %v3026, %v3027
      %v3047 = vsel %vm1324, %v3025, %v3026
      %v3048 = vsel %vm1324, %v3024, %v3025
      %v3049 = vsel %vm1324, %v3023, %v3024
      %v3050 = vsel %vm1324, %v3022, %v3023
      %v3051 = vsel %vm1324, %v3021, %v3022
      %v3052 = vsel %vm1324, %v3036, %v3021
      %v3053 = vlaneseq
      %v3054 = vshrl.u32 %v3053, 7
      %v3055 = vsub.s32 1, %v3054
      %v3056 = vrot.slane %v2896, %v3055
      %v3057 = vmul.f32 %v3056, %v3052
      %v3058 = vmul.f32 %v3056, %v3051
      %v3059 = vmul.f32 %v3056, %v3050
      %v3060 = vmul.f32 %v3056, %v3049
      %v3061 = vmul.f32 %v3056, %v3048
      %v3062 = vmul.f32 %v3056, %v3047
      %v3063 = vmul.f32 %v3056, %v3046
      %v3064 = vmul.f32 %v3056, %v3045
      %v3065 = vmul.f32 %v3056, %v3044
      %v3066 = vmul.f32 %v3056, %v3043
      %v3067 = vmul.f32 %v3056, %v3042
      %v3068 = vmul.f32 %v3056, %v3041
      %v3069 = vmul.f32 %v3056, %v3040
      %v3070 = vmul.f32 %v3056, %v3039
      %v3071 = vmul.f32 %v3056, %v3038
      %v3072 = vmul.f32 %v3056, %v3037
      %v3073 = vsel %vm1377, %v3057, 0.0
      %v3074 = vsel %vm1378, %v3058, 0.0
      %v3075 = vsel %vm1379, %v3059, 0.0
      %v3076 = vsel %vm1380, %v3060, 0.0
      %v3077 = vsel %vm1381, %v3061, 0.0
      %v3078 = vsel %vm1382, %v3062, 0.0
      %v3079 = vsel %vm1383, %v3063, 0.0
      %v3080 = vsel %vm1384, %v3064, 0.0
      %v3081 = vsel %vm1385, %v3065, 0.0
      %v3082 = vsel %vm1386, %v3066, 0.0
      %v3083 = vsel %vm1387, %v3067, 0.0
      %v3084 = vsel %vm1388, %v3068, 0.0
      %v3085 = vsel %vm1389, %v3069, 0.0
      %v3086 = vsel %vm1390, %v3070, 0.0
      %v3087 = vsel %vm1391, %v3071, 0.0
      %v3088 = vsel %vm1392, %v3072, 0.0
      %v3089 = vadd.f32 %v3005, %v3073
      %v3090 = vadd.f32 %v3006, %v3074
      %v3091 = vadd.f32 %v3007, %v3075
      %v3092 = vadd.f32 %v3008, %v3076
      %v3093 = vadd.f32 %v3009, %v3077
      %v3094 = vadd.f32 %v3010, %v3078
      %v3095 = vadd.f32 %v3011, %v3079
      %v3096 = vadd.f32 %v3012, %v3080
      %v3097 = vadd.f32 %v3013, %v3081
      %v3098 = vadd.f32 %v3014, %v3082
      %v3099 = vadd.f32 %v3015, %v3083
      %v3100 = vadd.f32 %v3016, %v3084
      %v3101 = vadd.f32 %v3017, %v3085
      %v3102 = vadd.f32 %v3018, %v3086
      %v3103 = vadd.f32 %v3019, %v3087
      %v3104 = vadd.f32 %v3020, %v3088
      %v3105 = vrot.slane %v2879, 1
      %v3106 = vrot.slane %v2880, 1
      %v3107 = vrot.slane %v2881, 1
      %v3108 = vrot.slane %v2882, 1
      %v3109 = vrot.slane %v2883, 1
      %v3110 = vrot.slane %v2884, 1
      %v3111 = vrot.slane %v2885, 1
      %v3112 = vrot.slane %v2886, 1
      %v3113 = vrot.slane %v2887, 1
      %v3114 = vrot.slane %v2888, 1
      %v3115 = vrot.slane %v2889, 1
      %v3116 = vrot.slane %v2890, 1
      %v3117 = vrot.slane %v2891, 1
      %v3118 = vrot.slane %v2892, 1
      %v3119 = vrot.slane %v2893, 1
      %v3120 = vrot.slane %v2894, 1
      %v3121 = vsel %vm1441, %v3119, %v3120
      %v3122 = vsel %vm1441, %v3118, %v3119
      %v3123 = vsel %vm1441, %v3117, %v3118
      %v3124 = vsel %vm1441, %v3116, %v3117
      %v3125 = vsel %vm1441, %v3115, %v3116
      %v3126 = vsel %vm1441, %v3114, %v3115
      %v3127 = vsel %vm1441, %v3113, %v3114
      %v3128 = vsel %vm1441, %v3112, %v3113
      %v3129 = vsel %vm1441, %v3111, %v3112
      %v3130 = vsel %vm1441, %v3110, %v3111
      %v3131 = vsel %vm1441, %v3109, %v3110
      %v3132 = vsel %vm1441, %v3108, %v3109
      %v3133 = vsel %vm1441, %v3107, %v3108
      %v3134 = vsel %vm1441, %v3106, %v3107
      %v3135 = vsel %vm1441, %v3105, %v3106
      %v3136 = vsel %vm1441, %v3120, %v3105
      %v3137 = vlaneseq
      %v3138 = vshrl.u32 %v3137, 7
      %v3139 = vsub.s32 3, %v3138
      %v3140 = vrot.slane %v2896, %v3139
      %v3141 = vmul.f32 %v3140, %v3135
      %v3142 = vmul.f32 %v3140, %v3134
      %v3143 = vmul.f32 %v3140, %v3133
      %v3144 = vmul.f32 %v3140, %v3132
      %v3145 = vmul.f32 %v3140, %v3131
      %v3146 = vmul.f32 %v3140, %v3130
      %v3147 = vmul.f32 %v3140, %v3129
      %v3148 = vmul.f32 %v3140, %v3128
      %v3149 = vmul.f32 %v3140, %v3127
      %v3150 = vmul.f32 %v3140, %v3126
      %v3151 = vmul.f32 %v3140, %v3125
      %v3152 = vmul.f32 %v3140, %v3124
      %v3153 = vmul.f32 %v3140, %v3123
      %v3154 = vmul.f32 %v3140, %v3122
      %v3155 = vmul.f32 %v3140, %v3121
      %v3156 = vmul.f32 %v3140, %v3136
      %v3157 = vsel %vm1494, %v3141, 0.0
      %v3158 = vsel %vm1495, %v3142, 0.0
      %v3159 = vsel %vm1496, %v3143, 0.0
      %v3160 = vsel %vm1497, %v3144, 0.0
      %v3161 = vsel %vm1498, %v3145, 0.0
      %v3162 = vsel %vm1499, %v3146, 0.0
      %v3163 = vsel %vm1500, %v3147, 0.0
      %v3164 = vsel %vm1501, %v3148, 0.0
      %v3165 = vsel %vm1502, %v3149, 0.0
      %v3166 = vsel %vm1503, %v3150, 0.0
      %v3167 = vsel %vm1504, %v3151, 0.0
      %v3168 = vsel %vm1505, %v3152, 0.0
      %v3169 = vsel %vm1506, %v3153, 0.0
      %v3170 = vsel %vm1507, %v3154, 0.0
      %v3171 = vsel %vm1508, %v3155, 0.0
      %v3172 = vsel %vm1509, %v3156, 0.0
      %v3173 = vadd.f32 %v3089, %v3157
      %v3174 = vadd.f32 %v3090, %v3158
      %v3175 = vadd.f32 %v3091, %v3159
      %v3176 = vadd.f32 %v3092, %v3160
      %v3177 = vadd.f32 %v3093, %v3161
      %v3178 = vadd.f32 %v3094, %v3162
      %v3179 = vadd.f32 %v3095, %v3163
      %v3180 = vadd.f32 %v3096, %v3164
      %v3181 = vadd.f32 %v3097, %v3165
      %v3182 = vadd.f32 %v3098, %v3166
      %v3183 = vadd.f32 %v3099, %v3167
      %v3184 = vadd.f32 %v3100, %v3168
      %v3185 = vadd.f32 %v3101, %v3169
      %v3186 = vadd.f32 %v3102, %v3170
      %v3187 = vadd.f32 %v3103, %v3171
      %v3188 = vadd.f32 %v3104, %v3172
      %v3189 = vrot.slane %v2879, 2
      %v3190 = vrot.slane %v2880, 2
      %v3191 = vrot.slane %v2881, 2
      %v3192 = vrot.slane %v2882, 2
      %v3193 = vrot.slane %v2883, 2
      %v3194 = vrot.slane %v2884, 2
      %v3195 = vrot.slane %v2885, 2
      %v3196 = vrot.slane %v2886, 2
      %v3197 = vrot.slane %v2887, 2
      %v3198 = vrot.slane %v2888, 2
      %v3199 = vrot.slane %v2889, 2
      %v3200 = vrot.slane %v2890, 2
      %v3201 = vrot.slane %v2891, 2
      %v3202 = vrot.slane %v2892, 2
      %v3203 = vrot.slane %v2893, 2
      %v3204 = vrot.slane %v2894, 2
      %v3205 = vsel %vm1558, %v3203, %v3204
      %v3206 = vsel %vm1558, %v3202, %v3203
      %v3207 = vsel %vm1558, %v3201, %v3202
      %v3208 = vsel %vm1558, %v3200, %v3201
      %v3209 = vsel %vm1558, %v3199, %v3200
      %v3210 = vsel %vm1558, %v3198, %v3199
      %v3211 = vsel %vm1558, %v3197, %v3198
      %v3212 = vsel %vm1558, %v3196, %v3197
      %v3213 = vsel %vm1558, %v3195, %v3196
      %v3214 = vsel %vm1558, %v3194, %v3195
      %v3215 = vsel %vm1558, %v3193, %v3194
      %v3216 = vsel %vm1558, %v3192, %v3193
      %v3217 = vsel %vm1558, %v3191, %v3192
      %v3218 = vsel %vm1558, %v3190, %v3191
      %v3219 = vsel %vm1558, %v3189, %v3190
      %v3220 = vsel %vm1558, %v3204, %v3189
      %v3221 = vlaneseq
      %v3222 = vshrl.u32 %v3221, 7
      %v3223 = vsub.s32 4, %v3222
      %v3224 = vrot.slane %v2896, %v3223
      %v3225 = vmul.f32 %v3224, %v3219
      %v3226 = vmul.f32 %v3224, %v3218
      %v3227 = vmul.f32 %v3224, %v3217
      %v3228 = vmul.f32 %v3224, %v3216
      %v3229 = vmul.f32 %v3224, %v3215
      %v3230 = vmul.f32 %v3224, %v3214
      %v3231 = vmul.f32 %v3224, %v3213
      %v3232 = vmul.f32 %v3224, %v3212
      %v3233 = vmul.f32 %v3224, %v3211
      %v3234 = vmul.f32 %v3224, %v3210
      %v3235 = vmul.f32 %v3224, %v3209
      %v3236 = vmul.f32 %v3224, %v3208
      %v3237 = vmul.f32 %v3224, %v3207
      %v3238 = vmul.f32 %v3224, %v3206
      %v3239 = vmul.f32 %v3224, %v3205
      %v3240 = vmul.f32 %v3224, %v3220
      %v3241 = vsel %vm1611, %v3225, 0.0
      %v3242 = vsel %vm1612, %v3226, 0.0
      %v3243 = vsel %vm1613, %v3227, 0.0
      %v3244 = vsel %vm1614, %v3228, 0.0
      %v3245 = vsel %vm1615, %v3229, 0.0
      %v3246 = vsel %vm1616, %v3230, 0.0
      %v3247 = vsel %vm1617, %v3231, 0.0
      %v3248 = vsel %vm1618, %v3232, 0.0
      %v3249 = vsel %vm1619, %v3233, 0.0
      %v3250 = vsel %vm1620, %v3234, 0.0
      %v3251 = vsel %vm1621, %v3235, 0.0
      %v3252 = vsel %vm1622, %v3236, 0.0
      %v3253 = vsel %vm1623, %v3237, 0.0
      %v3254 = vsel %vm1624, %v3238, 0.0
      %v3255 = vsel %vm1625, %v3239, 0.0
      %v3256 = vsel %vm1626, %v3240, 0.0
      %v3257 = vadd.f32 %v3173, %v3241
      %v3258 = vadd.f32 %v3174, %v3242
      %v3259 = vadd.f32 %v3175, %v3243
      %v3260 = vadd.f32 %v3176, %v3244
      %v3261 = vadd.f32 %v3177, %v3245
      %v3262 = vadd.f32 %v3178, %v3246
      %v3263 = vadd.f32 %v3179, %v3247
      %v3264 = vadd.f32 %v3180, %v3248
      %v3265 = vadd.f32 %v3181, %v3249
      %v3266 = vadd.f32 %v3182, %v3250
      %v3267 = vadd.f32 %v3183, %v3251
      %v3268 = vadd.f32 %v3184, %v3252
      %v3269 = vadd.f32 %v3185, %v3253
      %v3270 = vadd.f32 %v3186, %v3254
      %v3271 = vadd.f32 %v3187, %v3255
      %v3272 = vadd.f32 %v3188, %v3256
      %v3273 = vmax.f32 %v3257, -8.0
      %v3274 = vmax.f32 %v3258, -8.0
      %v3275 = vmax.f32 %v3259, -8.0
      %v3276 = vmax.f32 %v3260, -8.0
      %v3277 = vmax.f32 %v3261, -8.0
      %v3278 = vmax.f32 %v3262, -8.0
      %v3279 = vmax.f32 %v3263, -8.0
      %v3280 = vmax.f32 %v3264, -8.0
      %v3281 = vmax.f32 %v3265, -8.0
      %v3282 = vmax.f32 %v3266, -8.0
      %v3283 = vmax.f32 %v3267, -8.0
      %v3284 = vmax.f32 %v3268, -8.0
      %v3285 = vmax.f32 %v3269, -8.0
      %v3286 = vmax.f32 %v3270, -8.0
      %v3287 = vmax.f32 %v3271, -8.0
      %v3288 = vmax.f32 %v3272, -8.0
      %v3289 = vmin.f32 %v3273, 8.0
      %v3290 = vmin.f32 %v3274, 8.0
      %v3291 = vmin.f32 %v3275, 8.0
      %v3292 = vmin.f32 %v3276, 8.0
      %v3293 = vmin.f32 %v3277, 8.0
      %v3294 = vmin.f32 %v3278, 8.0
      %v3295 = vmin.f32 %v3279, 8.0
      %v3296 = vmin.f32 %v3280, 8.0
      %v3297 = vmin.f32 %v3281, 8.0
      %v3298 = vmin.f32 %v3282, 8.0
      %v3299 = vmin.f32 %v3283, 8.0
      %v3300 = vmin.f32 %v3284, 8.0
      %v3301 = vmin.f32 %v3285, 8.0
      %v3302 = vmin.f32 %v3286, 8.0
      %v3303 = vmin.f32 %v3287, 8.0
      %v3304 = vmin.f32 %v3288, 8.0
      %s3305 = scalar_lea.vmem %s5, 256
      %v3306 = vld [vmem:[%s3305] sm:$0xff]
      %v3307 = vld [vmem:[%s3305 + $0x8] sm:$0xff]
      %v3308 = vld [vmem:[%s3305 + $0x10] sm:$0xff]
      %v3309 = vld [vmem:[%s3305 + $0x18] sm:$0xff]
      %v3310 = vld [vmem:[%s3305 + $0x20] sm:$0xff]
      %v3311 = vld [vmem:[%s3305 + $0x28] sm:$0xff]
      %v3312 = vld [vmem:[%s3305 + $0x30] sm:$0xff]
      %v3313 = vld [vmem:[%s3305 + $0x38] sm:$0xff]
      %v3314 = vld [vmem:[%s3305 + $0x40] sm:$0xff]
      %v3315 = vld [vmem:[%s3305 + $0x48] sm:$0xff]
      %v3316 = vld [vmem:[%s3305 + $0x50] sm:$0xff]
      %v3317 = vld [vmem:[%s3305 + $0x58] sm:$0xff]
      %v3318 = vld [vmem:[%s3305 + $0x60] sm:$0xff]
      %v3319 = vld [vmem:[%s3305 + $0x68] sm:$0xff]
      %v3320 = vld [vmem:[%s3305 + $0x70] sm:$0xff]
      %v3321 = vld [vmem:[%s3305 + $0x78] sm:$0xff]
      %s3322 = scalar_lea.vmem %s6, 2
      %v3323 = vld [vmem:[%s3322] sm:$0x1]
      %v3325 = vlaneseq
      %v3326 = vshrl.u32 %v3325, 7
      %v3327 = vsub.s32 0, %v3326
      %v3328 = vrot.slane %v3323, %v3327
      %3330 = vmatprep.subr.mxu0 0.0
      %3331 = vmatpush1.msra.mxu0 %v3321
      %3332 = vmatprep.subr.mxu0 0.0
      %3333 = vmatpush1.msra.mxu0 %v3320
      %3334 = vmatprep.subr.mxu0 0.0
      %3335 = vmatpush1.msra.mxu0 %v3319
      %3336 = vmatprep.subr.mxu0 0.0
      %3337 = vmatpush1.msra.mxu0 %v3318
      %3338 = vmatprep.subr.mxu0 0.0
      %3339 = vmatpush1.msra.mxu0 %v3317
      %3340 = vmatprep.subr.mxu0 0.0
      %3341 = vmatpush1.msra.mxu0 %v3316
      %3342 = vmatprep.subr.mxu0 0.0
      %3343 = vmatpush1.msra.mxu0 %v3315
      %3344 = vmatprep.subr.mxu0 0.0
      %3345 = vmatpush1.msra.mxu0 %v3314
      %3346 = vmatprep.subr.mxu0 0.0
      %3347 = vmatpush1.msra.mxu0 %v3313
      %3348 = vmatprep.subr.mxu0 0.0
      %3349 = vmatpush1.msra.mxu0 %v3312
      %3350 = vmatprep.subr.mxu0 0.0
      %3351 = vmatpush1.msra.mxu0 %v3311
      %3352 = vmatprep.subr.mxu0 0.0
      %3353 = vmatpush1.msra.mxu0 %v3310
      %3354 = vmatprep.subr.mxu0 0.0
      %3355 = vmatpush1.msra.mxu0 %v3309
      %3356 = vmatprep.subr.mxu0 0.0
      %3357 = vmatpush1.msra.mxu0 %v3308
      %3358 = vmatprep.subr.mxu0 0.0
      %3359 = vmatpush1.msra.mxu0 %v3307
      %3360 = vmatprep.subr.mxu0 0.0
      %3361 = vmatpush1.msra.mxu0 %v3306
      %3362 = vmatprep.subr.mxu0 0.0
      %3363 = vmatpush2.msra.mxu0 0.0
      %3364 = vmatprep.subr.mxu0 0.0
      %3365 = vmatpush2.msra.mxu0 0.0
      %3366 = vmatprep.subr.mxu0 0.0
      %3367 = vmatpush2.msra.mxu0 0.0
      %3368 = vmatprep.subr.mxu0 0.0
      %3369 = vmatpush2.msra.mxu0 0.0
      %3370 = vmatprep.subr.mxu0 0.0
      %3371 = vmatpush2.msra.mxu0 0.0
      %3372 = vmatprep.subr.mxu0 0.0
      %3373 = vmatpush2.msra.mxu0 0.0
      %3374 = vmatprep.subr.mxu0 0.0
      %3375 = vmatpush2.msra.mxu0 0.0
      %3376 = vmatprep.subr.mxu0 0.0
      %3377 = vmatpush2.msra.mxu0 0.0
      %3378 = vmatprep.subr.mxu0 0.0
      %3379 = vmatpush2.msra.mxu0 0.0
      %3380 = vmatprep.subr.mxu0 0.0
      %3381 = vmatpush2.msra.mxu0 0.0
      %3382 = vmatprep.subr.mxu0 0.0
      %3383 = vmatpush2.msra.mxu0 0.0
      %3384 = vmatprep.subr.mxu0 0.0
      %3385 = vmatpush2.msra.mxu0 0.0
      %3386 = vmatprep.subr.mxu0 0.0
      %3387 = vmatpush2.msra.mxu0 0.0
      %3388 = vmatprep.subr.mxu0 0.0
      %3389 = vmatpush2.msra.mxu0 0.0
      %3390 = vmatprep.subr.mxu0 0.0
      %3391 = vmatpush2.msra.mxu0 0.0
      %3392 = vmatprep.subr.mxu0 0.0
      %3393 = vmatpush2.msra.mxu0 0.0
      %3394 = vmatprep.mubr.f32.mxu0 0.0
      %3395 = vmatmul.mubr.f32.gmra.mxu0 %v3289
      %v3396 = vpop.f32.mrf.mxu0
      %v3397 = vadd.f32 %v3328, %v3396
      %v3398 = vpop.f32.mrf.mxu0
      %3399 = vmatprep.mubr.f32.mxu0 0.0
      %3400 = vmatmul.mubr.f32.gmra.mxu0 %v3290
      %v3401 = vpop.f32.mrf.mxu0
      %v3402 = vadd.f32 %v3328, %v3401
      %v3403 = vpop.f32.mrf.mxu0
      %3404 = vmatprep.mubr.f32.mxu0 0.0
      %3405 = vmatmul.mubr.f32.gmra.mxu0 %v3291
      %v3406 = vpop.f32.mrf.mxu0
      %v3407 = vadd.f32 %v3328, %v3406
      %v3408 = vpop.f32.mrf.mxu0
      %3409 = vmatprep.mubr.f32.mxu0 0.0
      %3410 = vmatmul.mubr.f32.gmra.mxu0 %v3292
      %v3411 = vpop.f32.mrf.mxu0
      %v3412 = vadd.f32 %v3328, %v3411
      %v3413 = vpop.f32.mrf.mxu0
      %3414 = vmatprep.mubr.f32.mxu0 0.0
      %3415 = vmatmul.mubr.f32.gmra.mxu0 %v3293
      %v3416 = vpop.f32.mrf.mxu0
      %v3417 = vadd.f32 %v3328, %v3416
      %v3418 = vpop.f32.mrf.mxu0
      %3419 = vmatprep.mubr.f32.mxu0 0.0
      %3420 = vmatmul.mubr.f32.gmra.mxu0 %v3294
      %v3421 = vpop.f32.mrf.mxu0
      %v3422 = vadd.f32 %v3328, %v3421
      %v3423 = vpop.f32.mrf.mxu0
      %3424 = vmatprep.mubr.f32.mxu0 0.0
      %3425 = vmatmul.mubr.f32.gmra.mxu0 %v3295
      %v3426 = vpop.f32.mrf.mxu0
      %v3427 = vadd.f32 %v3328, %v3426
      %v3428 = vpop.f32.mrf.mxu0
      %3429 = vmatprep.mubr.f32.mxu0 0.0
      %3430 = vmatmul.mubr.f32.gmra.mxu0 %v3296
      %v3431 = vpop.f32.mrf.mxu0
      %v3432 = vadd.f32 %v3328, %v3431
      %v3433 = vpop.f32.mrf.mxu0
      %3434 = vmatprep.mubr.f32.mxu0 0.0
      %3435 = vmatmul.mubr.f32.gmra.mxu0 %v3297
      %v3436 = vpop.f32.mrf.mxu0
      %v3437 = vadd.f32 %v3328, %v3436
      %v3438 = vpop.f32.mrf.mxu0
      %3439 = vmatprep.mubr.f32.mxu0 0.0
      %3440 = vmatmul.mubr.f32.gmra.mxu0 %v3298
      %v3441 = vpop.f32.mrf.mxu0
      %v3442 = vadd.f32 %v3328, %v3441
      %v3443 = vpop.f32.mrf.mxu0
      %3444 = vmatprep.mubr.f32.mxu0 0.0
      %3445 = vmatmul.mubr.f32.gmra.mxu0 %v3299
      %v3446 = vpop.f32.mrf.mxu0
      %v3447 = vadd.f32 %v3328, %v3446
      %v3448 = vpop.f32.mrf.mxu0
      %3449 = vmatprep.mubr.f32.mxu0 0.0
      %3450 = vmatmul.mubr.f32.gmra.mxu0 %v3300
      %v3451 = vpop.f32.mrf.mxu0
      %v3452 = vadd.f32 %v3328, %v3451
      %v3453 = vpop.f32.mrf.mxu0
      %3454 = vmatprep.mubr.f32.mxu0 0.0
      %3455 = vmatmul.mubr.f32.gmra.mxu0 %v3301
      %v3456 = vpop.f32.mrf.mxu0
      %v3457 = vadd.f32 %v3328, %v3456
      %v3458 = vpop.f32.mrf.mxu0
      %3459 = vmatprep.mubr.f32.mxu0 0.0
      %3460 = vmatmul.mubr.f32.gmra.mxu0 %v3302
      %v3461 = vpop.f32.mrf.mxu0
      %v3462 = vadd.f32 %v3328, %v3461
      %v3463 = vpop.f32.mrf.mxu0
      %3464 = vmatprep.mubr.f32.mxu0 0.0
      %3465 = vmatmul.mubr.f32.gmra.mxu0 %v3303
      %v3466 = vpop.f32.mrf.mxu0
      %v3467 = vadd.f32 %v3328, %v3466
      %v3468 = vpop.f32.mrf.mxu0
      %3469 = vmatprep.mubr.f32.mxu0 0.0
      %3470 = vmatmul.mubr.f32.gmra.mxu0 %v3304
      %v3471 = vpop.f32.mrf.mxu0
      %v3472 = vadd.f32 %v3328, %v3471
      %v3473 = vpop.f32.mrf.mxu0
      %3474 = vdwg.mxu0
      %v3475 = vmax.f32 %v3397, 0.0
      %v3476 = vmax.f32 %v3402, 0.0
      %v3477 = vmax.f32 %v3407, 0.0
      %v3478 = vmax.f32 %v3412, 0.0
      %v3479 = vmax.f32 %v3417, 0.0
      %v3480 = vmax.f32 %v3422, 0.0
      %v3481 = vmax.f32 %v3427, 0.0
      %v3482 = vmax.f32 %v3432, 0.0
      %v3483 = vmax.f32 %v3437, 0.0
      %v3484 = vmax.f32 %v3442, 0.0
      %v3485 = vmax.f32 %v3447, 0.0
      %v3486 = vmax.f32 %v3452, 0.0
      %v3487 = vmax.f32 %v3457, 0.0
      %v3488 = vmax.f32 %v3462, 0.0
      %v3489 = vmax.f32 %v3467, 0.0
      %v3490 = vmax.f32 %v3472, 0.0
      %s3491 = scalar_lea.vmem %s3, 24
      %v3492 = vld [vmem:[%s3491] sm:$0x1f]
      %v3493 = vlaneseq
      %v3494 = vshrl.u32 %v3493, 7
      %v3495 = vsub.s32 0, %v3494
      %v3496 = vrot.slane %v3492, %v3495
      %v3497 = vlaneseq
      %v3498 = vshrl.u32 %v3497, 7
      %v3499 = vsub.s32 2, %v3498
      %v3500 = vrot.slane %v3492, %v3499
      %v3502 = vrot.slane %v3492, 6
      %v3504 = vmul.f32 %v3492, %v3502
      %v3506 = vrot.slane %v3504, 1
      %v3508 = vadd.f32 %v3492, %v3506
      %v3509 = vlaneseq
      %v3510 = vshrl.u32 %v3509, 7
      %v3511 = vsub.s32 1, %v3510
      %v3512 = vrot.slane %v3508, %v3511
      %v3513 = vrot.slane %v3492, 1
      %v3515 = vadd.f32 %v3492, %v3513
      %v3516 = vlaneseq
      %v3517 = vshrl.u32 %v3516, 7
      %v3518 = vsub.s32 1, %v3517
      %v3519 = vrot.slane %v3515, %v3518
      %v3520 = vmul.f32 %v3519, %v3475
      %v3521 = vmul.f32 %v3519, %v3476
      %v3522 = vmul.f32 %v3496, %v3475
      %v3523 = vmul.f32 %v3496, %v3476
      %v3524 = vadd.f32 %v3522, %v3520
      %v3525 = vadd.f32 %v3523, %v3521
      %v3526 = vmul.f32 %v3500, %v3520
      %v3527 = vmul.f32 %v3500, %v3521
      %v3528 = vmul.f32 %v3500, 0.0
      %v3529 = vadd.f32 %v3528, %v3475
      %v3530 = vadd.f32 %v3528, %v3476
      %v3531 = vmul.f32 %v3496, %v3477
      %v3532 = vmul.f32 %v3496, %v3478
      %v3533 = vmul.f32 %v3512, %v3529
      %v3534 = vmul.f32 %v3512, %v3530
      %v3535 = vadd.f32 %v3531, %v3533
      %v3536 = vadd.f32 %v3532, %v3534
      %v3537 = vadd.f32 %v3535, %v3526
      %v3538 = vadd.f32 %v3536, %v3527
      %v3539 = vmul.f32 %v3500, %v3526
      %v3540 = vmul.f32 %v3500, %v3527
      %v3541 = vmul.f32 %v3500, %v3529
      %v3542 = vmul.f32 %v3500, %v3530
      %v3543 = vadd.f32 %v3541, %v3477
      %v3544 = vadd.f32 %v3542, %v3478
      %v3545 = vmul.f32 %v3496, %v3479
      %v3546 = vmul.f32 %v3496, %v3480
      %v3547 = vmul.f32 %v3512, %v3543
      %v3548 = vmul.f32 %v3512, %v3544
      %v3549 = vadd.f32 %v3545, %v3547
      %v3550 = vadd.f32 %v3546, %v3548
      %v3551 = vadd.f32 %v3549, %v3539
      %v3552 = vadd.f32 %v3550, %v3540
      %v3553 = vmul.f32 %v3500, %v3539
      %v3554 = vmul.f32 %v3500, %v3540
      %v3555 = vmul.f32 %v3500, %v3543
      %v3556 = vmul.f32 %v3500, %v3544
      %v3557 = vadd.f32 %v3555, %v3479
      %v3558 = vadd.f32 %v3556, %v3480
      %v3559 = vmul.f32 %v3496, %v3481
      %v3560 = vmul.f32 %v3496, %v3482
      %v3561 = vmul.f32 %v3512, %v3557
      %v3562 = vmul.f32 %v3512, %v3558
      %v3563 = vadd.f32 %v3559, %v3561
      %v3564 = vadd.f32 %v3560, %v3562
      %v3565 = vadd.f32 %v3563, %v3553
      %v3566 = vadd.f32 %v3564, %v3554
      %v3567 = vmul.f32 %v3500, %v3553
      %v3568 = vmul.f32 %v3500, %v3554
      %v3569 = vmul.f32 %v3500, %v3557
      %v3570 = vmul.f32 %v3500, %v3558
      %v3571 = vadd.f32 %v3569, %v3481
      %v3572 = vadd.f32 %v3570, %v3482
      %v3573 = vmul.f32 %v3496, %v3483
      %v3574 = vmul.f32 %v3496, %v3484
      %v3575 = vmul.f32 %v3512, %v3571
      %v3576 = vmul.f32 %v3512, %v3572
      %v3577 = vadd.f32 %v3573, %v3575
      %v3578 = vadd.f32 %v3574, %v3576
      %v3579 = vadd.f32 %v3577, %v3567
      %v3580 = vadd.f32 %v3578, %v3568
      %v3581 = vmul.f32 %v3500, %v3567
      %v3582 = vmul.f32 %v3500, %v3568
      %v3583 = vmul.f32 %v3500, %v3571
      %v3584 = vmul.f32 %v3500, %v3572
      %v3585 = vadd.f32 %v3583, %v3483
      %v3586 = vadd.f32 %v3584, %v3484
      %v3587 = vmul.f32 %v3496, %v3485
      %v3588 = vmul.f32 %v3496, %v3486
      %v3589 = vmul.f32 %v3512, %v3585
      %v3590 = vmul.f32 %v3512, %v3586
      %v3591 = vadd.f32 %v3587, %v3589
      %v3592 = vadd.f32 %v3588, %v3590
      %v3593 = vadd.f32 %v3591, %v3581
      %v3594 = vadd.f32 %v3592, %v3582
      %v3595 = vmul.f32 %v3500, %v3581
      %v3596 = vmul.f32 %v3500, %v3582
      %v3597 = vmul.f32 %v3500, %v3585
      %v3598 = vmul.f32 %v3500, %v3586
      %v3599 = vadd.f32 %v3597, %v3485
      %v3600 = vadd.f32 %v3598, %v3486
      %v3601 = vmul.f32 %v3496, %v3487
      %v3602 = vmul.f32 %v3496, %v3488
      %v3603 = vmul.f32 %v3512, %v3599
      %v3604 = vmul.f32 %v3512, %v3600
      %v3605 = vadd.f32 %v3601, %v3603
      %v3606 = vadd.f32 %v3602, %v3604
      %v3607 = vadd.f32 %v3605, %v3595
      %v3608 = vadd.f32 %v3606, %v3596
      %v3609 = vmul.f32 %v3500, %v3595
      %v3610 = vmul.f32 %v3500, %v3596
      %v3611 = vmul.f32 %v3500, %v3599
      %v3612 = vmul.f32 %v3500, %v3600
      %v3613 = vadd.f32 %v3611, %v3487
      %v3614 = vadd.f32 %v3612, %v3488
      %v3615 = vmul.f32 %v3496, %v3489
      %v3616 = vmul.f32 %v3496, %v3490
      %v3617 = vmul.f32 %v3512, %v3613
      %v3618 = vmul.f32 %v3512, %v3614
      %v3619 = vadd.f32 %v3615, %v3617
      %v3620 = vadd.f32 %v3616, %v3618
      %v3621 = vadd.f32 %v3619, %v3609
      %v3622 = vadd.f32 %v3620, %v3610
      %v3623 = vlaneseq
      %v3624 = vshrl.u32 %v3623, 7
      %v3625 = vsub.s32 3, %v3624
      %v3626 = vrot.slane %v3492, %v3625
      %v3627 = vmul.f32 %v3524, %v3626
      %v3628 = vmul.f32 %v3525, %v3626
      %v3629 = vmul.f32 %v3537, %v3626
      %v3630 = vmul.f32 %v3538, %v3626
      %v3631 = vmul.f32 %v3551, %v3626
      %v3632 = vmul.f32 %v3552, %v3626
      %v3633 = vmul.f32 %v3565, %v3626
      %v3634 = vmul.f32 %v3566, %v3626
      %v3635 = vmul.f32 %v3579, %v3626
      %v3636 = vmul.f32 %v3580, %v3626
      %v3637 = vmul.f32 %v3593, %v3626
      %v3638 = vmul.f32 %v3594, %v3626
      %v3639 = vmul.f32 %v3607, %v3626
      %v3640 = vmul.f32 %v3608, %v3626
      %v3641 = vmul.f32 %v3621, %v3626
      %v3642 = vmul.f32 %v3622, %v3626
      %v3643 = vlaneseq
      %v3644 = vshrl.u32 %v3643, 7
      %v3645 = vsub.s32 4, %v3644
      %v3646 = vrot.slane %v3492, %v3645
      %v3647 = vadd.f32 %v3627, %v3646
      %v3648 = vadd.f32 %v3628, %v3646
      %v3649 = vadd.f32 %v3629, %v3646
      %v3650 = vadd.f32 %v3630, %v3646
      %v3651 = vadd.f32 %v3631, %v3646
      %v3652 = vadd.f32 %v3632, %v3646
      %v3653 = vadd.f32 %v3633, %v3646
      %v3654 = vadd.f32 %v3634, %v3646
      %v3655 = vadd.f32 %v3635, %v3646
      %v3656 = vadd.f32 %v3636, %v3646
      %v3657 = vadd.f32 %v3637, %v3646
      %v3658 = vadd.f32 %v3638, %v3646
      %v3659 = vadd.f32 %v3639, %v3646
      %v3660 = vadd.f32 %v3640, %v3646
      %v3661 = vadd.f32 %v3641, %v3646
      %v3662 = vadd.f32 %v3642, %v3646
      %v3663 = vmax.f32 %v3647, -8.0
      %v3664 = vmax.f32 %v3648, -8.0
      %v3665 = vmax.f32 %v3649, -8.0
      %v3666 = vmax.f32 %v3650, -8.0
      %v3667 = vmax.f32 %v3651, -8.0
      %v3668 = vmax.f32 %v3652, -8.0
      %v3669 = vmax.f32 %v3653, -8.0
      %v3670 = vmax.f32 %v3654, -8.0
      %v3671 = vmax.f32 %v3655, -8.0
      %v3672 = vmax.f32 %v3656, -8.0
      %v3673 = vmax.f32 %v3657, -8.0
      %v3674 = vmax.f32 %v3658, -8.0
      %v3675 = vmax.f32 %v3659, -8.0
      %v3676 = vmax.f32 %v3660, -8.0
      %v3677 = vmax.f32 %v3661, -8.0
      %v3678 = vmax.f32 %v3662, -8.0
      %v3679 = vmin.f32 %v3663, 8.0
      %v3680 = vmin.f32 %v3664, 8.0
      %v3681 = vmin.f32 %v3665, 8.0
      %v3682 = vmin.f32 %v3666, 8.0
      %v3683 = vmin.f32 %v3667, 8.0
      %v3684 = vmin.f32 %v3668, 8.0
      %v3685 = vmin.f32 %v3669, 8.0
      %v3686 = vmin.f32 %v3670, 8.0
      %v3687 = vmin.f32 %v3671, 8.0
      %v3688 = vmin.f32 %v3672, 8.0
      %v3689 = vmin.f32 %v3673, 8.0
      %v3690 = vmin.f32 %v3674, 8.0
      %v3691 = vmin.f32 %v3675, 8.0
      %v3692 = vmin.f32 %v3676, 8.0
      %v3693 = vmin.f32 %v3677, 8.0
      %v3694 = vmin.f32 %v3678, 8.0
      %s3695 = scalar_lea.vmem %s4, 24
      %v3696 = vld [vmem:[%s3695] sm:$0x3f]
      %v3697 = vlaneseq
      %v3698 = vshrl.u32 %v3697, 7
      %v3699 = vsub.s32 2, %v3698
      %v3700 = vrot.slane %v3696, %v3699
      %v3701 = vmul.f32 %v3700, %v3679
      %v3702 = vmul.f32 %v3700, %v3680
      %v3703 = vmul.f32 %v3700, %v3681
      %v3704 = vmul.f32 %v3700, %v3682
      %v3705 = vmul.f32 %v3700, %v3683
      %v3706 = vmul.f32 %v3700, %v3684
      %v3707 = vmul.f32 %v3700, %v3685
      %v3708 = vmul.f32 %v3700, %v3686
      %v3709 = vmul.f32 %v3700, %v3687
      %v3710 = vmul.f32 %v3700, %v3688
      %v3711 = vmul.f32 %v3700, %v3689
      %v3712 = vmul.f32 %v3700, %v3690
      %v3713 = vmul.f32 %v3700, %v3691
      %v3714 = vmul.f32 %v3700, %v3692
      %v3715 = vmul.f32 %v3700, %v3693
      %v3716 = vmul.f32 %v3700, %v3694
      %v3717 = vlaneseq
      %v3718 = vshrl.u32 %v3717, 7
      %v3719 = vsub.s32 5, %v3718
      %v3720 = vrot.slane %v3696, %v3719
      %v3721 = vadd.f32 %v3701, %v3720
      %v3722 = vadd.f32 %v3702, %v3720
      %v3723 = vadd.f32 %v3703, %v3720
      %v3724 = vadd.f32 %v3704, %v3720
      %v3725 = vadd.f32 %v3705, %v3720
      %v3726 = vadd.f32 %v3706, %v3720
      %v3727 = vadd.f32 %v3707, %v3720
      %v3728 = vadd.f32 %v3708, %v3720
      %v3729 = vadd.f32 %v3709, %v3720
      %v3730 = vadd.f32 %v3710, %v3720
      %v3731 = vadd.f32 %v3711, %v3720
      %v3732 = vadd.f32 %v3712, %v3720
      %v3733 = vadd.f32 %v3713, %v3720
      %v3734 = vadd.f32 %v3714, %v3720
      %v3735 = vadd.f32 %v3715, %v3720
      %v3736 = vadd.f32 %v3716, %v3720
      %v3737 = vrot.slane %v3679, 6
      %v3738 = vrot.slane %v3680, 6
      %v3739 = vrot.slane %v3681, 6
      %v3740 = vrot.slane %v3682, 6
      %v3741 = vrot.slane %v3683, 6
      %v3742 = vrot.slane %v3684, 6
      %v3743 = vrot.slane %v3685, 6
      %v3744 = vrot.slane %v3686, 6
      %v3745 = vrot.slane %v3687, 6
      %v3746 = vrot.slane %v3688, 6
      %v3747 = vrot.slane %v3689, 6
      %v3748 = vrot.slane %v3690, 6
      %v3749 = vrot.slane %v3691, 6
      %v3750 = vrot.slane %v3692, 6
      %v3751 = vrot.slane %v3693, 6
      %v3752 = vrot.slane %v3694, 6
      %v3753 = vsel %vm1207, %v3751, %v3752
      %v3754 = vsel %vm1207, %v3750, %v3751
      %v3755 = vsel %vm1207, %v3749, %v3750
      %v3756 = vsel %vm1207, %v3748, %v3749
      %v3757 = vsel %vm1207, %v3747, %v3748
      %v3758 = vsel %vm1207, %v3746, %v3747
      %v3759 = vsel %vm1207, %v3745, %v3746
      %v3760 = vsel %vm1207, %v3744, %v3745
      %v3761 = vsel %vm1207, %v3743, %v3744
      %v3762 = vsel %vm1207, %v3742, %v3743
      %v3763 = vsel %vm1207, %v3741, %v3742
      %v3764 = vsel %vm1207, %v3740, %v3741
      %v3765 = vsel %vm1207, %v3739, %v3740
      %v3766 = vsel %vm1207, %v3738, %v3739
      %v3767 = vsel %vm1207, %v3737, %v3738
      %v3768 = vsel %vm1207, %v3752, %v3737
      %v3769 = vlaneseq
      %v3770 = vshrl.u32 %v3769, 7
      %v3771 = vsub.s32 0, %v3770
      %v3772 = vrot.slane %v3696, %v3771
      %v3773 = vmul.f32 %v3772, %v3768
      %v3774 = vmul.f32 %v3772, %v3767
      %v3775 = vmul.f32 %v3772, %v3766
      %v3776 = vmul.f32 %v3772, %v3765
      %v3777 = vmul.f32 %v3772, %v3764
      %v3778 = vmul.f32 %v3772, %v3763
      %v3779 = vmul.f32 %v3772, %v3762
      %v3780 = vmul.f32 %v3772, %v3761
      %v3781 = vmul.f32 %v3772, %v3760
      %v3782 = vmul.f32 %v3772, %v3759
      %v3783 = vmul.f32 %v3772, %v3758
      %v3784 = vmul.f32 %v3772, %v3757
      %v3785 = vmul.f32 %v3772, %v3756
      %v3786 = vmul.f32 %v3772, %v3755
      %v3787 = vmul.f32 %v3772, %v3754
      %v3788 = vmul.f32 %v3772, %v3753
      %v3789 = vsel %vm1260, %v3773, 0.0
      %v3790 = vsel %vm1261, %v3774, 0.0
      %v3791 = vsel %vm1262, %v3775, 0.0
      %v3792 = vsel %vm1263, %v3776, 0.0
      %v3793 = vsel %vm1264, %v3777, 0.0
      %v3794 = vsel %vm1265, %v3778, 0.0
      %v3795 = vsel %vm1266, %v3779, 0.0
      %v3796 = vsel %vm1267, %v3780, 0.0
      %v3797 = vsel %vm1268, %v3781, 0.0
      %v3798 = vsel %vm1269, %v3782, 0.0
      %v3799 = vsel %vm1270, %v3783, 0.0
      %v3800 = vsel %vm1271, %v3784, 0.0
      %v3801 = vsel %vm1272, %v3785, 0.0
      %v3802 = vsel %vm1273, %v3786, 0.0
      %v3803 = vsel %vm1274, %v3787, 0.0
      %v3804 = vsel %vm1275, %v3788, 0.0
      %v3805 = vadd.f32 %v3721, %v3789
      %v3806 = vadd.f32 %v3722, %v3790
      %v3807 = vadd.f32 %v3723, %v3791
      %v3808 = vadd.f32 %v3724, %v3792
      %v3809 = vadd.f32 %v3725, %v3793
      %v3810 = vadd.f32 %v3726, %v3794
      %v3811 = vadd.f32 %v3727, %v3795
      %v3812 = vadd.f32 %v3728, %v3796
      %v3813 = vadd.f32 %v3729, %v3797
      %v3814 = vadd.f32 %v3730, %v3798
      %v3815 = vadd.f32 %v3731, %v3799
      %v3816 = vadd.f32 %v3732, %v3800
      %v3817 = vadd.f32 %v3733, %v3801
      %v3818 = vadd.f32 %v3734, %v3802
      %v3819 = vadd.f32 %v3735, %v3803
      %v3820 = vadd.f32 %v3736, %v3804
      %v3821 = vrot.slane %v3679, 7
      %v3822 = vrot.slane %v3680, 7
      %v3823 = vrot.slane %v3681, 7
      %v3824 = vrot.slane %v3682, 7
      %v3825 = vrot.slane %v3683, 7
      %v3826 = vrot.slane %v3684, 7
      %v3827 = vrot.slane %v3685, 7
      %v3828 = vrot.slane %v3686, 7
      %v3829 = vrot.slane %v3687, 7
      %v3830 = vrot.slane %v3688, 7
      %v3831 = vrot.slane %v3689, 7
      %v3832 = vrot.slane %v3690, 7
      %v3833 = vrot.slane %v3691, 7
      %v3834 = vrot.slane %v3692, 7
      %v3835 = vrot.slane %v3693, 7
      %v3836 = vrot.slane %v3694, 7
      %v3837 = vsel %vm1324, %v3835, %v3836
      %v3838 = vsel %vm1324, %v3834, %v3835
      %v3839 = vsel %vm1324, %v3833, %v3834
      %v3840 = vsel %vm1324, %v3832, %v3833
      %v3841 = vsel %vm1324, %v3831, %v3832
      %v3842 = vsel %vm1324, %v3830, %v3831
      %v3843 = vsel %vm1324, %v3829, %v3830
      %v3844 = vsel %vm1324, %v3828, %v3829
      %v3845 = vsel %vm1324, %v3827, %v3828
      %v3846 = vsel %vm1324, %v3826, %v3827
      %v3847 = vsel %vm1324, %v3825, %v3826
      %v3848 = vsel %vm1324, %v3824, %v3825
      %v3849 = vsel %vm1324, %v3823, %v3824
      %v3850 = vsel %vm1324, %v3822, %v3823
      %v3851 = vsel %vm1324, %v3821, %v3822
      %v3852 = vsel %vm1324, %v3836, %v3821
      %v3853 = vlaneseq
      %v3854 = vshrl.u32 %v3853, 7
      %v3855 = vsub.s32 1, %v3854
      %v3856 = vrot.slane %v3696, %v3855
      %v3857 = vmul.f32 %v3856, %v3852
      %v3858 = vmul.f32 %v3856, %v3851
      %v3859 = vmul.f32 %v3856, %v3850
      %v3860 = vmul.f32 %v3856, %v3849
      %v3861 = vmul.f32 %v3856, %v3848
      %v3862 = vmul.f32 %v3856, %v3847
      %v3863 = vmul.f32 %v3856, %v3846
      %v3864 = vmul.f32 %v3856, %v3845
      %v3865 = vmul.f32 %v3856, %v3844
      %v3866 = vmul.f32 %v3856, %v3843
      %v3867 = vmul.f32 %v3856, %v3842
      %v3868 = vmul.f32 %v3856, %v3841
      %v3869 = vmul.f32 %v3856, %v3840
      %v3870 = vmul.f32 %v3856, %v3839
      %v3871 = vmul.f32 %v3856, %v3838
      %v3872 = vmul.f32 %v3856, %v3837
      %v3873 = vsel %vm1377, %v3857, 0.0
      %v3874 = vsel %vm1378, %v3858, 0.0
      %v3875 = vsel %vm1379, %v3859, 0.0
      %v3876 = vsel %vm1380, %v3860, 0.0
      %v3877 = vsel %vm1381, %v3861, 0.0
      %v3878 = vsel %vm1382, %v3862, 0.0
      %v3879 = vsel %vm1383, %v3863, 0.0
      %v3880 = vsel %vm1384, %v3864, 0.0
      %v3881 = vsel %vm1385, %v3865, 0.0
      %v3882 = vsel %vm1386, %v3866, 0.0
      %v3883 = vsel %vm1387, %v3867, 0.0
      %v3884 = vsel %vm1388, %v3868, 0.0
      %v3885 = vsel %vm1389, %v3869, 0.0
      %v3886 = vsel %vm1390, %v3870, 0.0
      %v3887 = vsel %vm1391, %v3871, 0.0
      %v3888 = vsel %vm1392, %v3872, 0.0
      %v3889 = vadd.f32 %v3805, %v3873
      %v3890 = vadd.f32 %v3806, %v3874
      %v3891 = vadd.f32 %v3807, %v3875
      %v3892 = vadd.f32 %v3808, %v3876
      %v3893 = vadd.f32 %v3809, %v3877
      %v3894 = vadd.f32 %v3810, %v3878
      %v3895 = vadd.f32 %v3811, %v3879
      %v3896 = vadd.f32 %v3812, %v3880
      %v3897 = vadd.f32 %v3813, %v3881
      %v3898 = vadd.f32 %v3814, %v3882
      %v3899 = vadd.f32 %v3815, %v3883
      %v3900 = vadd.f32 %v3816, %v3884
      %v3901 = vadd.f32 %v3817, %v3885
      %v3902 = vadd.f32 %v3818, %v3886
      %v3903 = vadd.f32 %v3819, %v3887
      %v3904 = vadd.f32 %v3820, %v3888
      %v3905 = vrot.slane %v3679, 1
      %v3906 = vrot.slane %v3680, 1
      %v3907 = vrot.slane %v3681, 1
      %v3908 = vrot.slane %v3682, 1
      %v3909 = vrot.slane %v3683, 1
      %v3910 = vrot.slane %v3684, 1
      %v3911 = vrot.slane %v3685, 1
      %v3912 = vrot.slane %v3686, 1
      %v3913 = vrot.slane %v3687, 1
      %v3914 = vrot.slane %v3688, 1
      %v3915 = vrot.slane %v3689, 1
      %v3916 = vrot.slane %v3690, 1
      %v3917 = vrot.slane %v3691, 1
      %v3918 = vrot.slane %v3692, 1
      %v3919 = vrot.slane %v3693, 1
      %v3920 = vrot.slane %v3694, 1
      %v3921 = vsel %vm1441, %v3919, %v3920
      %v3922 = vsel %vm1441, %v3918, %v3919
      %v3923 = vsel %vm1441, %v3917, %v3918
      %v3924 = vsel %vm1441, %v3916, %v3917
      %v3925 = vsel %vm1441, %v3915, %v3916
      %v3926 = vsel %vm1441, %v3914, %v3915
      %v3927 = vsel %vm1441, %v3913, %v3914
      %v3928 = vsel %vm1441, %v3912, %v3913
      %v3929 = vsel %vm1441, %v3911, %v3912
      %v3930 = vsel %vm1441, %v3910, %v3911
      %v3931 = vsel %vm1441, %v3909, %v3910
      %v3932 = vsel %vm1441, %v3908, %v3909
      %v3933 = vsel %vm1441, %v3907, %v3908
      %v3934 = vsel %vm1441, %v3906, %v3907
      %v3935 = vsel %vm1441, %v3905, %v3906
      %v3936 = vsel %vm1441, %v3920, %v3905
      %v3937 = vlaneseq
      %v3938 = vshrl.u32 %v3937, 7
      %v3939 = vsub.s32 3, %v3938
      %v3940 = vrot.slane %v3696, %v3939
      %v3941 = vmul.f32 %v3940, %v3935
      %v3942 = vmul.f32 %v3940, %v3934
      %v3943 = vmul.f32 %v3940, %v3933
      %v3944 = vmul.f32 %v3940, %v3932
      %v3945 = vmul.f32 %v3940, %v3931
      %v3946 = vmul.f32 %v3940, %v3930
      %v3947 = vmul.f32 %v3940, %v3929
      %v3948 = vmul.f32 %v3940, %v3928
      %v3949 = vmul.f32 %v3940, %v3927
      %v3950 = vmul.f32 %v3940, %v3926
      %v3951 = vmul.f32 %v3940, %v3925
      %v3952 = vmul.f32 %v3940, %v3924
      %v3953 = vmul.f32 %v3940, %v3923
      %v3954 = vmul.f32 %v3940, %v3922
      %v3955 = vmul.f32 %v3940, %v3921
      %v3956 = vmul.f32 %v3940, %v3936
      %v3957 = vsel %vm1494, %v3941, 0.0
      %v3958 = vsel %vm1495, %v3942, 0.0
      %v3959 = vsel %vm1496, %v3943, 0.0
      %v3960 = vsel %vm1497, %v3944, 0.0
      %v3961 = vsel %vm1498, %v3945, 0.0
      %v3962 = vsel %vm1499, %v3946, 0.0
      %v3963 = vsel %vm1500, %v3947, 0.0
      %v3964 = vsel %vm1501, %v3948, 0.0
      %v3965 = vsel %vm1502, %v3949, 0.0
      %v3966 = vsel %vm1503, %v3950, 0.0
      %v3967 = vsel %vm1504, %v3951, 0.0
      %v3968 = vsel %vm1505, %v3952, 0.0
      %v3969 = vsel %vm1506, %v3953, 0.0
      %v3970 = vsel %vm1507, %v3954, 0.0
      %v3971 = vsel %vm1508, %v3955, 0.0
      %v3972 = vsel %vm1509, %v3956, 0.0
      %v3973 = vadd.f32 %v3889, %v3957
      %v3974 = vadd.f32 %v3890, %v3958
      %v3975 = vadd.f32 %v3891, %v3959
      %v3976 = vadd.f32 %v3892, %v3960
      %v3977 = vadd.f32 %v3893, %v3961
      %v3978 = vadd.f32 %v3894, %v3962
      %v3979 = vadd.f32 %v3895, %v3963
      %v3980 = vadd.f32 %v3896, %v3964
      %v3981 = vadd.f32 %v3897, %v3965
      %v3982 = vadd.f32 %v3898, %v3966
      %v3983 = vadd.f32 %v3899, %v3967
      %v3984 = vadd.f32 %v3900, %v3968
      %v3985 = vadd.f32 %v3901, %v3969
      %v3986 = vadd.f32 %v3902, %v3970
      %v3987 = vadd.f32 %v3903, %v3971
      %v3988 = vadd.f32 %v3904, %v3972
      %v3989 = vrot.slane %v3679, 2
      %v3990 = vrot.slane %v3680, 2
      %v3991 = vrot.slane %v3681, 2
      %v3992 = vrot.slane %v3682, 2
      %v3993 = vrot.slane %v3683, 2
      %v3994 = vrot.slane %v3684, 2
      %v3995 = vrot.slane %v3685, 2
      %v3996 = vrot.slane %v3686, 2
      %v3997 = vrot.slane %v3687, 2
      %v3998 = vrot.slane %v3688, 2
      %v3999 = vrot.slane %v3689, 2
      %v4000 = vrot.slane %v3690, 2
      %v4001 = vrot.slane %v3691, 2
      %v4002 = vrot.slane %v3692, 2
      %v4003 = vrot.slane %v3693, 2
      %v4004 = vrot.slane %v3694, 2
      %v4005 = vsel %vm1558, %v4003, %v4004
      %v4006 = vsel %vm1558, %v4002, %v4003
      %v4007 = vsel %vm1558, %v4001, %v4002
      %v4008 = vsel %vm1558, %v4000, %v4001
      %v4009 = vsel %vm1558, %v3999, %v4000
      %v4010 = vsel %vm1558, %v3998, %v3999
      %v4011 = vsel %vm1558, %v3997, %v3998
      %v4012 = vsel %vm1558, %v3996, %v3997
      %v4013 = vsel %vm1558, %v3995, %v3996
      %v4014 = vsel %vm1558, %v3994, %v3995
      %v4015 = vsel %vm1558, %v3993, %v3994
      %v4016 = vsel %vm1558, %v3992, %v3993
      %v4017 = vsel %vm1558, %v3991, %v3992
      %v4018 = vsel %vm1558, %v3990, %v3991
      %v4019 = vsel %vm1558, %v3989, %v3990
      %v4020 = vsel %vm1558, %v4004, %v3989
      %v4021 = vlaneseq
      %v4022 = vshrl.u32 %v4021, 7
      %v4023 = vsub.s32 4, %v4022
      %v4024 = vrot.slane %v3696, %v4023
      %v4025 = vmul.f32 %v4024, %v4019
      %v4026 = vmul.f32 %v4024, %v4018
      %v4027 = vmul.f32 %v4024, %v4017
      %v4028 = vmul.f32 %v4024, %v4016
      %v4029 = vmul.f32 %v4024, %v4015
      %v4030 = vmul.f32 %v4024, %v4014
      %v4031 = vmul.f32 %v4024, %v4013
      %v4032 = vmul.f32 %v4024, %v4012
      %v4033 = vmul.f32 %v4024, %v4011
      %v4034 = vmul.f32 %v4024, %v4010
      %v4035 = vmul.f32 %v4024, %v4009
      %v4036 = vmul.f32 %v4024, %v4008
      %v4037 = vmul.f32 %v4024, %v4007
      %v4038 = vmul.f32 %v4024, %v4006
      %v4039 = vmul.f32 %v4024, %v4005
      %v4040 = vmul.f32 %v4024, %v4020
      %v4041 = vsel %vm1611, %v4025, 0.0
      %v4042 = vsel %vm1612, %v4026, 0.0
      %v4043 = vsel %vm1613, %v4027, 0.0
      %v4044 = vsel %vm1614, %v4028, 0.0
      %v4045 = vsel %vm1615, %v4029, 0.0
      %v4046 = vsel %vm1616, %v4030, 0.0
      %v4047 = vsel %vm1617, %v4031, 0.0
      %v4048 = vsel %vm1618, %v4032, 0.0
      %v4049 = vsel %vm1619, %v4033, 0.0
      %v4050 = vsel %vm1620, %v4034, 0.0
      %v4051 = vsel %vm1621, %v4035, 0.0
      %v4052 = vsel %vm1622, %v4036, 0.0
      %v4053 = vsel %vm1623, %v4037, 0.0
      %v4054 = vsel %vm1624, %v4038, 0.0
      %v4055 = vsel %vm1625, %v4039, 0.0
      %v4056 = vsel %vm1626, %v4040, 0.0
      %v4057 = vadd.f32 %v3973, %v4041
      %v4058 = vadd.f32 %v3974, %v4042
      %v4059 = vadd.f32 %v3975, %v4043
      %v4060 = vadd.f32 %v3976, %v4044
      %v4061 = vadd.f32 %v3977, %v4045
      %v4062 = vadd.f32 %v3978, %v4046
      %v4063 = vadd.f32 %v3979, %v4047
      %v4064 = vadd.f32 %v3980, %v4048
      %v4065 = vadd.f32 %v3981, %v4049
      %v4066 = vadd.f32 %v3982, %v4050
      %v4067 = vadd.f32 %v3983, %v4051
      %v4068 = vadd.f32 %v3984, %v4052
      %v4069 = vadd.f32 %v3985, %v4053
      %v4070 = vadd.f32 %v3986, %v4054
      %v4071 = vadd.f32 %v3987, %v4055
      %v4072 = vadd.f32 %v3988, %v4056
      %v4073 = vmax.f32 %v4057, -8.0
      %v4074 = vmax.f32 %v4058, -8.0
      %v4075 = vmax.f32 %v4059, -8.0
      %v4076 = vmax.f32 %v4060, -8.0
      %v4077 = vmax.f32 %v4061, -8.0
      %v4078 = vmax.f32 %v4062, -8.0
      %v4079 = vmax.f32 %v4063, -8.0
      %v4080 = vmax.f32 %v4064, -8.0
      %v4081 = vmax.f32 %v4065, -8.0
      %v4082 = vmax.f32 %v4066, -8.0
      %v4083 = vmax.f32 %v4067, -8.0
      %v4084 = vmax.f32 %v4068, -8.0
      %v4085 = vmax.f32 %v4069, -8.0
      %v4086 = vmax.f32 %v4070, -8.0
      %v4087 = vmax.f32 %v4071, -8.0
      %v4088 = vmax.f32 %v4072, -8.0
      %v4089 = vmin.f32 %v4073, 8.0
      %v4090 = vmin.f32 %v4074, 8.0
      %v4091 = vmin.f32 %v4075, 8.0
      %v4092 = vmin.f32 %v4076, 8.0
      %v4093 = vmin.f32 %v4077, 8.0
      %v4094 = vmin.f32 %v4078, 8.0
      %v4095 = vmin.f32 %v4079, 8.0
      %v4096 = vmin.f32 %v4080, 8.0
      %v4097 = vmin.f32 %v4081, 8.0
      %v4098 = vmin.f32 %v4082, 8.0
      %v4099 = vmin.f32 %v4083, 8.0
      %v4100 = vmin.f32 %v4084, 8.0
      %v4101 = vmin.f32 %v4085, 8.0
      %v4102 = vmin.f32 %v4086, 8.0
      %v4103 = vmin.f32 %v4087, 8.0
      %v4104 = vmin.f32 %v4088, 8.0
      %s4105 = scalar_lea.vmem %s5, 384
      %v4106 = vld [vmem:[%s4105] sm:$0xff]
      %v4107 = vld [vmem:[%s4105 + $0x8] sm:$0xff]
      %v4108 = vld [vmem:[%s4105 + $0x10] sm:$0xff]
      %v4109 = vld [vmem:[%s4105 + $0x18] sm:$0xff]
      %v4110 = vld [vmem:[%s4105 + $0x20] sm:$0xff]
      %v4111 = vld [vmem:[%s4105 + $0x28] sm:$0xff]
      %v4112 = vld [vmem:[%s4105 + $0x30] sm:$0xff]
      %v4113 = vld [vmem:[%s4105 + $0x38] sm:$0xff]
      %v4114 = vld [vmem:[%s4105 + $0x40] sm:$0xff]
      %v4115 = vld [vmem:[%s4105 + $0x48] sm:$0xff]
      %v4116 = vld [vmem:[%s4105 + $0x50] sm:$0xff]
      %v4117 = vld [vmem:[%s4105 + $0x58] sm:$0xff]
      %v4118 = vld [vmem:[%s4105 + $0x60] sm:$0xff]
      %v4119 = vld [vmem:[%s4105 + $0x68] sm:$0xff]
      %v4120 = vld [vmem:[%s4105 + $0x70] sm:$0xff]
      %v4121 = vld [vmem:[%s4105 + $0x78] sm:$0xff]
      %s4122 = scalar_lea.vmem %s6, 3
      %v4123 = vld [vmem:[%s4122] sm:$0x1]
      %v4125 = vlaneseq
      %v4126 = vshrl.u32 %v4125, 7
      %v4127 = vsub.s32 0, %v4126
      %v4128 = vrot.slane %v4123, %v4127
      %4130 = vmatprep.subr.mxu0 0.0
      %4131 = vmatpush1.msra.mxu0 %v4121
      %4132 = vmatprep.subr.mxu0 0.0
      %4133 = vmatpush1.msra.mxu0 %v4120
      %4134 = vmatprep.subr.mxu0 0.0
      %4135 = vmatpush1.msra.mxu0 %v4119
      %4136 = vmatprep.subr.mxu0 0.0
      %4137 = vmatpush1.msra.mxu0 %v4118
      %4138 = vmatprep.subr.mxu0 0.0
      %4139 = vmatpush1.msra.mxu0 %v4117
      %4140 = vmatprep.subr.mxu0 0.0
      %4141 = vmatpush1.msra.mxu0 %v4116
      %4142 = vmatprep.subr.mxu0 0.0
      %4143 = vmatpush1.msra.mxu0 %v4115
      %4144 = vmatprep.subr.mxu0 0.0
      %4145 = vmatpush1.msra.mxu0 %v4114
      %4146 = vmatprep.subr.mxu0 0.0
      %4147 = vmatpush1.msra.mxu0 %v4113
      %4148 = vmatprep.subr.mxu0 0.0
      %4149 = vmatpush1.msra.mxu0 %v4112
      %4150 = vmatprep.subr.mxu0 0.0
      %4151 = vmatpush1.msra.mxu0 %v4111
      %4152 = vmatprep.subr.mxu0 0.0
      %4153 = vmatpush1.msra.mxu0 %v4110
      %4154 = vmatprep.subr.mxu0 0.0
      %4155 = vmatpush1.msra.mxu0 %v4109
      %4156 = vmatprep.subr.mxu0 0.0
      %4157 = vmatpush1.msra.mxu0 %v4108
      %4158 = vmatprep.subr.mxu0 0.0
      %4159 = vmatpush1.msra.mxu0 %v4107
      %4160 = vmatprep.subr.mxu0 0.0
      %4161 = vmatpush1.msra.mxu0 %v4106
      %4162 = vmatprep.subr.mxu0 0.0
      %4163 = vmatpush2.msra.mxu0 0.0
      %4164 = vmatprep.subr.mxu0 0.0
      %4165 = vmatpush2.msra.mxu0 0.0
      %4166 = vmatprep.subr.mxu0 0.0
      %4167 = vmatpush2.msra.mxu0 0.0
      %4168 = vmatprep.subr.mxu0 0.0
      %4169 = vmatpush2.msra.mxu0 0.0
      %4170 = vmatprep.subr.mxu0 0.0
      %4171 = vmatpush2.msra.mxu0 0.0
      %4172 = vmatprep.subr.mxu0 0.0
      %4173 = vmatpush2.msra.mxu0 0.0
      %4174 = vmatprep.subr.mxu0 0.0
      %4175 = vmatpush2.msra.mxu0 0.0
      %4176 = vmatprep.subr.mxu0 0.0
      %4177 = vmatpush2.msra.mxu0 0.0
      %4178 = vmatprep.subr.mxu0 0.0
      %4179 = vmatpush2.msra.mxu0 0.0
      %4180 = vmatprep.subr.mxu0 0.0
      %4181 = vmatpush2.msra.mxu0 0.0
      %4182 = vmatprep.subr.mxu0 0.0
      %4183 = vmatpush2.msra.mxu0 0.0
      %4184 = vmatprep.subr.mxu0 0.0
      %4185 = vmatpush2.msra.mxu0 0.0
      %4186 = vmatprep.subr.mxu0 0.0
      %4187 = vmatpush2.msra.mxu0 0.0
      %4188 = vmatprep.subr.mxu0 0.0
      %4189 = vmatpush2.msra.mxu0 0.0
      %4190 = vmatprep.subr.mxu0 0.0
      %4191 = vmatpush2.msra.mxu0 0.0
      %4192 = vmatprep.subr.mxu0 0.0
      %4193 = vmatpush2.msra.mxu0 0.0
      %4194 = vmatprep.mubr.f32.mxu0 0.0
      %4195 = vmatmul.mubr.f32.gmra.mxu0 %v4089
      %v4196 = vpop.f32.mrf.mxu0
      %v4197 = vadd.f32 %v4128, %v4196
      %v4198 = vpop.f32.mrf.mxu0
      %4199 = vmatprep.mubr.f32.mxu0 0.0
      %4200 = vmatmul.mubr.f32.gmra.mxu0 %v4090
      %v4201 = vpop.f32.mrf.mxu0
      %v4202 = vadd.f32 %v4128, %v4201
      %v4203 = vpop.f32.mrf.mxu0
      %4204 = vmatprep.mubr.f32.mxu0 0.0
      %4205 = vmatmul.mubr.f32.gmra.mxu0 %v4091
      %v4206 = vpop.f32.mrf.mxu0
      %v4207 = vadd.f32 %v4128, %v4206
      %v4208 = vpop.f32.mrf.mxu0
      %4209 = vmatprep.mubr.f32.mxu0 0.0
      %4210 = vmatmul.mubr.f32.gmra.mxu0 %v4092
      %v4211 = vpop.f32.mrf.mxu0
      %v4212 = vadd.f32 %v4128, %v4211
      %v4213 = vpop.f32.mrf.mxu0
      %4214 = vmatprep.mubr.f32.mxu0 0.0
      %4215 = vmatmul.mubr.f32.gmra.mxu0 %v4093
      %v4216 = vpop.f32.mrf.mxu0
      %v4217 = vadd.f32 %v4128, %v4216
      %v4218 = vpop.f32.mrf.mxu0
      %4219 = vmatprep.mubr.f32.mxu0 0.0
      %4220 = vmatmul.mubr.f32.gmra.mxu0 %v4094
      %v4221 = vpop.f32.mrf.mxu0
      %v4222 = vadd.f32 %v4128, %v4221
      %v4223 = vpop.f32.mrf.mxu0
      %4224 = vmatprep.mubr.f32.mxu0 0.0
      %4225 = vmatmul.mubr.f32.gmra.mxu0 %v4095
      %v4226 = vpop.f32.mrf.mxu0
      %v4227 = vadd.f32 %v4128, %v4226
      %v4228 = vpop.f32.mrf.mxu0
      %4229 = vmatprep.mubr.f32.mxu0 0.0
      %4230 = vmatmul.mubr.f32.gmra.mxu0 %v4096
      %v4231 = vpop.f32.mrf.mxu0
      %v4232 = vadd.f32 %v4128, %v4231
      %v4233 = vpop.f32.mrf.mxu0
      %4234 = vmatprep.mubr.f32.mxu0 0.0
      %4235 = vmatmul.mubr.f32.gmra.mxu0 %v4097
      %v4236 = vpop.f32.mrf.mxu0
      %v4237 = vadd.f32 %v4128, %v4236
      %v4238 = vpop.f32.mrf.mxu0
      %4239 = vmatprep.mubr.f32.mxu0 0.0
      %4240 = vmatmul.mubr.f32.gmra.mxu0 %v4098
      %v4241 = vpop.f32.mrf.mxu0
      %v4242 = vadd.f32 %v4128, %v4241
      %v4243 = vpop.f32.mrf.mxu0
      %4244 = vmatprep.mubr.f32.mxu0 0.0
      %4245 = vmatmul.mubr.f32.gmra.mxu0 %v4099
      %v4246 = vpop.f32.mrf.mxu0
      %v4247 = vadd.f32 %v4128, %v4246
      %v4248 = vpop.f32.mrf.mxu0
      %4249 = vmatprep.mubr.f32.mxu0 0.0
      %4250 = vmatmul.mubr.f32.gmra.mxu0 %v4100
      %v4251 = vpop.f32.mrf.mxu0
      %v4252 = vadd.f32 %v4128, %v4251
      %v4253 = vpop.f32.mrf.mxu0
      %4254 = vmatprep.mubr.f32.mxu0 0.0
      %4255 = vmatmul.mubr.f32.gmra.mxu0 %v4101
      %v4256 = vpop.f32.mrf.mxu0
      %v4257 = vadd.f32 %v4128, %v4256
      %v4258 = vpop.f32.mrf.mxu0
      %4259 = vmatprep.mubr.f32.mxu0 0.0
      %4260 = vmatmul.mubr.f32.gmra.mxu0 %v4102
      %v4261 = vpop.f32.mrf.mxu0
      %v4262 = vadd.f32 %v4128, %v4261
      %v4263 = vpop.f32.mrf.mxu0
      %4264 = vmatprep.mubr.f32.mxu0 0.0
      %4265 = vmatmul.mubr.f32.gmra.mxu0 %v4103
      %v4266 = vpop.f32.mrf.mxu0
      %v4267 = vadd.f32 %v4128, %v4266
      %v4268 = vpop.f32.mrf.mxu0
      %4269 = vmatprep.mubr.f32.mxu0 0.0
      %4270 = vmatmul.mubr.f32.gmra.mxu0 %v4104
      %v4271 = vpop.f32.mrf.mxu0
      %v4272 = vadd.f32 %v4128, %v4271
      %v4273 = vpop.f32.mrf.mxu0
      %4274 = vdwg.mxu0
      %v4275 = vmax.f32 %v4197, 0.0
      %v4276 = vmax.f32 %v4202, 0.0
      %v4277 = vmax.f32 %v4207, 0.0
      %v4278 = vmax.f32 %v4212, 0.0
      %v4279 = vmax.f32 %v4217, 0.0
      %v4280 = vmax.f32 %v4222, 0.0
      %v4281 = vmax.f32 %v4227, 0.0
      %v4282 = vmax.f32 %v4232, 0.0
      %v4283 = vmax.f32 %v4237, 0.0
      %v4284 = vmax.f32 %v4242, 0.0
      %v4285 = vmax.f32 %v4247, 0.0
      %v4286 = vmax.f32 %v4252, 0.0
      %v4287 = vmax.f32 %v4257, 0.0
      %v4288 = vmax.f32 %v4262, 0.0
      %v4289 = vmax.f32 %v4267, 0.0
      %v4290 = vmax.f32 %v4272, 0.0
      %v4291 = vadd.f32 %v2675, %v4275
      %v4292 = vadd.f32 %v2676, %v4276
      %v4293 = vadd.f32 %v2677, %v4277
      %v4294 = vadd.f32 %v2678, %v4278
      %v4295 = vadd.f32 %v2679, %v4279
      %v4296 = vadd.f32 %v2680, %v4280
      %v4297 = vadd.f32 %v2681, %v4281
      %v4298 = vadd.f32 %v2682, %v4282
      %v4299 = vadd.f32 %v2683, %v4283
      %v4300 = vadd.f32 %v2684, %v4284
      %v4301 = vadd.f32 %v2685, %v4285
      %v4302 = vadd.f32 %v2686, %v4286
      %v4303 = vadd.f32 %v2687, %v4287
      %v4304 = vadd.f32 %v2688, %v4288
      %v4305 = vadd.f32 %v2689, %v4289
      %v4306 = vadd.f32 %v2690, %v4290
      %4307 = vst [vmem:[%s280] sm:$0xff] %v4291
      %4308 = vst [vmem:[%s280 + $0x8] sm:$0xff] %v4292
      %4309 = vst [vmem:[%s280 + $0x10] sm:$0xff] %v4293
      %4310 = vst [vmem:[%s280 + $0x18] sm:$0xff] %v4294
      %4311 = vst [vmem:[%s280 + $0x20] sm:$0xff] %v4295
      %4312 = vst [vmem:[%s280 + $0x28] sm:$0xff] %v4296
      %4313 = vst [vmem:[%s280 + $0x30] sm:$0xff] %v4297
      %4314 = vst [vmem:[%s280 + $0x38] sm:$0xff] %v4298
      %4315 = vst [vmem:[%s280 + $0x40] sm:$0xff] %v4299
      %4316 = vst [vmem:[%s280 + $0x48] sm:$0xff] %v4300
      %4317 = vst [vmem:[%s280 + $0x50] sm:$0xff] %v4301
      %4318 = vst [vmem:[%s280 + $0x58] sm:$0xff] %v4302
      %4319 = vst [vmem:[%s280 + $0x60] sm:$0xff] %v4303
      %4320 = vst [vmem:[%s280 + $0x68] sm:$0xff] %v4304
      %4321 = vst [vmem:[%s280 + $0x70] sm:$0xff] %v4305
      %4322 = vst [vmem:[%s280 + $0x78] sm:$0xff] %v4306
      %s4323 = smul.u32 16, %s18
      %p4324 = scmp.lt.s32.totalorder %s4323, 31
      %s4325 = scalar_select %p4324, %s4323, 31
      %s4326 = smul.addr %s4325, 8
      %s4327 = scalar_lea.vmem %s7, %s4326
      // Predicated region
      $region49: #{bb_forward.1} parent=47 // pred_check
        %p4328 = pneg %p188
      $region50: #{bb_forward.1} parent=47 // pred_check_branch
        %4330 = sbr.rel (%p4328) target = $region52
      $region51: #{bb_forward.1} parent=47 // pred_region
        %s4331 = smul.u32 16, %s18
      $region52: #{bb_forward.1} parent=47 // pred_fallthru
        _
    $region48: #{bb_forward.1} parent=5 // pred_fallthru
      _
    %p4332 = scmp.le.s32.totalorder 2, %s13
    // Predicated region
    $region53: #{bb_forward.1} parent=5 // pred_check
      %p4333 = pneg %p4332
    $region54: #{bb_forward.1} parent=5 // pred_check_branch
      %4335 = sbr.rel (%p4333) target = $region56
    $region55: #{bb_forward.1} parent=5 // pred_region
      %s4336 = ssub.s32 %s13, 2
      // Predicated region
      $region57: #{bb_forward.1} parent=55 // pred_check
        %p4337 = pneg %p194
      $region58: #{bb_forward.1} parent=55 // pred_check_branch
        %4339 = sbr.rel (%p4337) target = $region60
      $region59: #{bb_forward.1} parent=55 // pred_region
        %s4340 = smul.u32 16, %s19
        %p4341 = scmp.lt.s32.totalorder %s4340, 31
        %s4342 = scalar_select %p4341, %s4340, 31
        %s4343 = smul.addr %s4342, 8
        %s4344 = scalar_lea.vmem %s7, %s4343
      $region60: #{bb_forward.1} parent=55 // pred_fallthru
        _
    $region56: #{bb_forward.1} parent=5 // pred_fallthru
      _
  $region6: #{bb_forward.1} parent=0 // loop_footer
    %s17 = sadd.s32 1, %s13
  $region7: #{bb_forward.1} parent=0 // loop_footer_branch
    %12 = sbr.rel target = $region3
  $region8: #{bb_forward.1} parent=0 // loop_exit
    _

</llo_original>
